<compile_context>
chip_gen: v6e
topology: v6e:2x2x1
jax: 0.10.0
libtpu: 0.0.40
codegen_flags: <defaults>
</compile_context>

<pallas_src>
import functools
import math

import jax
import jax.numpy as jnp
from jax import lax
from jax.experimental import pallas as pl
from jax.experimental.pallas import tpu as pltpu

EPS = 1e-5  # nn.LayerNorm default

# Row indices into the packed f32 bias / LayerNorm slab (one (1, D) vector per row).
(SELF_BQ, SELF_BK, SELF_BV, SELF_BO,
 T2I_BQ, T2I_BK, T2I_BV, T2I_BO,
 I2T_BQ, I2T_BK, I2T_BV, I2T_BO,
 MLP_B1, MLP_B2,
 LN1_G, LN1_B, LN2_G, LN2_B, LN3_G, LN3_B, LN4_G, LN4_B) = range(22)
NUM_BIAS_ROWS = 22


# ---------------------------------------------------------------------------
# Fused TwoWayAttentionBlock kernel
# ---------------------------------------------------------------------------
def _make_block_kernel(C, Ci, Dm, num_heads, skip_first_layer_pe, compute_dtype):
    cdt = compute_dtype
    H = num_heads
    hd_self = C // H
    hd_cross = Ci // H
    scale_self = 1.0 / math.sqrt(hd_self)
    scale_cross = 1.0 / math.sqrt(hd_cross)

    def kernel(q_ref, k_ref, qpe_ref, kpe_ref,
               w_self_qkv_ref, w_cross_in_ref, w_outc_ref, w_mlp1_ref, bias_ref,
               q_out_ref, k_out_ref):
        # Load the tiny bias/LN slab once (a handful of vregs) and slice it per use.
        bias = bias_ref[...]                      # (NUM_BIAS_ROWS, Dmax) f32

        def brow(idx, width):
            return bias[idx:idx + 1, :width]      # (1, width) f32

        def proj(x_bf, w_bf, b_idx, width, scale=None):
            """bf16 x @ bf16 w, f32 accumulate, +bias (and optional scale) -> bf16."""
            y = jnp.dot(x_bf, w_bf, preferred_element_type=jnp.float32) + brow(b_idx, width)
            if scale is not None:
                y = y * scale
            return y.astype(cdt)

        def mha(q_bf, k_bf, v_bf, hd, wo_bf, bo, transposed):
            """Multi-head attention.  q_bf (M, D), k_bf/v_bf (N, D) bf16; the
            1/sqrt(hd) scale is already folded into q_bf.  Returns (M, C) f32.

            transposed=True computes the score matrix as (N, M) so softmax
            elementwise/EUP work is lane-dense when M >> N (the image->token path,
            where M is the image-token count and N the handful of sparse tokens).
            """
            # TODO(synk): replace the per-head lane slices + concat with one
            # head-batched dot_general over an (H, M, hd) layout once the 3-D head
            # transpose is confirmed to lower cleanly on all targets; kept 2-D here
            # for lowering robustness.
            ohs = []
            for h in range(H):                       # static unroll; H is small
                lo = h * hd
                qh = q_bf[:, lo:lo + hd]
                kh = k_bf[:, lo:lo + hd]
                vh = v_bf[:, lo:lo + hd]
                if not transposed:
                    # scores (M, N): contract last axis of both (no explicit k^T).
                    s = lax.dot_general(qh, kh, (((1,), (1,)), ((), ())),
                                        preferred_element_type=jnp.float32)
                    s = s - jnp.max(s, axis=-1, keepdims=True)
                    e = jnp.exp(s)
                    p = e / jnp.sum(e, axis=-1, keepdims=True)   # exact division
                    oh = jnp.dot(p.astype(cdt), vh,
                                 preferred_element_type=jnp.float32)       # (M, hd)
                else:
                    # lane-dense transposed scores (N, M); softmax over axis 0.
                    st = lax.dot_general(kh, qh, (((1,), (1,)), ((), ())),
                                         preferred_element_type=jnp.float32)
                    st = st - jnp.max(st, axis=0, keepdims=True)
                    e = jnp.exp(st)
                    p = e / jnp.sum(e, axis=0, keepdims=True)               # (N, M)
                    pt = jnp.transpose(p).astype(cdt)                       # (M, N)
                    oh = jnp.dot(pt, vh, preferred_element_type=jnp.float32)  # (M, hd)
                ohs.append(oh)
            # Recombine heads with a lane concat (XLU, hides under MXU) and run ONE
            # full-depth (M, D) @ (D, C) output projection instead of H tiny-K folds.
            o_cat = jnp.concatenate(ohs, axis=-1).astype(cdt)               # (M, D)
            return jnp.dot(o_cat, wo_bf, preferred_element_type=jnp.float32) + bo

        def layer_norm(x, g_idx, b_idx):
            mu = jnp.mean(x, axis=-1, keepdims=True)
            xc = x - mu
            var = jnp.mean(xc * xc, axis=-1, keepdims=True)
            return xc * lax.rsqrt(var + EPS) * brow(g_idx, C) + brow(b_idx, C)

        def mlp(x_f32):
            h = jnp.dot(x_f32.astype(cdt), w_mlp1_ref[...],
                        preferred_element_type=jnp.float32) + brow(MLP_B1, Dm)
            h = jnp.maximum(h, 0.0)
            return jnp.dot(h.astype(cdt), w_outc_ref[C + 2 * Ci:C + 2 * Ci + Dm, :],
                           preferred_element_type=jnp.float32) + brow(MLP_B2, C)

        # All residual adds, LayerNorms, softmax and PE adds stay in f32 (v5e's
        # VPU/EUP have no bf16 path); only matmul operands are cast to bf16.
        queries = q_ref[0].astype(jnp.float32)    # (Nq, C)
        keys = k_ref[0].astype(jnp.float32)       # (Nk, C)
        qpe = qpe_ref[0].astype(jnp.float32)
        kpe = kpe_ref[0].astype(jnp.float32)

        # ---- (1) self-attention of sparse inputs ------------------------------
        wo_self = w_outc_ref[0:C, :]
        if skip_first_layer_pe:
            # q == k == v == queries: one fused (Nq, C) @ (C, 3C) QKV projection.
            qkv = jnp.dot(queries.astype(cdt), w_self_qkv_ref[...],
                          preferred_element_type=jnp.float32)
            q_sa = ((qkv[:, 0:C] + brow(SELF_BQ, C)) * scale_self).astype(cdt)
            k_sa = (qkv[:, C:2 * C] + brow(SELF_BK, C)).astype(cdt)
            v_sa = (qkv[:, 2 * C:3 * C] + brow(SELF_BV, C)).astype(cdt)
            queries = mha(q_sa, k_sa, v_sa, hd_self, wo_self, brow(SELF_BO, C), False)
        else:
            # q == k == queries + qpe: one fused (Nq, C) @ (C, 2C) QK projection.
            qp_bf = (queries + qpe).astype(cdt)
            qk = jnp.dot(qp_bf, w_self_qkv_ref[:, 0:2 * C],
                         preferred_element_type=jnp.float32)
            q_sa = ((qk[:, 0:C] + brow(SELF_BQ, C)) * scale_self).astype(cdt)
            k_sa = (qk[:, C:2 * C] + brow(SELF_BK, C)).astype(cdt)
            v_sa = proj(queries.astype(cdt), w_self_qkv_ref[:, 2 * C:3 * C], SELF_BV, C)
            queries = queries + mha(q_sa, k_sa, v_sa, hd_self, wo_self,
                                    brow(SELF_BO, C), False)
        queries = layer_norm(queries, LN1_G, LN1_B)

        # keys + key_pe is identical in steps (2) and (4) (keys only changes at the
        # very end) -> compute and cast once, reuse the bf16 copies.
        kp_bf = (keys + kpe).astype(cdt)          # (Nk, C) bf16
        keys_bf = keys.astype(cdt)                # (Nk, C) bf16

        # ---- (2) cross attention: tokens -> image ------------------------------
        qp_bf = (queries + qpe).astype(cdt)
        q_t2i = proj(qp_bf, w_cross_in_ref[0:C, :], T2I_BQ, Ci, scale_cross)
        k_t2i = proj(kp_bf, w_cross_in_ref[C:2 * C, :], T2I_BK, Ci)
        v_t2i = proj(keys_bf, w_cross_in_ref[2 * C:3 * C, :], T2I_BV, Ci)
        attn_out = mha(q_t2i, k_t2i, v_t2i, hd_cross,
                       w_outc_ref[C:C + Ci, :], brow(T2I_BO, C), False)
        queries = layer_norm(queries + attn_out, LN2_G, LN2_B)

        # ---- (3) MLP on sparse inputs -------------------------------------------
        queries = layer_norm(queries + mlp(queries), LN3_G, LN3_B)

        # ---- (4) cross attention: image -> tokens -------------------------------
        qp_bf = (queries + qpe).astype(cdt)
        q_i2t = proj(kp_bf, w_cross_in_ref[3 * C:4 * C, :], I2T_BQ, Ci, scale_cross)
        k_i2t = proj(qp_bf, w_cross_in_ref[4 * C:5 * C, :], I2T_BK, Ci)
        v_i2t = proj(queries.astype(cdt), w_cross_in_ref[5 * C:6 * C, :], I2T_BV, Ci)
        attn_out = mha(q_i2t, k_i2t, v_i2t, hd_cross,
                       w_outc_ref[C + Ci:C + 2 * Ci, :], brow(I2T_BO, C),
                       True)   # lane-dense transposed softmax (scores are (Nq, Nk))
        keys = layer_norm(keys + attn_out, LN4_G, LN4_B)

        q_out_ref[0] = queries.astype(q_out_ref.dtype)
        k_out_ref[0] = keys.astype(k_out_ref.dtype)

    return kernel


# ---------------------------------------------------------------------------
# Parameter packing (run ONCE, outside the jitted forward)
# ---------------------------------------------------------------------------
def pack_params(params, *, embed_dim, mlp_dim, attention_downsample_rate,
                compute_dtype=jnp.bfloat16):
    """Pack the f32 parameter pytree into the slabs the fused kernel consumes.

    Doing this once outside the jitted forward means the bf16 casts / concats are
    not re-executed every call, and the kernel sees 5 pipelined inputs instead of
    36 individually DMA'd tensors.
    """
    C = embed_dim
    Ci = C // attention_downsample_rate
    Dm = mlp_dim
    assert C % 8 == 0 and Ci % 8 == 0 and Dm % 8 == 0
    cdt = compute_dtype
    sa, t2i, i2t, mlp = (params["self_attn"], params["cross_t2i"],
                         params["cross_i2t"], params["mlp"])

    # bf16 weight slabs (half the DMA traffic; native MXU operand dtype).
    w_self_qkv = jnp.concatenate([sa["wq"], sa["wk"], sa["wv"]], axis=1).astype(cdt)   # (C, 3C)
    w_cross_in = jnp.concatenate([t2i["wq"], t2i["wk"], t2i["wv"],
                                  i2t["wq"], i2t["wk"], i2t["wv"]], axis=0).astype(cdt)  # (6C, Ci)
    w_outc = jnp.concatenate([sa["wo"], t2i["wo"], i2t["wo"], mlp["w2"]],
                             axis=0).astype(cdt)                                       # (C+2Ci+Dm, C)
    w_mlp1 = mlp["w1"].astype(cdt)                                                     # (C, Dm)

    # f32 bias + LayerNorm slab: one row per vector, padded to a common width.
    dmax = max(C, Ci, Dm)

    def row(v):
        v = jnp.reshape(v, (1, -1)).astype(jnp.float32)
        return jnp.pad(v, ((0, 0), (0, dmax - v.shape[1])))

    rows = [sa["bq"], sa["bk"], sa["bv"], sa["bo"],
            t2i["bq"], t2i["bk"], t2i["bv"], t2i["bo"],
            i2t["bq"], i2t["bk"], i2t["bv"], i2t["bo"],
            mlp["b1"], mlp["b2"],
            params["ln1_g"], params["ln1_b"], params["ln2_g"], params["ln2_b"],
            params["ln3_g"], params["ln3_b"], params["ln4_g"], params["ln4_b"]]
    assert len(rows) == NUM_BIAS_ROWS
    bias_slab = jnp.concatenate([row(r) for r in rows], axis=0)                        # (22, dmax)

    return dict(w_self_qkv=w_self_qkv, w_cross_in=w_cross_in, w_outc=w_outc,
                w_mlp1=w_mlp1, bias_slab=bias_slab)


# ---------------------------------------------------------------------------
# Forward wrapper
# ---------------------------------------------------------------------------
def two_way_attention_block(packed, queries, keys, query_pe, key_pe, *,
                            embed_dim, num_heads, mlp_dim, attention_downsample_rate,
                            skip_first_layer_pe=False, compute_dtype=jnp.bfloat16):
    B, Nq, C = queries.shape
    _, Nk, _ = keys.shape
    assert C == embed_dim
    Ci = C // attention_downsample_rate
    assert C % num_heads == 0 and Ci % num_heads == 0

    def batch_spec(n):
        return pl.BlockSpec((1, n, C), lambda b: (b, 0, 0))

    def const_spec(arr):
        # Grid-invariant parameter slab: constant index_map, so its DMA is issued
        # once and skipped on later batch steps.
        # TODO(synk): mark these pipeline_mode=pl.Buffered(1) (single-buffered) to
        # halve their VMEM footprint at real SAM sizes.
        return pl.BlockSpec(arr.shape, lambda b: (0, 0))

    kernel = _make_block_kernel(C, Ci, mlp_dim, num_heads, skip_first_layer_pe,
                                compute_dtype)
    slabs = (packed["w_self_qkv"], packed["w_cross_in"], packed["w_outc"],
             packed["w_mlp1"], packed["bias_slab"])

    q_out, k_out = pl.pallas_call(
        kernel,
        out_shape=(jax.ShapeDtypeStruct((B, Nq, C), queries.dtype),
                   jax.ShapeDtypeStruct((B, Nk, C), keys.dtype)),
        grid=(B,),
        in_specs=[batch_spec(Nq), batch_spec(Nk), batch_spec(Nq), batch_spec(Nk)]
                 + [const_spec(s) for s in slabs],
        out_specs=(batch_spec(Nq), batch_spec(Nk)),
        compiler_params=pltpu.CompilerParams(
            dimension_semantics=("parallel",),        # v7x: batch sharded across TCs
            vmem_limit_bytes=48 * 1024 * 1024,        # above the 16/32 MiB scoped default
        ),
    )(queries, keys, query_pe, key_pe, *slabs)
    return q_out, k_out


# ---------------------------------------------------------------------------
# Parameter construction (deterministic, synthetic)
# ---------------------------------------------------------------------------
def _linear_params(key, din, dout):
    kw, kb = jax.random.split(key)
    w = jax.random.normal(kw, (din, dout), jnp.float32) * (1.0 / math.sqrt(din))
    b = jax.random.normal(kb, (1, dout), jnp.float32) * 0.02
    return w, b


def _attention_params(key, embed_dim, internal_dim, kv_in_dim):
    ks = jax.random.split(key, 4)
    wq, bq = _linear_params(ks[0], embed_dim, internal_dim)
    wk, bk = _linear_params(ks[1], kv_in_dim, internal_dim)
    wv, bv = _linear_params(ks[2], kv_in_dim, internal_dim)
    wo, bo = _linear_params(ks[3], internal_dim, embed_dim)
    return dict(wq=wq, bq=bq, wk=wk, bk=bk, wv=wv, bv=bv, wo=wo, bo=bo)


def make_block_params(key, embed_dim, mlp_dim, attention_downsample_rate):
    ks = jax.random.split(key, 4)
    internal_cross = embed_dim // attention_downsample_rate
    params = {
        "self_attn": _attention_params(ks[0], embed_dim, embed_dim, embed_dim),
        "cross_t2i": _attention_params(ks[1], embed_dim, internal_cross, embed_dim),
        "cross_i2t": _attention_params(ks[2], embed_dim, internal_cross, embed_dim),
    }
    km1, km2 = jax.random.split(ks[3])
    w1, b1 = _linear_params(km1, embed_dim, mlp_dim)
    w2, b2 = _linear_params(km2, mlp_dim, embed_dim)
    params["mlp"] = dict(w1=w1, b1=b1, w2=w2, b2=b2)
    for i in (1, 2, 3, 4):
        params[f"ln{i}_g"] = jnp.ones((1, embed_dim), jnp.float32)
        params[f"ln{i}_b"] = jnp.zeros((1, embed_dim), jnp.float32)
    return params


# ---------------------------------------------------------------------------
# Pure-JAX f32 reference (mirrors the PyTorch semantics) for verification
# ---------------------------------------------------------------------------
def _ref_attention(q, k, v, p, num_heads):
    Q = q @ p["wq"] + p["bq"]
    K = k @ p["wk"] + p["bk"]
    V = v @ p["wv"] + p["bv"]
    B, Nq, D = Q.shape
    Nk = K.shape[1]
    dh = D // num_heads
    Qh = Q.reshape(B, Nq, num_heads, dh).transpose(0, 2, 1, 3)
    Kh = K.reshape(B, Nk, num_heads, dh).transpose(0, 2, 1, 3)
    Vh = V.reshape(B, Nk, num_heads, dh).transpose(0, 2, 1, 3)
    s = jnp.einsum("bhqd,bhkd->bhqk", Qh, Kh) / math.sqrt(dh)
    a = jax.nn.softmax(s, axis=-1)
    o = jnp.einsum("bhqk,bhkd->bhqd", a, Vh)
    o = o.transpose(0, 2, 1, 3).reshape(B, Nq, D)
    return o @ p["wo"] + p["bo"]


def _ref_ln(x, g, b):
    mean = jnp.mean(x, axis=-1, keepdims=True)
    var = jnp.mean((x - mean) ** 2, axis=-1, keepdims=True)
    return (x - mean) * lax.rsqrt(var + EPS) * g + b


def _ref_block(params, queries, keys, query_pe, key_pe, num_heads, skip_first_layer_pe):
    if skip_first_layer_pe:
        queries = _ref_attention(queries, queries, queries, params["self_attn"], num_heads)
    else:
        q = queries + query_pe
        queries = queries + _ref_attention(q, q, queries, params["self_attn"], num_heads)
    queries = _ref_ln(queries, params["ln1_g"], params["ln1_b"])

    q = queries + query_pe
    k = keys + key_pe
    queries = queries + _ref_attention(q, k, keys, params["cross_t2i"], num_heads)
    queries = _ref_ln(queries, params["ln2_g"], params["ln2_b"])

    h = jnp.maximum(queries @ params["mlp"]["w1"] + params["mlp"]["b1"], 0.0)
    mlp_out = h @ params["mlp"]["w2"] + params["mlp"]["b2"]
    queries = _ref_ln(queries + mlp_out, params["ln3_g"], params["ln3_b"])

    q = queries + query_pe
    k = keys + key_pe
    keys = keys + _ref_attention(k, q, queries, params["cross_i2t"], num_heads)
    keys = _ref_ln(keys, params["ln4_g"], params["ln4_b"])
    return queries, keys


# ---------------------------------------------------------------------------
if __name__ == "__main__":
    EMBED_DIM = 128       # multiple of 128 -> lane-dense activations, aligned QKV splits
    NUM_HEADS = 4
    MLP_DIM = 256
    DOWNSAMPLE = 2
    B, NQ, NK = 2, 8, 32  # token counts are multiples of 8 (sublane)

    key = jax.random.PRNGKey(0)
    kpar, kq, kk, kqp, kkp = jax.random.split(key, 5)

    params = make_block_params(kpar, EMBED_DIM, MLP_DIM, DOWNSAMPLE)
    queries = jax.random.normal(kq, (B, NQ, EMBED_DIM), jnp.float32)
    keys = jax.random.normal(kk, (B, NK, EMBED_DIM), jnp.float32)
    query_pe = jax.random.normal(kqp, (B, NQ, EMBED_DIM), jnp.float32)
    key_pe = jax.random.normal(kkp, (B, NK, EMBED_DIM), jnp.float32)

    # Pack / cast the parameters ONCE, outside the jitted forward.
    packed = pack_params(params, embed_dim=EMBED_DIM, mlp_dim=MLP_DIM,
                         attention_downsample_rate=DOWNSAMPLE)

    for skip_pe in (False, True):   # exercise both static branches of the block
        fwd = jax.jit(functools.partial(
            two_way_attention_block,
            embed_dim=EMBED_DIM, num_heads=NUM_HEADS, mlp_dim=MLP_DIM,
            attention_downsample_rate=DOWNSAMPLE, skip_first_layer_pe=skip_pe))
        out_q, out_k = fwd(packed, queries, keys, query_pe, key_pe)
        out_q = jax.block_until_ready(out_q)
        out_k = jax.block_until_ready(out_k)

        ref_q, ref_k = _ref_block(params, queries, keys, query_pe, key_pe,
                                  NUM_HEADS, skip_pe)
        assert out_q.shape == (B, NQ, EMBED_DIM) and out_k.shape == (B, NK, EMBED_DIM)
        # Kernel matmuls are bf16-in / f32-accumulate (native MXU path); the reference
        # is full f32.  Softmax uses exact division (no approx reciprocal), so the
        # deviation below is purely bf16 matmul-operand rounding.
        for name, got, ref in (("queries", out_q, ref_q), ("keys", out_k, ref_k)):
            max_err = float(jnp.max(jnp.abs(got - ref)))
            mean_err = float(jnp.mean(jnp.abs(got - ref)))
            assert max_err < 1e-1, f"{name} mismatch (skip_pe={skip_pe}): max {max_err}"
            assert mean_err < 2e-2, f"{name} mean err too large (skip_pe={skip_pe}): {mean_err}"

    print("KERNEL_OK")
</pallas_src>

<mosaic_0001>
module attributes {stable_mosaic.version = 11 : i64} {
  func.func @kernel(%arg0: i32, %arg1: memref<1x8x128xf32, #tpu.memory_space<vmem>>, %arg2: memref<1x32x128xf32, #tpu.memory_space<vmem>>, %arg3: memref<1x8x128xf32, #tpu.memory_space<vmem>>, %arg4: memref<1x32x128xf32, #tpu.memory_space<vmem>>, %arg5: memref<128x384xbf16, #tpu.memory_space<vmem>>, %arg6: memref<768x64xbf16, #tpu.memory_space<vmem>>, %arg7: memref<512x128xbf16, #tpu.memory_space<vmem>>, %arg8: memref<128x256xbf16, #tpu.memory_space<vmem>>, %arg9: memref<22x256xf32, #tpu.memory_space<vmem>>, %arg10: memref<1x8x128xf32, #tpu.memory_space<vmem>>, %arg11: memref<1x32x128xf32, #tpu.memory_space<vmem>>) attributes {dimension_semantics = [#tpu.dimension_semantics<parallel>], iteration_bounds = array<i64: 2>, scalar_prefetch = 0 : i64, scratch_operands = 0 : i64, tpu.core_type = #tpu.core_type<tc>, window_params = [{transform_indices = @transform_0, window_bounds = array<i64: 1, 8, 128>}, {transform_indices = @transform_1, window_bounds = array<i64: 1, 32, 128>}, {transform_indices = @transform_2, window_bounds = array<i64: 1, 8, 128>}, {transform_indices = @transform_3, window_bounds = array<i64: 1, 32, 128>}, {pipeline_mode = #tpu.pipeline_mode<synchronous>, transform_indices = @transform_4, window_bounds = array<i64: 128, 384>}, {pipeline_mode = #tpu.pipeline_mode<synchronous>, transform_indices = @transform_5, window_bounds = array<i64: 768, 64>}, {pipeline_mode = #tpu.pipeline_mode<synchronous>, transform_indices = @transform_6, window_bounds = array<i64: 512, 128>}, {pipeline_mode = #tpu.pipeline_mode<synchronous>, transform_indices = @transform_7, window_bounds = array<i64: 128, 256>}, {pipeline_mode = #tpu.pipeline_mode<synchronous>, transform_indices = @transform_8, window_bounds = array<i64: 22, 256>}, {transform_indices = @transform_9, window_bounds = array<i64: 1, 8, 128>}, {transform_indices = @transform_10, window_bounds = array<i64: 1, 32, 128>}]} {
    %c0 = arith.constant 0 : index
    %c0_0 = arith.constant 0 : index
    %0 = vector.load %arg9[%c0, %c0_0] : memref<22x256xf32, #tpu.memory_space<vmem>>, vector<22x256xf32>
    %c0_1 = arith.constant 0 : index
    %c0_2 = arith.constant 0 : index
    %c0_3 = arith.constant 0 : index
    %1 = vector.load %arg1[%c0_1, %c0_2, %c0_3] : memref<1x8x128xf32, #tpu.memory_space<vmem>>, vector<1x8x128xf32>
    %2 = vector.shape_cast %1 : vector<1x8x128xf32> to vector<8x128xf32>
    %c0_4 = arith.constant 0 : index
    %c0_5 = arith.constant 0 : index
    %c0_6 = arith.constant 0 : index
    %3 = vector.load %arg2[%c0_4, %c0_5, %c0_6] : memref<1x32x128xf32, #tpu.memory_space<vmem>>, vector<1x32x128xf32>
    %4 = vector.shape_cast %3 : vector<1x32x128xf32> to vector<32x128xf32>
    %c0_7 = arith.constant 0 : index
    %c0_8 = arith.constant 0 : index
    %c0_9 = arith.constant 0 : index
    %5 = vector.load %arg3[%c0_7, %c0_8, %c0_9] : memref<1x8x128xf32, #tpu.memory_space<vmem>>, vector<1x8x128xf32>
    %6 = vector.shape_cast %5 : vector<1x8x128xf32> to vector<8x128xf32>
    %c0_10 = arith.constant 0 : index
    %c0_11 = arith.constant 0 : index
    %c0_12 = arith.constant 0 : index
    %7 = vector.load %arg4[%c0_10, %c0_11, %c0_12] : memref<1x32x128xf32, #tpu.memory_space<vmem>>, vector<1x32x128xf32>
    %8 = vector.shape_cast %7 : vector<1x32x128xf32> to vector<32x128xf32>
    %c0_13 = arith.constant 0 : index
    %c0_14 = arith.constant 0 : index
    %9 = vector.load %arg7[%c0_13, %c0_14] : memref<512x128xbf16, #tpu.memory_space<vmem>>, vector<128x128xbf16>
    %10 = arith.addf %2, %6 : vector<8x128xf32>
    %11 = arith.truncf %10 : vector<8x128xf32> to vector<8x128xbf16>
    %c0_15 = arith.constant 0 : index
    %c0_16 = arith.constant 0 : index
    %12 = vector.load %arg5[%c0_15, %c0_16] : memref<128x384xbf16, #tpu.memory_space<vmem>>, vector<128x256xbf16>
    %cst = arith.constant dense<0.000000e+00> : vector<8x256xf32>
    %13 = tpu.matmul %11, %12, %cst {dimension_numbers = #tpu.dot_dimension_numbers<[1], [0], [0], [1], [0, 0, 1, 1], [], []>} : vector<8x128xbf16>, vector<128x256xbf16>, vector<8x256xf32> -> vector<8x256xf32>
    %14 = vector.extract_strided_slice %13 {offsets = [0, 0], sizes = [8, 128], strides = [1, 1]} : vector<8x256xf32> to vector<8x128xf32>
    %15 = vector.extract_strided_slice %0 {offsets = [0, 0], sizes = [1, 128], strides = [1, 1]} : vector<22x256xf32> to vector<1x128xf32>
    %16 = vector.broadcast %15 : vector<1x128xf32> to vector<8x128xf32>
    %17 = arith.addf %14, %16 : vector<8x128xf32>
    %cst_17 = arith.constant 0.176776692 : f32
    %18 = vector.broadcast %cst_17 : f32 to vector<8x128xf32>
    %19 = arith.mulf %17, %18 : vector<8x128xf32>
    %20 = arith.truncf %19 : vector<8x128xf32> to vector<8x128xbf16>
    %21 = vector.extract_strided_slice %13 {offsets = [0, 128], sizes = [8, 128], strides = [1, 1]} : vector<8x256xf32> to vector<8x128xf32>
    %22 = vector.extract_strided_slice %0 {offsets = [1, 0], sizes = [1, 128], strides = [1, 1]} : vector<22x256xf32> to vector<1x128xf32>
    %23 = vector.broadcast %22 : vector<1x128xf32> to vector<8x128xf32>
    %24 = arith.addf %21, %23 : vector<8x128xf32>
    %25 = arith.truncf %24 : vector<8x128xf32> to vector<8x128xbf16>
    %26 = arith.truncf %2 : vector<8x128xf32> to vector<8x128xbf16>
    %c0_18 = arith.constant 0 : index
    %c256 = arith.constant 256 : index
    %27 = vector.load %arg5[%c0_18, %c256] : memref<128x384xbf16, #tpu.memory_space<vmem>>, vector<128x128xbf16>
    %cst_19 = arith.constant dense<0.000000e+00> : vector<8x128xf32>
    %28 = tpu.matmul %26, %27, %cst_19 {dimension_numbers = #tpu.dot_dimension_numbers<[1], [0], [0], [1], [0, 0, 1, 1], [], []>} : vector<8x128xbf16>, vector<128x128xbf16>, vector<8x128xf32> -> vector<8x128xf32>
    %29 = vector.extract_strided_slice %0 {offsets = [2, 0], sizes = [1, 128], strides = [1, 1]} : vector<22x256xf32> to vector<1x128xf32>
    %30 = vector.broadcast %29 : vector<1x128xf32> to vector<8x128xf32>
    %31 = arith.addf %28, %30 : vector<8x128xf32>
    %32 = arith.truncf %31 : vector<8x128xf32> to vector<8x128xbf16>
    %33 = vector.extract_strided_slice %0 {offsets = [3, 0], sizes = [1, 128], strides = [1, 1]} : vector<22x256xf32> to vector<1x128xf32>
    %34 = vector.extract_strided_slice %20 {offsets = [0, 0], sizes = [8, 32], strides = [1, 1]} : vector<8x128xbf16> to vector<8x32xbf16>
    %35 = vector.extract_strided_slice %25 {offsets = [0, 0], sizes = [8, 32], strides = [1, 1]} : vector<8x128xbf16> to vector<8x32xbf16>
    %36 = vector.extract_strided_slice %32 {offsets = [0, 0], sizes = [8, 32], strides = [1, 1]} : vector<8x128xbf16> to vector<8x32xbf16>
    %cst_20 = arith.constant dense<0.000000e+00> : vector<8x8xf32>
    %37 = tpu.matmul %34, %35, %cst_20 {dimension_numbers = #tpu.dot_dimension_numbers<[1], [1], [0], [0], [0, 0, 1, 0], [], []>} : vector<8x32xbf16>, vector<8x32xbf16>, vector<8x8xf32> -> vector<8x8xf32>
    %cst_21 = arith.constant dense<0xFF800000> : vector<8xf32>
    %38 = vector.multi_reduction <maximumf>, %37, %cst_21 [1] : vector<8x8xf32> to vector<8xf32>
    %39 = vector.shape_cast %38 : vector<8xf32> to vector<8x1xf32>
    %40 = vector.broadcast %39 : vector<8x1xf32> to vector<8x8xf32>
    %41 = arith.subf %37, %40 : vector<8x8xf32>
    %42 = math.exp %41 : vector<8x8xf32>
    %cst_22 = arith.constant dense<0.000000e+00> : vector<8xf32>
    %43 = vector.multi_reduction <add>, %42, %cst_22 [1] : vector<8x8xf32> to vector<8xf32>
    %44 = vector.shape_cast %43 : vector<8xf32> to vector<8x1xf32>
    %45 = vector.broadcast %44 : vector<8x1xf32> to vector<8x8xf32>
    %46 = arith.divf %42, %45 : vector<8x8xf32>
    %47 = arith.truncf %46 : vector<8x8xf32> to vector<8x8xbf16>
    %cst_23 = arith.constant dense<0.000000e+00> : vector<8x32xf32>
    %48 = tpu.matmul %47, %36, %cst_23 {dimension_numbers = #tpu.dot_dimension_numbers<[1], [0], [0], [1], [0, 0, 1, 1], [], []>} : vector<8x8xbf16>, vector<8x32xbf16>, vector<8x32xf32> -> vector<8x32xf32>
    %49 = vector.extract_strided_slice %20 {offsets = [0, 32], sizes = [8, 32], strides = [1, 1]} : vector<8x128xbf16> to vector<8x32xbf16>
    %50 = vector.extract_strided_slice %25 {offsets = [0, 32], sizes = [8, 32], strides = [1, 1]} : vector<8x128xbf16> to vector<8x32xbf16>
    %51 = vector.extract_strided_slice %32 {offsets = [0, 32], sizes = [8, 32], strides = [1, 1]} : vector<8x128xbf16> to vector<8x32xbf16>
    %cst_24 = arith.constant dense<0.000000e+00> : vector<8x8xf32>
    %52 = tpu.matmul %49, %50, %cst_24 {dimension_numbers = #tpu.dot_dimension_numbers<[1], [1], [0], [0], [0, 0, 1, 0], [], []>} : vector<8x32xbf16>, vector<8x32xbf16>, vector<8x8xf32> -> vector<8x8xf32>
    %cst_25 = arith.constant dense<0xFF800000> : vector<8xf32>
    %53 = vector.multi_reduction <maximumf>, %52, %cst_25 [1] : vector<8x8xf32> to vector<8xf32>
    %54 = vector.shape_cast %53 : vector<8xf32> to vector<8x1xf32>
    %55 = vector.broadcast %54 : vector<8x1xf32> to vector<8x8xf32>
    %56 = arith.subf %52, %55 : vector<8x8xf32>
    %57 = math.exp %56 : vector<8x8xf32>
    %cst_26 = arith.constant dense<0.000000e+00> : vector<8xf32>
    %58 = vector.multi_reduction <add>, %57, %cst_26 [1] : vector<8x8xf32> to vector<8xf32>
    %59 = vector.shape_cast %58 : vector<8xf32> to vector<8x1xf32>
    %60 = vector.broadcast %59 : vector<8x1xf32> to vector<8x8xf32>
    %61 = arith.divf %57, %60 : vector<8x8xf32>
    %62 = arith.truncf %61 : vector<8x8xf32> to vector<8x8xbf16>
    %cst_27 = arith.constant dense<0.000000e+00> : vector<8x32xf32>
    %63 = tpu.matmul %62, %51, %cst_27 {dimension_numbers = #tpu.dot_dimension_numbers<[1], [0], [0], [1], [0, 0, 1, 1], [], []>} : vector<8x8xbf16>, vector<8x32xbf16>, vector<8x32xf32> -> vector<8x32xf32>
    %64 = vector.extract_strided_slice %20 {offsets = [0, 64], sizes = [8, 32], strides = [1, 1]} : vector<8x128xbf16> to vector<8x32xbf16>
    %65 = vector.extract_strided_slice %25 {offsets = [0, 64], sizes = [8, 32], strides = [1, 1]} : vector<8x128xbf16> to vector<8x32xbf16>
    %66 = vector.extract_strided_slice %32 {offsets = [0, 64], sizes = [8, 32], strides = [1, 1]} : vector<8x128xbf16> to vector<8x32xbf16>
    %cst_28 = arith.constant dense<0.000000e+00> : vector<8x8xf32>
    %67 = tpu.matmul %64, %65, %cst_28 {dimension_numbers = #tpu.dot_dimension_numbers<[1], [1], [0], [0], [0, 0, 1, 0], [], []>} : vector<8x32xbf16>, vector<8x32xbf16>, vector<8x8xf32> -> vector<8x8xf32>
    %cst_29 = arith.constant dense<0xFF800000> : vector<8xf32>
    %68 = vector.multi_reduction <maximumf>, %67, %cst_29 [1] : vector<8x8xf32> to vector<8xf32>
    %69 = vector.shape_cast %68 : vector<8xf32> to vector<8x1xf32>
    %70 = vector.broadcast %69 : vector<8x1xf32> to vector<8x8xf32>
    %71 = arith.subf %67, %70 : vector<8x8xf32>
    %72 = math.exp %71 : vector<8x8xf32>
    %cst_30 = arith.constant dense<0.000000e+00> : vector<8xf32>
    %73 = vector.multi_reduction <add>, %72, %cst_30 [1] : vector<8x8xf32> to vector<8xf32>
    %74 = vector.shape_cast %73 : vector<8xf32> to vector<8x1xf32>
    %75 = vector.broadcast %74 : vector<8x1xf32> to vector<8x8xf32>
    %76 = arith.divf %72, %75 : vector<8x8xf32>
    %77 = arith.truncf %76 : vector<8x8xf32> to vector<8x8xbf16>
    %cst_31 = arith.constant dense<0.000000e+00> : vector<8x32xf32>
    %78 = tpu.matmul %77, %66, %cst_31 {dimension_numbers = #tpu.dot_dimension_numbers<[1], [0], [0], [1], [0, 0, 1, 1], [], []>} : vector<8x8xbf16>, vector<8x32xbf16>, vector<8x32xf32> -> vector<8x32xf32>
    %79 = vector.extract_strided_slice %20 {offsets = [0, 96], sizes = [8, 32], strides = [1, 1]} : vector<8x128xbf16> to vector<8x32xbf16>
    %80 = vector.extract_strided_slice %25 {offsets = [0, 96], sizes = [8, 32], strides = [1, 1]} : vector<8x128xbf16> to vector<8x32xbf16>
    %81 = vector.extract_strided_slice %32 {offsets = [0, 96], sizes = [8, 32], strides = [1, 1]} : vector<8x128xbf16> to vector<8x32xbf16>
    %cst_32 = arith.constant dense<0.000000e+00> : vector<8x8xf32>
    %82 = tpu.matmul %79, %80, %cst_32 {dimension_numbers = #tpu.dot_dimension_numbers<[1], [1], [0], [0], [0, 0, 1, 0], [], []>} : vector<8x32xbf16>, vector<8x32xbf16>, vector<8x8xf32> -> vector<8x8xf32>
    %cst_33 = arith.constant dense<0xFF800000> : vector<8xf32>
    %83 = vector.multi_reduction <maximumf>, %82, %cst_33 [1] : vector<8x8xf32> to vector<8xf32>
    %84 = vector.shape_cast %83 : vector<8xf32> to vector<8x1xf32>
    %85 = vector.broadcast %84 : vector<8x1xf32> to vector<8x8xf32>
    %86 = arith.subf %82, %85 : vector<8x8xf32>
    %87 = math.exp %86 : vector<8x8xf32>
    %cst_34 = arith.constant dense<0.000000e+00> : vector<8xf32>
    %88 = vector.multi_reduction <add>, %87, %cst_34 [1] : vector<8x8xf32> to vector<8xf32>
    %89 = vector.shape_cast %88 : vector<8xf32> to vector<8x1xf32>
    %90 = vector.broadcast %89 : vector<8x1xf32> to vector<8x8xf32>
    %91 = arith.divf %87, %90 : vector<8x8xf32>
    %92 = arith.truncf %91 : vector<8x8xf32> to vector<8x8xbf16>
    %cst_35 = arith.constant dense<0.000000e+00> : vector<8x32xf32>
    %93 = tpu.matmul %92, %81, %cst_35 {dimension_numbers = #tpu.dot_dimension_numbers<[1], [0], [0], [1], [0, 0, 1, 1], [], []>} : vector<8x8xbf16>, vector<8x32xbf16>, vector<8x32xf32> -> vector<8x32xf32>
    %94 = tpu.concatenate %48, %63, %78, %93 in 1 : vector<8x32xf32>, vector<8x32xf32>, vector<8x32xf32>, vector<8x32xf32> -> vector<8x128xf32>
    %95 = arith.truncf %94 : vector<8x128xf32> to vector<8x128xbf16>
    %cst_36 = arith.constant dense<0.000000e+00> : vector<8x128xf32>
    %96 = tpu.matmul %95, %9, %cst_36 {dimension_numbers = #tpu.dot_dimension_numbers<[1], [0], [0], [1], [0, 0, 1, 1], [], []>} : vector<8x128xbf16>, vector<128x128xbf16>, vector<8x128xf32> -> vector<8x128xf32>
    %97 = vector.broadcast %33 : vector<1x128xf32> to vector<8x128xf32>
    %98 = arith.addf %96, %97 : vector<8x128xf32>
    %99 = arith.addf %2, %98 : vector<8x128xf32>
    %cst_37 = arith.constant dense<0.000000e+00> : vector<8xf32>
    %100 = vector.multi_reduction <add>, %99, %cst_37 [1] : vector<8x128xf32> to vector<8xf32>
    %101 = vector.shape_cast %100 : vector<8xf32> to vector<8x1xf32>
    %cst_38 = arith.constant 1.280000e+02 : f32
    %102 = vector.broadcast %cst_38 : f32 to vector<8x1xf32>
    %103 = arith.divf %101, %102 : vector<8x1xf32>
    %104 = vector.broadcast %103 : vector<8x1xf32> to vector<8x128xf32>
    %105 = arith.subf %99, %104 : vector<8x128xf32>
    %106 = arith.mulf %105, %105 : vector<8x128xf32>
    %cst_39 = arith.constant dense<0.000000e+00> : vector<8xf32>
    %107 = vector.multi_reduction <add>, %106, %cst_39 [1] : vector<8x128xf32> to vector<8xf32>
    %108 = vector.shape_cast %107 : vector<8xf32> to vector<8x1xf32>
    %cst_40 = arith.constant 1.280000e+02 : f32
    %109 = vector.broadcast %cst_40 : f32 to vector<8x1xf32>
    %110 = arith.divf %108, %109 : vector<8x1xf32>
    %cst_41 = arith.constant 9.99999974E-6 : f32
    %111 = vector.broadcast %cst_41 : f32 to vector<8x1xf32>
    %112 = arith.addf %110, %111 : vector<8x1xf32>
    %113 = math.rsqrt %112 : vector<8x1xf32>
    %114 = vector.broadcast %113 : vector<8x1xf32> to vector<8x128xf32>
    %115 = arith.mulf %105, %114 : vector<8x128xf32>
    %116 = vector.extract_strided_slice %0 {offsets = [14, 0], sizes = [1, 128], strides = [1, 1]} : vector<22x256xf32> to vector<1x128xf32>
    %117 = vector.broadcast %116 : vector<1x128xf32> to vector<8x128xf32>
    %118 = arith.mulf %115, %117 : vector<8x128xf32>
    %119 = vector.extract_strided_slice %0 {offsets = [15, 0], sizes = [1, 128], strides = [1, 1]} : vector<22x256xf32> to vector<1x128xf32>
    %120 = vector.broadcast %119 : vector<1x128xf32> to vector<8x128xf32>
    %121 = arith.addf %118, %120 : vector<8x128xf32>
    %122 = arith.addf %4, %8 : vector<32x128xf32>
    %123 = arith.truncf %122 : vector<32x128xf32> to vector<32x128xbf16>
    %124 = arith.truncf %4 : vector<32x128xf32> to vector<32x128xbf16>
    %125 = arith.addf %121, %6 : vector<8x128xf32>
    %126 = arith.truncf %125 : vector<8x128xf32> to vector<8x128xbf16>
    %c0_42 = arith.constant 0 : index
    %c0_43 = arith.constant 0 : index
    %127 = vector.load %arg6[%c0_42, %c0_43] : memref<768x64xbf16, #tpu.memory_space<vmem>>, vector<128x64xbf16>
    %cst_44 = arith.constant dense<0.000000e+00> : vector<8x64xf32>
    %128 = tpu.matmul %126, %127, %cst_44 {dimension_numbers = #tpu.dot_dimension_numbers<[1], [0], [0], [1], [0, 0, 1, 1], [], []>} : vector<8x128xbf16>, vector<128x64xbf16>, vector<8x64xf32> -> vector<8x64xf32>
    %129 = vector.extract_strided_slice %0 {offsets = [4, 0], sizes = [1, 64], strides = [1, 1]} : vector<22x256xf32> to vector<1x64xf32>
    %130 = vector.broadcast %129 : vector<1x64xf32> to vector<8x64xf32>
    %131 = arith.addf %128, %130 : vector<8x64xf32>
    %cst_45 = arith.constant 2.500000e-01 : f32
    %132 = vector.broadcast %cst_45 : f32 to vector<8x64xf32>
    %133 = arith.mulf %131, %132 : vector<8x64xf32>
    %134 = arith.truncf %133 : vector<8x64xf32> to vector<8x64xbf16>
    %c128 = arith.constant 128 : index
    %c0_46 = arith.constant 0 : index
    %135 = vector.load %arg6[%c128, %c0_46] : memref<768x64xbf16, #tpu.memory_space<vmem>>, vector<128x64xbf16>
    %cst_47 = arith.constant dense<0.000000e+00> : vector<32x64xf32>
    %136 = tpu.matmul %123, %135, %cst_47 {dimension_numbers = #tpu.dot_dimension_numbers<[1], [0], [0], [1], [0, 0, 1, 1], [], []>} : vector<32x128xbf16>, vector<128x64xbf16>, vector<32x64xf32> -> vector<32x64xf32>
    %137 = vector.extract_strided_slice %0 {offsets = [5, 0], sizes = [1, 64], strides = [1, 1]} : vector<22x256xf32> to vector<1x64xf32>
    %138 = vector.broadcast %137 : vector<1x64xf32> to vector<32x64xf32>
    %139 = arith.addf %136, %138 : vector<32x64xf32>
    %140 = arith.truncf %139 : vector<32x64xf32> to vector<32x64xbf16>
    %c256_48 = arith.constant 256 : index
    %c0_49 = arith.constant 0 : index
    %141 = vector.load %arg6[%c256_48, %c0_49] : memref<768x64xbf16, #tpu.memory_space<vmem>>, vector<128x64xbf16>
    %cst_50 = arith.constant dense<0.000000e+00> : vector<32x64xf32>
    %142 = tpu.matmul %124, %141, %cst_50 {dimension_numbers = #tpu.dot_dimension_numbers<[1], [0], [0], [1], [0, 0, 1, 1], [], []>} : vector<32x128xbf16>, vector<128x64xbf16>, vector<32x64xf32> -> vector<32x64xf32>
    %143 = vector.extract_strided_slice %0 {offsets = [6, 0], sizes = [1, 64], strides = [1, 1]} : vector<22x256xf32> to vector<1x64xf32>
    %144 = vector.broadcast %143 : vector<1x64xf32> to vector<32x64xf32>
    %145 = arith.addf %142, %144 : vector<32x64xf32>
    %146 = arith.truncf %145 : vector<32x64xf32> to vector<32x64xbf16>
    %c128_51 = arith.constant 128 : index
    %c0_52 = arith.constant 0 : index
    %147 = vector.load %arg7[%c128_51, %c0_52] : memref<512x128xbf16, #tpu.memory_space<vmem>>, vector<64x128xbf16>
    %148 = vector.extract_strided_slice %0 {offsets = [7, 0], sizes = [1, 128], strides = [1, 1]} : vector<22x256xf32> to vector<1x128xf32>
    %149 = vector.extract_strided_slice %134 {offsets = [0, 0], sizes = [8, 16], strides = [1, 1]} : vector<8x64xbf16> to vector<8x16xbf16>
    %150 = vector.extract_strided_slice %140 {offsets = [0, 0], sizes = [32, 16], strides = [1, 1]} : vector<32x64xbf16> to vector<32x16xbf16>
    %151 = vector.extract_strided_slice %146 {offsets = [0, 0], sizes = [32, 16], strides = [1, 1]} : vector<32x64xbf16> to vector<32x16xbf16>
    %cst_53 = arith.constant dense<0.000000e+00> : vector<8x32xf32>
    %152 = tpu.matmul %149, %150, %cst_53 {dimension_numbers = #tpu.dot_dimension_numbers<[1], [1], [0], [0], [0, 0, 1, 0], [], []>} : vector<8x16xbf16>, vector<32x16xbf16>, vector<8x32xf32> -> vector<8x32xf32>
    %cst_54 = arith.constant dense<0xFF800000> : vector<8xf32>
    %153 = vector.multi_reduction <maximumf>, %152, %cst_54 [1] : vector<8x32xf32> to vector<8xf32>
    %154 = vector.shape_cast %153 : vector<8xf32> to vector<8x1xf32>
    %155 = vector.broadcast %154 : vector<8x1xf32> to vector<8x32xf32>
    %156 = arith.subf %152, %155 : vector<8x32xf32>
    %157 = math.exp %156 : vector<8x32xf32>
    %cst_55 = arith.constant dense<0.000000e+00> : vector<8xf32>
    %158 = vector.multi_reduction <add>, %157, %cst_55 [1] : vector<8x32xf32> to vector<8xf32>
    %159 = vector.shape_cast %158 : vector<8xf32> to vector<8x1xf32>
    %160 = vector.broadcast %159 : vector<8x1xf32> to vector<8x32xf32>
    %161 = arith.divf %157, %160 : vector<8x32xf32>
    %162 = arith.truncf %161 : vector<8x32xf32> to vector<8x32xbf16>
    %cst_56 = arith.constant dense<0.000000e+00> : vector<8x16xf32>
    %163 = tpu.matmul %162, %151, %cst_56 {dimension_numbers = #tpu.dot_dimension_numbers<[1], [0], [0], [1], [0, 0, 1, 1], [], []>} : vector<8x32xbf16>, vector<32x16xbf16>, vector<8x16xf32> -> vector<8x16xf32>
    %164 = vector.extract_strided_slice %134 {offsets = [0, 16], sizes = [8, 16], strides = [1, 1]} : vector<8x64xbf16> to vector<8x16xbf16>
    %165 = vector.extract_strided_slice %140 {offsets = [0, 16], sizes = [32, 16], strides = [1, 1]} : vector<32x64xbf16> to vector<32x16xbf16>
    %166 = vector.extract_strided_slice %146 {offsets = [0, 16], sizes = [32, 16], strides = [1, 1]} : vector<32x64xbf16> to vector<32x16xbf16>
    %cst_57 = arith.constant dense<0.000000e+00> : vector<8x32xf32>
    %167 = tpu.matmul %164, %165, %cst_57 {dimension_numbers = #tpu.dot_dimension_numbers<[1], [1], [0], [0], [0, 0, 1, 0], [], []>} : vector<8x16xbf16>, vector<32x16xbf16>, vector<8x32xf32> -> vector<8x32xf32>
    %cst_58 = arith.constant dense<0xFF800000> : vector<8xf32>
    %168 = vector.multi_reduction <maximumf>, %167, %cst_58 [1] : vector<8x32xf32> to vector<8xf32>
    %169 = vector.shape_cast %168 : vector<8xf32> to vector<8x1xf32>
    %170 = vector.broadcast %169 : vector<8x1xf32> to vector<8x32xf32>
    %171 = arith.subf %167, %170 : vector<8x32xf32>
    %172 = math.exp %171 : vector<8x32xf32>
    %cst_59 = arith.constant dense<0.000000e+00> : vector<8xf32>
    %173 = vector.multi_reduction <add>, %172, %cst_59 [1] : vector<8x32xf32> to vector<8xf32>
    %174 = vector.shape_cast %173 : vector<8xf32> to vector<8x1xf32>
    %175 = vector.broadcast %174 : vector<8x1xf32> to vector<8x32xf32>
    %176 = arith.divf %172, %175 : vector<8x32xf32>
    %177 = arith.truncf %176 : vector<8x32xf32> to vector<8x32xbf16>
    %cst_60 = arith.constant dense<0.000000e+00> : vector<8x16xf32>
    %178 = tpu.matmul %177, %166, %cst_60 {dimension_numbers = #tpu.dot_dimension_numbers<[1], [0], [0], [1], [0, 0, 1, 1], [], []>} : vector<8x32xbf16>, vector<32x16xbf16>, vector<8x16xf32> -> vector<8x16xf32>
    %179 = vector.extract_strided_slice %134 {offsets = [0, 32], sizes = [8, 16], strides = [1, 1]} : vector<8x64xbf16> to vector<8x16xbf16>
    %180 = vector.extract_strided_slice %140 {offsets = [0, 32], sizes = [32, 16], strides = [1, 1]} : vector<32x64xbf16> to vector<32x16xbf16>
    %181 = vector.extract_strided_slice %146 {offsets = [0, 32], sizes = [32, 16], strides = [1, 1]} : vector<32x64xbf16> to vector<32x16xbf16>
    %cst_61 = arith.constant dense<0.000000e+00> : vector<8x32xf32>
    %182 = tpu.matmul %179, %180, %cst_61 {dimension_numbers = #tpu.dot_dimension_numbers<[1], [1], [0], [0], [0, 0, 1, 0], [], []>} : vector<8x16xbf16>, vector<32x16xbf16>, vector<8x32xf32> -> vector<8x32xf32>
    %cst_62 = arith.constant dense<0xFF800000> : vector<8xf32>
    %183 = vector.multi_reduction <maximumf>, %182, %cst_62 [1] : vector<8x32xf32> to vector<8xf32>
    %184 = vector.shape_cast %183 : vector<8xf32> to vector<8x1xf32>
    %185 = vector.broadcast %184 : vector<8x1xf32> to vector<8x32xf32>
    %186 = arith.subf %182, %185 : vector<8x32xf32>
    %187 = math.exp %186 : vector<8x32xf32>
    %cst_63 = arith.constant dense<0.000000e+00> : vector<8xf32>
    %188 = vector.multi_reduction <add>, %187, %cst_63 [1] : vector<8x32xf32> to vector<8xf32>
    %189 = vector.shape_cast %188 : vector<8xf32> to vector<8x1xf32>
    %190 = vector.broadcast %189 : vector<8x1xf32> to vector<8x32xf32>
    %191 = arith.divf %187, %190 : vector<8x32xf32>
    %192 = arith.truncf %191 : vector<8x32xf32> to vector<8x32xbf16>
    %cst_64 = arith.constant dense<0.000000e+00> : vector<8x16xf32>
    %193 = tpu.matmul %192, %181, %cst_64 {dimension_numbers = #tpu.dot_dimension_numbers<[1], [0], [0], [1], [0, 0, 1, 1], [], []>} : vector<8x32xbf16>, vector<32x16xbf16>, vector<8x16xf32> -> vector<8x16xf32>
    %194 = vector.extract_strided_slice %134 {offsets = [0, 48], sizes = [8, 16], strides = [1, 1]} : vector<8x64xbf16> to vector<8x16xbf16>
    %195 = vector.extract_strided_slice %140 {offsets = [0, 48], sizes = [32, 16], strides = [1, 1]} : vector<32x64xbf16> to vector<32x16xbf16>
    %196 = vector.extract_strided_slice %146 {offsets = [0, 48], sizes = [32, 16], strides = [1, 1]} : vector<32x64xbf16> to vector<32x16xbf16>
    %cst_65 = arith.constant dense<0.000000e+00> : vector<8x32xf32>
    %197 = tpu.matmul %194, %195, %cst_65 {dimension_numbers = #tpu.dot_dimension_numbers<[1], [1], [0], [0], [0, 0, 1, 0], [], []>} : vector<8x16xbf16>, vector<32x16xbf16>, vector<8x32xf32> -> vector<8x32xf32>
    %cst_66 = arith.constant dense<0xFF800000> : vector<8xf32>
    %198 = vector.multi_reduction <maximumf>, %197, %cst_66 [1] : vector<8x32xf32> to vector<8xf32>
    %199 = vector.shape_cast %198 : vector<8xf32> to vector<8x1xf32>
    %200 = vector.broadcast %199 : vector<8x1xf32> to vector<8x32xf32>
    %201 = arith.subf %197, %200 : vector<8x32xf32>
    %202 = math.exp %201 : vector<8x32xf32>
    %cst_67 = arith.constant dense<0.000000e+00> : vector<8xf32>
    %203 = vector.multi_reduction <add>, %202, %cst_67 [1] : vector<8x32xf32> to vector<8xf32>
    %204 = vector.shape_cast %203 : vector<8xf32> to vector<8x1xf32>
    %205 = vector.broadcast %204 : vector<8x1xf32> to vector<8x32xf32>
    %206 = arith.divf %202, %205 : vector<8x32xf32>
    %207 = arith.truncf %206 : vector<8x32xf32> to vector<8x32xbf16>
    %cst_68 = arith.constant dense<0.000000e+00> : vector<8x16xf32>
    %208 = tpu.matmul %207, %196, %cst_68 {dimension_numbers = #tpu.dot_dimension_numbers<[1], [0], [0], [1], [0, 0, 1, 1], [], []>} : vector<8x32xbf16>, vector<32x16xbf16>, vector<8x16xf32> -> vector<8x16xf32>
    %209 = tpu.concatenate %163, %178, %193, %208 in 1 : vector<8x16xf32>, vector<8x16xf32>, vector<8x16xf32>, vector<8x16xf32> -> vector<8x64xf32>
    %210 = arith.truncf %209 : vector<8x64xf32> to vector<8x64xbf16>
    %cst_69 = arith.constant dense<0.000000e+00> : vector<8x128xf32>
    %211 = tpu.matmul %210, %147, %cst_69 {dimension_numbers = #tpu.dot_dimension_numbers<[1], [0], [0], [1], [0, 0, 1, 1], [], []>} : vector<8x64xbf16>, vector<64x128xbf16>, vector<8x128xf32> -> vector<8x128xf32>
    %212 = vector.broadcast %148 : vector<1x128xf32> to vector<8x128xf32>
    %213 = arith.addf %211, %212 : vector<8x128xf32>
    %214 = arith.addf %121, %213 : vector<8x128xf32>
    %cst_70 = arith.constant dense<0.000000e+00> : vector<8xf32>
    %215 = vector.multi_reduction <add>, %214, %cst_70 [1] : vector<8x128xf32> to vector<8xf32>
    %216 = vector.shape_cast %215 : vector<8xf32> to vector<8x1xf32>
    %cst_71 = arith.constant 1.280000e+02 : f32
    %217 = vector.broadcast %cst_71 : f32 to vector<8x1xf32>
    %218 = arith.divf %216, %217 : vector<8x1xf32>
    %219 = vector.broadcast %218 : vector<8x1xf32> to vector<8x128xf32>
    %220 = arith.subf %214, %219 : vector<8x128xf32>
    %221 = arith.mulf %220, %220 : vector<8x128xf32>
    %cst_72 = arith.constant dense<0.000000e+00> : vector<8xf32>
    %222 = vector.multi_reduction <add>, %221, %cst_72 [1] : vector<8x128xf32> to vector<8xf32>
    %223 = vector.shape_cast %222 : vector<8xf32> to vector<8x1xf32>
    %cst_73 = arith.constant 1.280000e+02 : f32
    %224 = vector.broadcast %cst_73 : f32 to vector<8x1xf32>
    %225 = arith.divf %223, %224 : vector<8x1xf32>
    %cst_74 = arith.constant 9.99999974E-6 : f32
    %226 = vector.broadcast %cst_74 : f32 to vector<8x1xf32>
    %227 = arith.addf %225, %226 : vector<8x1xf32>
    %228 = math.rsqrt %227 : vector<8x1xf32>
    %229 = vector.broadcast %228 : vector<8x1xf32> to vector<8x128xf32>
    %230 = arith.mulf %220, %229 : vector<8x128xf32>
    %231 = vector.extract_strided_slice %0 {offsets = [16, 0], sizes = [1, 128], strides = [1, 1]} : vector<22x256xf32> to vector<1x128xf32>
    %232 = vector.broadcast %231 : vector<1x128xf32> to vector<8x128xf32>
    %233 = arith.mulf %230, %232 : vector<8x128xf32>
    %234 = vector.extract_strided_slice %0 {offsets = [17, 0], sizes = [1, 128], strides = [1, 1]} : vector<22x256xf32> to vector<1x128xf32>
    %235 = vector.broadcast %234 : vector<1x128xf32> to vector<8x128xf32>
    %236 = arith.addf %233, %235 : vector<8x128xf32>
    %237 = arith.truncf %236 : vector<8x128xf32> to vector<8x128xbf16>
    %c0_75 = arith.constant 0 : index
    %c0_76 = arith.constant 0 : index
    %238 = vector.load %arg8[%c0_75, %c0_76] : memref<128x256xbf16, #tpu.memory_space<vmem>>, vector<128x256xbf16>
    %cst_77 = arith.constant dense<0.000000e+00> : vector<8x256xf32>
    %239 = tpu.matmul %237, %238, %cst_77 {dimension_numbers = #tpu.dot_dimension_numbers<[1], [0], [0], [1], [0, 0, 1, 1], [], []>} : vector<8x128xbf16>, vector<128x256xbf16>, vector<8x256xf32> -> vector<8x256xf32>
    %240 = vector.extract_strided_slice %0 {offsets = [12, 0], sizes = [1, 256], strides = [1, 1]} : vector<22x256xf32> to vector<1x256xf32>
    %241 = vector.broadcast %240 : vector<1x256xf32> to vector<8x256xf32>
    %242 = arith.addf %239, %241 : vector<8x256xf32>
    %cst_78 = arith.constant 0.000000e+00 : f32
    %243 = vector.broadcast %cst_78 : f32 to vector<8x256xf32>
    %244 = arith.maximumf %242, %243 : vector<8x256xf32>
    %245 = arith.truncf %244 : vector<8x256xf32> to vector<8x256xbf16>
    %c256_79 = arith.constant 256 : index
    %c0_80 = arith.constant 0 : index
    %246 = vector.load %arg7[%c256_79, %c0_80] : memref<512x128xbf16, #tpu.memory_space<vmem>>, vector<256x128xbf16>
    %cst_81 = arith.constant dense<0.000000e+00> : vector<8x128xf32>
    %247 = tpu.matmul %245, %246, %cst_81 {dimension_numbers = #tpu.dot_dimension_numbers<[1], [0], [0], [1], [0, 0, 1, 1], [], []>} : vector<8x256xbf16>, vector<256x128xbf16>, vector<8x128xf32> -> vector<8x128xf32>
    %248 = vector.extract_strided_slice %0 {offsets = [13, 0], sizes = [1, 128], strides = [1, 1]} : vector<22x256xf32> to vector<1x128xf32>
    %249 = vector.broadcast %248 : vector<1x128xf32> to vector<8x128xf32>
    %250 = arith.addf %247, %249 : vector<8x128xf32>
    %251 = arith.addf %236, %250 : vector<8x128xf32>
    %cst_82 = arith.constant dense<0.000000e+00> : vector<8xf32>
    %252 = vector.multi_reduction <add>, %251, %cst_82 [1] : vector<8x128xf32> to vector<8xf32>
    %253 = vector.shape_cast %252 : vector<8xf32> to vector<8x1xf32>
    %cst_83 = arith.constant 1.280000e+02 : f32
    %254 = vector.broadcast %cst_83 : f32 to vector<8x1xf32>
    %255 = arith.divf %253, %254 : vector<8x1xf32>
    %256 = vector.broadcast %255 : vector<8x1xf32> to vector<8x128xf32>
    %257 = arith.subf %251, %256 : vector<8x128xf32>
    %258 = arith.mulf %257, %257 : vector<8x128xf32>
    %cst_84 = arith.constant dense<0.000000e+00> : vector<8xf32>
    %259 = vector.multi_reduction <add>, %258, %cst_84 [1] : vector<8x128xf32> to vector<8xf32>
    %260 = vector.shape_cast %259 : vector<8xf32> to vector<8x1xf32>
    %cst_85 = arith.constant 1.280000e+02 : f32
    %261 = vector.broadcast %cst_85 : f32 to vector<8x1xf32>
    %262 = arith.divf %260, %261 : vector<8x1xf32>
    %cst_86 = arith.constant 9.99999974E-6 : f32
    %263 = vector.broadcast %cst_86 : f32 to vector<8x1xf32>
    %264 = arith.addf %262, %263 : vector<8x1xf32>
    %265 = math.rsqrt %264 : vector<8x1xf32>
    %266 = vector.broadcast %265 : vector<8x1xf32> to vector<8x128xf32>
    %267 = arith.mulf %257, %266 : vector<8x128xf32>
    %268 = vector.extract_strided_slice %0 {offsets = [18, 0], sizes = [1, 128], strides = [1, 1]} : vector<22x256xf32> to vector<1x128xf32>
    %269 = vector.broadcast %268 : vector<1x128xf32> to vector<8x128xf32>
    %270 = arith.mulf %267, %269 : vector<8x128xf32>
    %271 = vector.extract_strided_slice %0 {offsets = [19, 0], sizes = [1, 128], strides = [1, 1]} : vector<22x256xf32> to vector<1x128xf32>
    %272 = vector.broadcast %271 : vector<1x128xf32> to vector<8x128xf32>
    %273 = arith.addf %270, %272 : vector<8x128xf32>
    %274 = arith.addf %273, %6 : vector<8x128xf32>
    %275 = arith.truncf %274 : vector<8x128xf32> to vector<8x128xbf16>
    %c384 = arith.constant 384 : index
    %c0_87 = arith.constant 0 : index
    %276 = vector.load %arg6[%c384, %c0_87] : memref<768x64xbf16, #tpu.memory_space<vmem>>, vector<128x64xbf16>
    %cst_88 = arith.constant dense<0.000000e+00> : vector<32x64xf32>
    %277 = tpu.matmul %123, %276, %cst_88 {dimension_numbers = #tpu.dot_dimension_numbers<[1], [0], [0], [1], [0, 0, 1, 1], [], []>} : vector<32x128xbf16>, vector<128x64xbf16>, vector<32x64xf32> -> vector<32x64xf32>
    %278 = vector.extract_strided_slice %0 {offsets = [8, 0], sizes = [1, 64], strides = [1, 1]} : vector<22x256xf32> to vector<1x64xf32>
    %279 = vector.broadcast %278 : vector<1x64xf32> to vector<32x64xf32>
    %280 = arith.addf %277, %279 : vector<32x64xf32>
    %cst_89 = arith.constant 2.500000e-01 : f32
    %281 = vector.broadcast %cst_89 : f32 to vector<32x64xf32>
    %282 = arith.mulf %280, %281 : vector<32x64xf32>
    %283 = arith.truncf %282 : vector<32x64xf32> to vector<32x64xbf16>
    %c512 = arith.constant 512 : index
    %c0_90 = arith.constant 0 : index
    %284 = vector.load %arg6[%c512, %c0_90] : memref<768x64xbf16, #tpu.memory_space<vmem>>, vector<128x64xbf16>
    %cst_91 = arith.constant dense<0.000000e+00> : vector<8x64xf32>
    %285 = tpu.matmul %275, %284, %cst_91 {dimension_numbers = #tpu.dot_dimension_numbers<[1], [0], [0], [1], [0, 0, 1, 1], [], []>} : vector<8x128xbf16>, vector<128x64xbf16>, vector<8x64xf32> -> vector<8x64xf32>
    %286 = vector.extract_strided_slice %0 {offsets = [9, 0], sizes = [1, 64], strides = [1, 1]} : vector<22x256xf32> to vector<1x64xf32>
    %287 = vector.broadcast %286 : vector<1x64xf32> to vector<8x64xf32>
    %288 = arith.addf %285, %287 : vector<8x64xf32>
    %289 = arith.truncf %288 : vector<8x64xf32> to vector<8x64xbf16>
    %290 = arith.truncf %273 : vector<8x128xf32> to vector<8x128xbf16>
    %c640 = arith.constant 640 : index
    %c0_92 = arith.constant 0 : index
    %291 = vector.load %arg6[%c640, %c0_92] : memref<768x64xbf16, #tpu.memory_space<vmem>>, vector<128x64xbf16>
    %cst_93 = arith.constant dense<0.000000e+00> : vector<8x64xf32>
    %292 = tpu.matmul %290, %291, %cst_93 {dimension_numbers = #tpu.dot_dimension_numbers<[1], [0], [0], [1], [0, 0, 1, 1], [], []>} : vector<8x128xbf16>, vector<128x64xbf16>, vector<8x64xf32> -> vector<8x64xf32>
    %293 = vector.extract_strided_slice %0 {offsets = [10, 0], sizes = [1, 64], strides = [1, 1]} : vector<22x256xf32> to vector<1x64xf32>
    %294 = vector.broadcast %293 : vector<1x64xf32> to vector<8x64xf32>
    %295 = arith.addf %292, %294 : vector<8x64xf32>
    %296 = arith.truncf %295 : vector<8x64xf32> to vector<8x64xbf16>
    %c192 = arith.constant 192 : index
    %c0_94 = arith.constant 0 : index
    %297 = vector.load %arg7[%c192, %c0_94] : memref<512x128xbf16, #tpu.memory_space<vmem>>, vector<64x128xbf16>
    %298 = vector.extract_strided_slice %0 {offsets = [11, 0], sizes = [1, 128], strides = [1, 1]} : vector<22x256xf32> to vector<1x128xf32>
    %299 = vector.extract_strided_slice %283 {offsets = [0, 0], sizes = [32, 16], strides = [1, 1]} : vector<32x64xbf16> to vector<32x16xbf16>
    %300 = vector.extract_strided_slice %289 {offsets = [0, 0], sizes = [8, 16], strides = [1, 1]} : vector<8x64xbf16> to vector<8x16xbf16>
    %301 = vector.extract_strided_slice %296 {offsets = [0, 0], sizes = [8, 16], strides = [1, 1]} : vector<8x64xbf16> to vector<8x16xbf16>
    %cst_95 = arith.constant dense<0.000000e+00> : vector<8x32xf32>
    %302 = tpu.matmul %300, %299, %cst_95 {dimension_numbers = #tpu.dot_dimension_numbers<[1], [1], [0], [0], [0, 0, 1, 0], [], []>} : vector<8x16xbf16>, vector<32x16xbf16>, vector<8x32xf32> -> vector<8x32xf32>
    %cst_96 = arith.constant dense<0xFF800000> : vector<32xf32>
    %303 = vector.multi_reduction <maximumf>, %302, %cst_96 [0] : vector<8x32xf32> to vector<32xf32>
    %304 = vector.shape_cast %303 : vector<32xf32> to vector<1x32xf32>
    %305 = vector.broadcast %304 : vector<1x32xf32> to vector<8x32xf32>
    %306 = arith.subf %302, %305 : vector<8x32xf32>
    %307 = math.exp %306 : vector<8x32xf32>
    %cst_97 = arith.constant dense<0.000000e+00> : vector<32xf32>
    %308 = vector.multi_reduction <add>, %307, %cst_97 [0] : vector<8x32xf32> to vector<32xf32>
    %309 = vector.shape_cast %308 : vector<32xf32> to vector<1x32xf32>
    %310 = vector.broadcast %309 : vector<1x32xf32> to vector<8x32xf32>
    %311 = arith.divf %307, %310 : vector<8x32xf32>
    %312 = tpu.transpose %311, [1, 0] : vector<8x32xf32> -> vector<32x8xf32>
    %313 = arith.truncf %312 : vector<32x8xf32> to vector<32x8xbf16>
    %cst_98 = arith.constant dense<0.000000e+00> : vector<32x16xf32>
    %314 = tpu.matmul %313, %301, %cst_98 {dimension_numbers = #tpu.dot_dimension_numbers<[1], [0], [0], [1], [0, 0, 1, 1], [], []>} : vector<32x8xbf16>, vector<8x16xbf16>, vector<32x16xf32> -> vector<32x16xf32>
    %315 = vector.extract_strided_slice %283 {offsets = [0, 16], sizes = [32, 16], strides = [1, 1]} : vector<32x64xbf16> to vector<32x16xbf16>
    %316 = vector.extract_strided_slice %289 {offsets = [0, 16], sizes = [8, 16], strides = [1, 1]} : vector<8x64xbf16> to vector<8x16xbf16>
    %317 = vector.extract_strided_slice %296 {offsets = [0, 16], sizes = [8, 16], strides = [1, 1]} : vector<8x64xbf16> to vector<8x16xbf16>
    %cst_99 = arith.constant dense<0.000000e+00> : vector<8x32xf32>
    %318 = tpu.matmul %316, %315, %cst_99 {dimension_numbers = #tpu.dot_dimension_numbers<[1], [1], [0], [0], [0, 0, 1, 0], [], []>} : vector<8x16xbf16>, vector<32x16xbf16>, vector<8x32xf32> -> vector<8x32xf32>
    %cst_100 = arith.constant dense<0xFF800000> : vector<32xf32>
    %319 = vector.multi_reduction <maximumf>, %318, %cst_100 [0] : vector<8x32xf32> to vector<32xf32>
    %320 = vector.shape_cast %319 : vector<32xf32> to vector<1x32xf32>
    %321 = vector.broadcast %320 : vector<1x32xf32> to vector<8x32xf32>
    %322 = arith.subf %318, %321 : vector<8x32xf32>
    %323 = math.exp %322 : vector<8x32xf32>
    %cst_101 = arith.constant dense<0.000000e+00> : vector<32xf32>
    %324 = vector.multi_reduction <add>, %323, %cst_101 [0] : vector<8x32xf32> to vector<32xf32>
    %325 = vector.shape_cast %324 : vector<32xf32> to vector<1x32xf32>
    %326 = vector.broadcast %325 : vector<1x32xf32> to vector<8x32xf32>
    %327 = arith.divf %323, %326 : vector<8x32xf32>
    %328 = tpu.transpose %327, [1, 0] : vector<8x32xf32> -> vector<32x8xf32>
    %329 = arith.truncf %328 : vector<32x8xf32> to vector<32x8xbf16>
    %cst_102 = arith.constant dense<0.000000e+00> : vector<32x16xf32>
    %330 = tpu.matmul %329, %317, %cst_102 {dimension_numbers = #tpu.dot_dimension_numbers<[1], [0], [0], [1], [0, 0, 1, 1], [], []>} : vector<32x8xbf16>, vector<8x16xbf16>, vector<32x16xf32> -> vector<32x16xf32>
    %331 = vector.extract_strided_slice %283 {offsets = [0, 32], sizes = [32, 16], strides = [1, 1]} : vector<32x64xbf16> to vector<32x16xbf16>
    %332 = vector.extract_strided_slice %289 {offsets = [0, 32], sizes = [8, 16], strides = [1, 1]} : vector<8x64xbf16> to vector<8x16xbf16>
    %333 = vector.extract_strided_slice %296 {offsets = [0, 32], sizes = [8, 16], strides = [1, 1]} : vector<8x64xbf16> to vector<8x16xbf16>
    %cst_103 = arith.constant dense<0.000000e+00> : vector<8x32xf32>
    %334 = tpu.matmul %332, %331, %cst_103 {dimension_numbers = #tpu.dot_dimension_numbers<[1], [1], [0], [0], [0, 0, 1, 0], [], []>} : vector<8x16xbf16>, vector<32x16xbf16>, vector<8x32xf32> -> vector<8x32xf32>
    %cst_104 = arith.constant dense<0xFF800000> : vector<32xf32>
    %335 = vector.multi_reduction <maximumf>, %334, %cst_104 [0] : vector<8x32xf32> to vector<32xf32>
    %336 = vector.shape_cast %335 : vector<32xf32> to vector<1x32xf32>
    %337 = vector.broadcast %336 : vector<1x32xf32> to vector<8x32xf32>
    %338 = arith.subf %334, %337 : vector<8x32xf32>
    %339 = math.exp %338 : vector<8x32xf32>
    %cst_105 = arith.constant dense<0.000000e+00> : vector<32xf32>
    %340 = vector.multi_reduction <add>, %339, %cst_105 [0] : vector<8x32xf32> to vector<32xf32>
    %341 = vector.shape_cast %340 : vector<32xf32> to vector<1x32xf32>
    %342 = vector.broadcast %341 : vector<1x32xf32> to vector<8x32xf32>
    %343 = arith.divf %339, %342 : vector<8x32xf32>
    %344 = tpu.transpose %343, [1, 0] : vector<8x32xf32> -> vector<32x8xf32>
    %345 = arith.truncf %344 : vector<32x8xf32> to vector<32x8xbf16>
    %cst_106 = arith.constant dense<0.000000e+00> : vector<32x16xf32>
    %346 = tpu.matmul %345, %333, %cst_106 {dimension_numbers = #tpu.dot_dimension_numbers<[1], [0], [0], [1], [0, 0, 1, 1], [], []>} : vector<32x8xbf16>, vector<8x16xbf16>, vector<32x16xf32> -> vector<32x16xf32>
    %347 = vector.extract_strided_slice %283 {offsets = [0, 48], sizes = [32, 16], strides = [1, 1]} : vector<32x64xbf16> to vector<32x16xbf16>
    %348 = vector.extract_strided_slice %289 {offsets = [0, 48], sizes = [8, 16], strides = [1, 1]} : vector<8x64xbf16> to vector<8x16xbf16>
    %349 = vector.extract_strided_slice %296 {offsets = [0, 48], sizes = [8, 16], strides = [1, 1]} : vector<8x64xbf16> to vector<8x16xbf16>
    %cst_107 = arith.constant dense<0.000000e+00> : vector<8x32xf32>
    %350 = tpu.matmul %348, %347, %cst_107 {dimension_numbers = #tpu.dot_dimension_numbers<[1], [1], [0], [0], [0, 0, 1, 0], [], []>} : vector<8x16xbf16>, vector<32x16xbf16>, vector<8x32xf32> -> vector<8x32xf32>
    %cst_108 = arith.constant dense<0xFF800000> : vector<32xf32>
    %351 = vector.multi_reduction <maximumf>, %350, %cst_108 [0] : vector<8x32xf32> to vector<32xf32>
    %352 = vector.shape_cast %351 : vector<32xf32> to vector<1x32xf32>
    %353 = vector.broadcast %352 : vector<1x32xf32> to vector<8x32xf32>
    %354 = arith.subf %350, %353 : vector<8x32xf32>
    %355 = math.exp %354 : vector<8x32xf32>
    %cst_109 = arith.constant dense<0.000000e+00> : vector<32xf32>
    %356 = vector.multi_reduction <add>, %355, %cst_109 [0] : vector<8x32xf32> to vector<32xf32>
    %357 = vector.shape_cast %356 : vector<32xf32> to vector<1x32xf32>
    %358 = vector.broadcast %357 : vector<1x32xf32> to vector<8x32xf32>
    %359 = arith.divf %355, %358 : vector<8x32xf32>
    %360 = tpu.transpose %359, [1, 0] : vector<8x32xf32> -> vector<32x8xf32>
    %361 = arith.truncf %360 : vector<32x8xf32> to vector<32x8xbf16>
    %cst_110 = arith.constant dense<0.000000e+00> : vector<32x16xf32>
    %362 = tpu.matmul %361, %349, %cst_110 {dimension_numbers = #tpu.dot_dimension_numbers<[1], [0], [0], [1], [0, 0, 1, 1], [], []>} : vector<32x8xbf16>, vector<8x16xbf16>, vector<32x16xf32> -> vector<32x16xf32>
    %363 = tpu.concatenate %314, %330, %346, %362 in 1 : vector<32x16xf32>, vector<32x16xf32>, vector<32x16xf32>, vector<32x16xf32> -> vector<32x64xf32>
    %364 = arith.truncf %363 : vector<32x64xf32> to vector<32x64xbf16>
    %cst_111 = arith.constant dense<0.000000e+00> : vector<32x128xf32>
    %365 = tpu.matmul %364, %297, %cst_111 {dimension_numbers = #tpu.dot_dimension_numbers<[1], [0], [0], [1], [0, 0, 1, 1], [], []>} : vector<32x64xbf16>, vector<64x128xbf16>, vector<32x128xf32> -> vector<32x128xf32>
    %366 = vector.broadcast %298 : vector<1x128xf32> to vector<32x128xf32>
    %367 = arith.addf %365, %366 : vector<32x128xf32>
    %368 = arith.addf %4, %367 : vector<32x128xf32>
    %cst_112 = arith.constant dense<0.000000e+00> : vector<32xf32>
    %369 = vector.multi_reduction <add>, %368, %cst_112 [1] : vector<32x128xf32> to vector<32xf32>
    %370 = vector.shape_cast %369 : vector<32xf32> to vector<32x1xf32>
    %cst_113 = arith.constant 1.280000e+02 : f32
    %371 = vector.broadcast %cst_113 : f32 to vector<32x1xf32>
    %372 = arith.divf %370, %371 : vector<32x1xf32>
    %373 = vector.broadcast %372 : vector<32x1xf32> to vector<32x128xf32>
    %374 = arith.subf %368, %373 : vector<32x128xf32>
    %375 = arith.mulf %374, %374 : vector<32x128xf32>
    %cst_114 = arith.constant dense<0.000000e+00> : vector<32xf32>
    %376 = vector.multi_reduction <add>, %375, %cst_114 [1] : vector<32x128xf32> to vector<32xf32>
    %377 = vector.shape_cast %376 : vector<32xf32> to vector<32x1xf32>
    %cst_115 = arith.constant 1.280000e+02 : f32
    %378 = vector.broadcast %cst_115 : f32 to vector<32x1xf32>
    %379 = arith.divf %377, %378 : vector<32x1xf32>
    %cst_116 = arith.constant 9.99999974E-6 : f32
    %380 = vector.broadcast %cst_116 : f32 to vector<32x1xf32>
    %381 = arith.addf %379, %380 : vector<32x1xf32>
    %382 = math.rsqrt %381 : vector<32x1xf32>
    %383 = vector.broadcast %382 : vector<32x1xf32> to vector<32x128xf32>
    %384 = arith.mulf %374, %383 : vector<32x128xf32>
    %385 = vector.extract_strided_slice %0 {offsets = [20, 0], sizes = [1, 128], strides = [1, 1]} : vector<22x256xf32> to vector<1x128xf32>
    %386 = vector.broadcast %385 : vector<1x128xf32> to vector<32x128xf32>
    %387 = arith.mulf %384, %386 : vector<32x128xf32>
    %388 = vector.extract_strided_slice %0 {offsets = [21, 0], sizes = [1, 128], strides = [1, 1]} : vector<22x256xf32> to vector<1x128xf32>
    %389 = vector.broadcast %388 : vector<1x128xf32> to vector<32x128xf32>
    %390 = arith.addf %387, %389 : vector<32x128xf32>
    %c0_117 = arith.constant 0 : index
    %c0_118 = arith.constant 0 : index
    %c0_119 = arith.constant 0 : index
    %391 = vector.load %arg10[%c0_117, %c0_118, %c0_119] : memref<1x8x128xf32, #tpu.memory_space<vmem>>, vector<1x8x128xf32>
    %392 = vector.shape_cast %391 : vector<1x8x128xf32> to vector<8x128xf32>
    %393 = vector.shape_cast %273 : vector<8x128xf32> to vector<1x8x128xf32>
    tpu.vector_store %arg10[%c0_117, %c0_118, %c0_119], %393 {strides = array<i32>} : memref<1x8x128xf32, #tpu.memory_space<vmem>>, vector<1x8x128xf32>,
    %c0_120 = arith.constant 0 : index
    %c0_121 = arith.constant 0 : index
    %c0_122 = arith.constant 0 : index
    %394 = vector.load %arg11[%c0_120, %c0_121, %c0_122] : memref<1x32x128xf32, #tpu.memory_space<vmem>>, vector<1x32x128xf32>
    %395 = vector.shape_cast %394 : vector<1x32x128xf32> to vector<32x128xf32>
    %396 = vector.shape_cast %390 : vector<32x128xf32> to vector<1x32x128xf32>
    tpu.vector_store %arg11[%c0_120, %c0_121, %c0_122], %396 {strides = array<i32>} : memref<1x32x128xf32, #tpu.memory_space<vmem>>, vector<1x32x128xf32>,
    return
  }
  func.func @transform_0(%arg0: i32) -> (i32, i32, i32) {
    %c0_i32 = arith.constant 0 : i32
    %c0_i32_0 = arith.constant 0 : i32
    %c0_i32_1 = arith.constant 0 : i32
    return %arg0, %c0_i32, %c0_i32_0 : i32, i32, i32
  }
  func.func @transform_1(%arg0: i32) -> (i32, i32, i32) {
    %c0_i32 = arith.constant 0 : i32
    %c0_i32_0 = arith.constant 0 : i32
    %c0_i32_1 = arith.constant 0 : i32
    return %arg0, %c0_i32, %c0_i32_0 : i32, i32, i32
  }
  func.func @transform_2(%arg0: i32) -> (i32, i32, i32) {
    %c0_i32 = arith.constant 0 : i32
    %c0_i32_0 = arith.constant 0 : i32
    %c0_i32_1 = arith.constant 0 : i32
    return %arg0, %c0_i32, %c0_i32_0 : i32, i32, i32
  }
  func.func @transform_3(%arg0: i32) -> (i32, i32, i32) {
    %c0_i32 = arith.constant 0 : i32
    %c0_i32_0 = arith.constant 0 : i32
    %c0_i32_1 = arith.constant 0 : i32
    return %arg0, %c0_i32, %c0_i32_0 : i32, i32, i32
  }
  func.func @transform_4(%arg0: i32) -> (i32, i32) {
    %c0_i32 = arith.constant 0 : i32
    %c0_i32_0 = arith.constant 0 : i32
    %c0_i32_1 = arith.constant 0 : i32
    return %c0_i32, %c0_i32_0 : i32, i32
  }
  func.func @transform_5(%arg0: i32) -> (i32, i32) {
    %c0_i32 = arith.constant 0 : i32
    %c0_i32_0 = arith.constant 0 : i32
    %c0_i32_1 = arith.constant 0 : i32
    return %c0_i32, %c0_i32_0 : i32, i32
  }
  func.func @transform_6(%arg0: i32) -> (i32, i32) {
    %c0_i32 = arith.constant 0 : i32
    %c0_i32_0 = arith.constant 0 : i32
    %c0_i32_1 = arith.constant 0 : i32
    return %c0_i32, %c0_i32_0 : i32, i32
  }
  func.func @transform_7(%arg0: i32) -> (i32, i32) {
    %c0_i32 = arith.constant 0 : i32
    %c0_i32_0 = arith.constant 0 : i32
    %c0_i32_1 = arith.constant 0 : i32
    return %c0_i32, %c0_i32_0 : i32, i32
  }
  func.func @transform_8(%arg0: i32) -> (i32, i32) {
    %c0_i32 = arith.constant 0 : i32
    %c0_i32_0 = arith.constant 0 : i32
    %c0_i32_1 = arith.constant 0 : i32
    return %c0_i32, %c0_i32_0 : i32, i32
  }
  func.func @transform_9(%arg0: i32) -> (i32, i32, i32) {
    %c0_i32 = arith.constant 0 : i32
    %c0_i32_0 = arith.constant 0 : i32
    %c0_i32_1 = arith.constant 0 : i32
    return %arg0, %c0_i32, %c0_i32_0 : i32, i32, i32
  }
  func.func @transform_10(%arg0: i32) -> (i32, i32, i32) {
    %c0_i32 = arith.constant 0 : i32
    %c0_i32_0 = arith.constant 0 : i32
    %c0_i32_1 = arith.constant 0 : i32
    return %arg0, %c0_i32, %c0_i32_0 : i32, i32, i32
  }
}

</mosaic_0001>

<llo_original>
// kernel: two_way_attention_block.1
$region0: #{two_way_attention_block.1}
  #allocation0 [shape = 'u32[]', space=smem, size = 0x4, offset = 0x4, fixed_abs, tag = 'smem constant byte address 0x4 - core index']
  #allocation1 [shape = 'u32[144,128]{1,0:T(1,128)}', space=vmem, size = 0x12000, scoped, tag = 'internal scratch']
  %s0 = inlined_call_operand.hbm [shape: f32[2,8,128], index: 0, kind: input, shape index: {}]
  %s1 = inlined_call_operand.hbm [shape: f32[2,32,128], index: 1, kind: input, shape index: {}]
  %s2 = inlined_call_operand.hbm [shape: f32[2,8,128], index: 2, kind: input, shape index: {}]
  %s3 = inlined_call_operand.hbm [shape: f32[2,32,128], index: 3, kind: input, shape index: {}]
  %s4 = inlined_call_operand.vmem [shape: bf16[128,384], index: 4, kind: input, shape index: {}]
  %s5 = inlined_call_operand.vmem [shape: bf16[768,64], index: 5, kind: input, shape index: {}]
  %s6 = inlined_call_operand.vmem [shape: bf16[512,128], index: 6, kind: input, shape index: {}]
  %s7 = inlined_call_operand.vmem [shape: bf16[128,256], index: 7, kind: input, shape index: {}]
  %s8 = inlined_call_operand.hbm [shape: f32[22,256], index: 8, kind: input, shape index: {}]
  %s9 = inlined_call_operand.hbm [shape: f32[2,8,128], index: 9, kind: output, shape index: {0}]
  %s10 = inlined_call_operand.hbm [shape: f32[2,32,128], index: 10, kind: output, shape index: {1}]
  %11 = xla_tuple %s9, %s10
  %s12 = sld [smem:[#allocation0]]
  $region97: #{two_way_attention_block.1} parent=0
    _
  %s14 = ssub.s32 1, %s12
  %s15 = scalar_select 0, %s14, %s12
  $region1: #{two_way_attention_block.1} parent=0
    #allocation2 [shape = 'u8[8192]{0}', space=vmem, size = 0x2000, scoped, tag = 'input window, operand 0']
    #allocation3 [shape = 's32[2]{0}', space=sflag, size = 0x8, scoped, tag = 'scoped memory for two_way_attention_block.1']
    #allocation4 [shape = 's32[2]{0}', space=sflag, size = 0x8, scoped, tag = 'scoped memory for two_way_attention_block.1']
    #allocation5 [shape = 'u8[32768]{0}', space=vmem, size = 0x8000, scoped, tag = 'input window, operand 1']
    #allocation6 [shape = 's32[2]{0}', space=sflag, size = 0x8, scoped, tag = 'scoped memory for two_way_attention_block.1']
    #allocation7 [shape = 'u8[8192]{0}', space=vmem, size = 0x2000, scoped, tag = 'input window, operand 2']
    #allocation8 [shape = 'u8[32768]{0}', space=vmem, size = 0x8000, scoped, tag = 'input window, operand 3']
    #allocation9 [shape = 's32[2]{0}', space=sflag, size = 0x8, scoped, tag = 'scoped memory for two_way_attention_block.1']
    #allocation10 [shape = 'u8[24576]{0}', space=vmem, size = 0x6000, scoped, tag = 'input window, operand 8, single buffered']
    #allocation11 [shape = 'u8[8192]{0}', space=vmem, size = 0x2000, scoped, tag = 'output window, operand 0']
    #allocation12 [shape = 'u8[32768]{0}', space=vmem, size = 0x8000, scoped, tag = 'output window, operand 1']
    #allocation13 [shape = 's32[2]{0}', space=sflag, size = 0x8, scoped, tag = 'scoped memory for two_way_attention_block.1']
    %16 = vsyncpa [#allocation3], 0
    %s17 = scalar_lea.sflag [#allocation3], 1
    %18 = vsyncpa %s17, 0
    %19 = vsyncpa [#allocation6], 0
    %s20 = scalar_lea.sflag [#allocation6], 1
    %21 = vsyncpa %s20, 0
    %22 = vsyncpa [#allocation9], 0
    %s23 = scalar_lea.sflag [#allocation9], 1
    %24 = vsyncpa %s23, 0
    %25 = vsyncpa [#allocation4], 0
    %s26 = scalar_lea.sflag [#allocation4], 1
    %27 = vsyncpa %s26, 0
    %28 = vsyncpa [#allocation13], 0
    %s29 = scalar_lea.sflag [#allocation13], 1
    %30 = vsyncpa %s29, 0
    loop: start=0, step=1, limit=4
    $region2: #{two_way_attention_block.1} parent=1 // loop_pre_header
      _
    $region3: #{two_way_attention_block.1} parent=1 // loop_header
      %s32 = sphi 0, %s36
      %p33 = scmp.ge.s32.totalorder %s32, 4
      %s42 = sphi 0, %s44
      %s45 = sphi 0, %s42
      %s46 = sphi 0, %s45
      %s62 = sphi 0, %s46
      %s68 = sphi 0, %s70
      %s71 = sphi 0, %s68
      %s72 = sphi 0, %s71
      %s88 = sphi 0, %s72
      %s94 = sphi 0, %s96
      %s97 = sphi 0, %s94
      %s98 = sphi 0, %s97
      %s114 = sphi 0, %s98
      %s120 = sphi 0, %s122
      %s123 = sphi 0, %s120
      %s124 = sphi 0, %s123
      %s140 = sphi 0, %s124
      %s144 = sphi 0, %s144
      %s146 = sphi 0, %s144
      %s147 = sphi 0, %s146
      %s161 = sphi 0, %s147
      %s165 = sphi 0, %s165
      %s167 = sphi 0, %s165
      %s168 = sphi 0, %s167
      %s182 = sphi 0, %s168
      %s186 = sphi 0, %s186
      %s188 = sphi 0, %s186
      %s189 = sphi 0, %s188
      %s203 = sphi 0, %s189
      %s207 = sphi 0, %s207
      %s209 = sphi 0, %s207
      %s210 = sphi 0, %s209
      %s224 = sphi 0, %s210
      %s228 = sphi 0, %s228
      %s230 = sphi 0, %s228
      %s231 = sphi 0, %s230
      %s245 = sphi 0, %s231
      %s251 = sphi 0, %s253
      %s254 = sphi 0, %s251
      %s255 = sphi 0, %s254
      %s271 = sphi 0, %s255
      %s277 = sphi 0, %s279
      %s280 = sphi 0, %s277
      %s281 = sphi 0, %s280
      %s297 = sphi 0, %s281
    $region4: #{two_way_attention_block.1} parent=1 // loop_header_branch
      %35 = sbr.rel (%p33) target = $region8
    $region5: #{two_way_attention_block.1} parent=1 // loop_body
      %s37 = ssub.s32 %s32, 1
      %s38 = ssub.s32 %s32, 2
      %s39 = sadd.s32 %s32, 1
      %s40 = ssub.s32 %s32, %s39
      %p41 = scmp.eq.s32.totalorder %s40, 0
      %s43 = sadd.s32 %s42, 1
      %s44 = scalar_select %p41, %s42, %s43
      %p47 = pneg %p41
      %p48 = scmp.eq.s32.totalorder %s32, 1
      %p49 = por %p47, %p48
      %p50 = scmp.ne.s32.totalorder %s42, %s45
      %p51 = scmp.eq.s32.totalorder %s32, 0
      %p52 = por %p50, %p51
      %p53 = scmp.ne.s32.totalorder %s42, %s45
      %p54 = scmp.eq.s32.totalorder %s37, 1
      %p55 = por %p53, %p54
      %p56 = scmp.ne.s32.totalorder %s45, %s46
      %p57 = scmp.eq.s32.totalorder %s37, 0
      %p58 = por %p56, %p57
      %p59 = scmp.ne.s32.totalorder %s45, %s46
      %p60 = scmp.eq.s32.totalorder %s38, 1
      %p61 = por %p59, %p60
      %p63 = scmp.ne.s32.totalorder %s46, %s62
      %p64 = scmp.eq.s32.totalorder %s38, 0
      %p65 = por %p63, %p64
      %s66 = ssub.s32 %s32, %s39
      %p67 = scmp.eq.s32.totalorder %s66, 0
      %s69 = sadd.s32 %s68, 1
      %s70 = scalar_select %p67, %s68, %s69
      %p73 = pneg %p67
      %p74 = scmp.eq.s32.totalorder %s32, 1
      %p75 = por %p73, %p74
      %p76 = scmp.ne.s32.totalorder %s68, %s71
      %p77 = scmp.eq.s32.totalorder %s32, 0
      %p78 = por %p76, %p77
      %p79 = scmp.ne.s32.totalorder %s68, %s71
      %p80 = scmp.eq.s32.totalorder %s37, 1
      %p81 = por %p79, %p80
      %p82 = scmp.ne.s32.totalorder %s71, %s72
      %p83 = scmp.eq.s32.totalorder %s37, 0
      %p84 = por %p82, %p83
      %p85 = scmp.ne.s32.totalorder %s71, %s72
      %p86 = scmp.eq.s32.totalorder %s38, 1
      %p87 = por %p85, %p86
      %p89 = scmp.ne.s32.totalorder %s72, %s88
      %p90 = scmp.eq.s32.totalorder %s38, 0
      %p91 = por %p89, %p90
      %s92 = ssub.s32 %s32, %s39
      %p93 = scmp.eq.s32.totalorder %s92, 0
      %s95 = sadd.s32 %s94, 1
      %s96 = scalar_select %p93, %s94, %s95
      %p99 = pneg %p93
      %p100 = scmp.eq.s32.totalorder %s32, 1
      %p101 = por %p99, %p100
      %p102 = scmp.ne.s32.totalorder %s94, %s97
      %p103 = scmp.eq.s32.totalorder %s32, 0
      %p104 = por %p102, %p103
      %p105 = scmp.ne.s32.totalorder %s94, %s97
      %p106 = scmp.eq.s32.totalorder %s37, 1
      %p107 = por %p105, %p106
      %p108 = scmp.ne.s32.totalorder %s97, %s98
      %p109 = scmp.eq.s32.totalorder %s37, 0
      %p110 = por %p108, %p109
      %p111 = scmp.ne.s32.totalorder %s97, %s98
      %p112 = scmp.eq.s32.totalorder %s38, 1
      %p113 = por %p111, %p112
      %p115 = scmp.ne.s32.totalorder %s98, %s114
      %p116 = scmp.eq.s32.totalorder %s38, 0
      %p117 = por %p115, %p116
      %s118 = ssub.s32 %s32, %s39
      %p119 = scmp.eq.s32.totalorder %s118, 0
      %s121 = sadd.s32 %s120, 1
      %s122 = scalar_select %p119, %s120, %s121
      %p125 = pneg %p119
      %p126 = scmp.eq.s32.totalorder %s32, 1
      %p127 = por %p125, %p126
      %p128 = scmp.ne.s32.totalorder %s120, %s123
      %p129 = scmp.eq.s32.totalorder %s32, 0
      %p130 = por %p128, %p129
      %p131 = scmp.ne.s32.totalorder %s120, %s123
      %p132 = scmp.eq.s32.totalorder %s37, 1
      %p133 = por %p131, %p132
      %p134 = scmp.ne.s32.totalorder %s123, %s124
      %p135 = scmp.eq.s32.totalorder %s37, 0
      %p136 = por %p134, %p135
      %p137 = scmp.ne.s32.totalorder %s123, %s124
      %p138 = scmp.eq.s32.totalorder %s38, 1
      %p139 = por %p137, %p138
      %p141 = scmp.ne.s32.totalorder %s124, %s140
      %p142 = scmp.eq.s32.totalorder %s38, 0
      %p143 = por %p141, %p142
      %s145 = sadd.s32 %s144, 1
      %p148 = scmp.eq.s32.totalorder %s32, 1
      %p149 = scmp.ne.s32.totalorder %s144, %s146
      %p150 = scmp.eq.s32.totalorder %s32, 0
      %p151 = por %p149, %p150
      %p152 = scmp.ne.s32.totalorder %s144, %s146
      %p153 = scmp.eq.s32.totalorder %s37, 1
      %p154 = por %p152, %p153
      %p155 = scmp.ne.s32.totalorder %s146, %s147
      %p156 = scmp.eq.s32.totalorder %s37, 0
      %p157 = por %p155, %p156
      %p158 = scmp.ne.s32.totalorder %s146, %s147
      %p159 = scmp.eq.s32.totalorder %s38, 1
      %p160 = por %p158, %p159
      %p162 = scmp.ne.s32.totalorder %s147, %s161
      %p163 = scmp.eq.s32.totalorder %s38, 0
      %p164 = por %p162, %p163
      %s166 = sadd.s32 %s165, 1
      %p169 = scmp.eq.s32.totalorder %s32, 1
      %p170 = scmp.ne.s32.totalorder %s165, %s167
      %p171 = scmp.eq.s32.totalorder %s32, 0
      %p172 = por %p170, %p171
      %p173 = scmp.ne.s32.totalorder %s165, %s167
      %p174 = scmp.eq.s32.totalorder %s37, 1
      %p175 = por %p173, %p174
      %p176 = scmp.ne.s32.totalorder %s167, %s168
      %p177 = scmp.eq.s32.totalorder %s37, 0
      %p178 = por %p176, %p177
      %p179 = scmp.ne.s32.totalorder %s167, %s168
      %p180 = scmp.eq.s32.totalorder %s38, 1
      %p181 = por %p179, %p180
      %p183 = scmp.ne.s32.totalorder %s168, %s182
      %p184 = scmp.eq.s32.totalorder %s38, 0
      %p185 = por %p183, %p184
      %s187 = sadd.s32 %s186, 1
      %p190 = scmp.eq.s32.totalorder %s32, 1
      %p191 = scmp.ne.s32.totalorder %s186, %s188
      %p192 = scmp.eq.s32.totalorder %s32, 0
      %p193 = por %p191, %p192
      %p194 = scmp.ne.s32.totalorder %s186, %s188
      %p195 = scmp.eq.s32.totalorder %s37, 1
      %p196 = por %p194, %p195
      %p197 = scmp.ne.s32.totalorder %s188, %s189
      %p198 = scmp.eq.s32.totalorder %s37, 0
      %p199 = por %p197, %p198
      %p200 = scmp.ne.s32.totalorder %s188, %s189
      %p201 = scmp.eq.s32.totalorder %s38, 1
      %p202 = por %p200, %p201
      %p204 = scmp.ne.s32.totalorder %s189, %s203
      %p205 = scmp.eq.s32.totalorder %s38, 0
      %p206 = por %p204, %p205
      %s208 = sadd.s32 %s207, 1
      %p211 = scmp.eq.s32.totalorder %s32, 1
      %p212 = scmp.ne.s32.totalorder %s207, %s209
      %p213 = scmp.eq.s32.totalorder %s32, 0
      %p214 = por %p212, %p213
      %p215 = scmp.ne.s32.totalorder %s207, %s209
      %p216 = scmp.eq.s32.totalorder %s37, 1
      %p217 = por %p215, %p216
      %p218 = scmp.ne.s32.totalorder %s209, %s210
      %p219 = scmp.eq.s32.totalorder %s37, 0
      %p220 = por %p218, %p219
      %p221 = scmp.ne.s32.totalorder %s209, %s210
      %p222 = scmp.eq.s32.totalorder %s38, 1
      %p223 = por %p221, %p222
      %p225 = scmp.ne.s32.totalorder %s210, %s224
      %p226 = scmp.eq.s32.totalorder %s38, 0
      %p227 = por %p225, %p226
      %s229 = sadd.s32 %s228, 1
      %p232 = scmp.eq.s32.totalorder %s32, 1
      %p233 = scmp.ne.s32.totalorder %s228, %s230
      %p234 = scmp.eq.s32.totalorder %s32, 0
      %p235 = por %p233, %p234
      %p236 = scmp.ne.s32.totalorder %s228, %s230
      %p237 = scmp.eq.s32.totalorder %s37, 1
      %p238 = por %p236, %p237
      %p239 = scmp.ne.s32.totalorder %s230, %s231
      %p240 = scmp.eq.s32.totalorder %s37, 0
      %p241 = por %p239, %p240
      %p242 = scmp.ne.s32.totalorder %s230, %s231
      %p243 = scmp.eq.s32.totalorder %s38, 1
      %p244 = por %p242, %p243
      %p246 = scmp.ne.s32.totalorder %s231, %s245
      %p247 = scmp.eq.s32.totalorder %s38, 0
      %p248 = por %p246, %p247
      %s249 = ssub.s32 %s32, %s39
      %p250 = scmp.eq.s32.totalorder %s249, 0
      %s252 = sadd.s32 %s251, 1
      %s253 = scalar_select %p250, %s251, %s252
      %p256 = pneg %p250
      %p257 = scmp.eq.s32.totalorder %s32, 1
      %p258 = por %p256, %p257
      %p259 = scmp.ne.s32.totalorder %s251, %s254
      %p260 = scmp.eq.s32.totalorder %s32, 0
      %p261 = por %p259, %p260
      %p262 = scmp.ne.s32.totalorder %s251, %s254
      %p263 = scmp.eq.s32.totalorder %s37, 1
      %p264 = por %p262, %p263
      %p265 = scmp.ne.s32.totalorder %s254, %s255
      %p266 = scmp.eq.s32.totalorder %s37, 0
      %p267 = por %p265, %p266
      %p268 = scmp.ne.s32.totalorder %s254, %s255
      %p269 = scmp.eq.s32.totalorder %s38, 1
      %p270 = por %p268, %p269
      %p272 = scmp.ne.s32.totalorder %s255, %s271
      %p273 = scmp.eq.s32.totalorder %s38, 0
      %p274 = por %p272, %p273
      %s275 = ssub.s32 %s32, %s39
      %p276 = scmp.eq.s32.totalorder %s275, 0
      %s278 = sadd.s32 %s277, 1
      %s279 = scalar_select %p276, %s277, %s278
      %p282 = pneg %p276
      %p283 = scmp.eq.s32.totalorder %s32, 1
      %p284 = por %p282, %p283
      %p285 = scmp.ne.s32.totalorder %s277, %s280
      %p286 = scmp.eq.s32.totalorder %s32, 0
      %p287 = por %p285, %p286
      %p288 = scmp.ne.s32.totalorder %s277, %s280
      %p289 = scmp.eq.s32.totalorder %s37, 1
      %p290 = por %p288, %p289
      %p291 = scmp.ne.s32.totalorder %s280, %s281
      %p292 = scmp.eq.s32.totalorder %s37, 0
      %p293 = por %p291, %p292
      %p294 = scmp.ne.s32.totalorder %s280, %s281
      %p295 = scmp.eq.s32.totalorder %s38, 1
      %p296 = por %p294, %p295
      %p298 = scmp.ne.s32.totalorder %s281, %s297
      %p299 = scmp.eq.s32.totalorder %s38, 0
      %p300 = por %p298, %p299
      %p301 = scmp.le.s32.totalorder 1, %s32
      %p302 = scmp.lt.s32.totalorder %s32, 3
      %p303 = pnand %p301, %p302
      %p304 = pneg %p303
      // Predicated region
      $region9: #{two_way_attention_block.1} parent=5 // pred_check
        _
      $region10: #{two_way_attention_block.1} parent=5 // pred_check_branch
        %306 = sbr.rel (%p303) target = $region12
      $region11: #{two_way_attention_block.1} parent=5 // pred_region
        %s307 = ssub.s32 %s32, 1
        // Predicated region
        $region13: #{two_way_attention_block.1} parent=11 // pred_check
          %p308 = pneg %p157
        $region14: #{two_way_attention_block.1} parent=11 // pred_check_branch
          %310 = sbr.rel (%p308) target = $region16
        $region15: #{two_way_attention_block.1} parent=11 // pred_region
          _
        $region16: #{two_way_attention_block.1} parent=11 // pred_fallthru
          _
        // Predicated region
        $region17: #{two_way_attention_block.1} parent=11 // pred_check
          %p311 = pneg %p178
        $region18: #{two_way_attention_block.1} parent=11 // pred_check_branch
          %313 = sbr.rel (%p311) target = $region20
        $region19: #{two_way_attention_block.1} parent=11 // pred_region
          _
        $region20: #{two_way_attention_block.1} parent=11 // pred_fallthru
          _
        // Predicated region
        $region21: #{two_way_attention_block.1} parent=11 // pred_check
          %p314 = pneg %p199
        $region22: #{two_way_attention_block.1} parent=11 // pred_check_branch
          %316 = sbr.rel (%p314) target = $region24
        $region23: #{two_way_attention_block.1} parent=11 // pred_region
          _
        $region24: #{two_way_attention_block.1} parent=11 // pred_fallthru
          _
        // Predicated region
        $region25: #{two_way_attention_block.1} parent=11 // pred_check
          %p317 = pneg %p220
        $region26: #{two_way_attention_block.1} parent=11 // pred_check_branch
          %319 = sbr.rel (%p317) target = $region28
        $region27: #{two_way_attention_block.1} parent=11 // pred_region
          _
        $region28: #{two_way_attention_block.1} parent=11 // pred_fallthru
          _
        // Predicated region
        $region29: #{two_way_attention_block.1} parent=11 // pred_check
          %p320 = pneg %p241
        $region30: #{two_way_attention_block.1} parent=11 // pred_check_branch
          %322 = sbr.rel (%p320) target = $region32
        $region31: #{two_way_attention_block.1} parent=11 // pred_region
          %s324 = ssub.s32 768, 768
          %325 = vsyncadd [#allocation9], %s324
          %s326 = sshll.u32 [#allocation10], 4
          %s327 = int_to_ptr.vmem [resolvable:$true] %s326
          %332 = dma.hbm_to_vmem [thread:$0]  %s8, 768, %s327, [#allocation9], 256, 256, 16
        $region32: #{two_way_attention_block.1} parent=11 // pred_fallthru
          _
      $region12: #{two_way_attention_block.1} parent=5 // pred_fallthru
        _
      %p333 = scmp.lt.s32.totalorder %s32, 2
      // Predicated region
      $region33: #{two_way_attention_block.1} parent=5 // pred_check
        %p334 = pneg %p333
      $region34: #{two_way_attention_block.1} parent=5 // pred_check_branch
        %336 = sbr.rel (%p334) target = $region36
      $region35: #{two_way_attention_block.1} parent=5 // pred_region
        // Predicated region
        $region37: #{two_way_attention_block.1} parent=35 // pred_check
          %p337 = pneg %p52
        $region38: #{two_way_attention_block.1} parent=35 // pred_check_branch
          %339 = sbr.rel (%p337) target = $region40
        $region39: #{two_way_attention_block.1} parent=35 // pred_region
          %s340 = sand.u32 %s42, 1
          %s341 = scalar_lea.sflag [#allocation3], %s340
          %s342 = sand.u32 %s42, 1
          %s343 = smul.addr %s342, 8
          %s344 = scalar_lea.vmem [#allocation2], %s343
          %s346 = ssub.s32 128, 128
          %347 = vsyncadd %s341, %s346
          %s348 = smul.addr %s32, 128
          %s349 = scalar_lea.hbm %s0, %s348
          %s351 = sshll.u32 %s344, 4
          %s352 = int_to_ptr.vmem [resolvable:$true] %s351
          %354 = dma.hbm_to_vmem [thread:$0]  %s349, 128, %s352, %s341
        $region40: #{two_way_attention_block.1} parent=35 // pred_fallthru
          _
        // Predicated region
        $region41: #{two_way_attention_block.1} parent=35 // pred_check
          %p355 = pneg %p78
        $region42: #{two_way_attention_block.1} parent=35 // pred_check_branch
          %357 = sbr.rel (%p355) target = $region44
        $region43: #{two_way_attention_block.1} parent=35 // pred_region
          %s358 = sand.u32 %s32, 1
          %s359 = scalar_lea.sflag [#allocation6], %s358
          %s360 = sand.u32 %s68, 1
          %s361 = smul.addr %s360, 32
          %s362 = scalar_lea.vmem [#allocation5], %s361
          %s364 = ssub.s32 512, 512
          %365 = vsyncadd %s359, %s364
          %s366 = smul.addr %s32, 4
          %s367 = smul.addr %s366, 128
          %s368 = scalar_lea.hbm %s1, %s367
          %s369 = sshll.u32 %s362, 4
          %s370 = int_to_ptr.vmem [resolvable:$true] %s369
          %375 = dma.hbm_to_vmem [thread:$0]  %s368, 512, %s370, %s359, 128, 128, 8
        $region44: #{two_way_attention_block.1} parent=35 // pred_fallthru
          _
        // Predicated region
        $region45: #{two_way_attention_block.1} parent=35 // pred_check
          %p376 = pneg %p104
        $region46: #{two_way_attention_block.1} parent=35 // pred_check_branch
          %378 = sbr.rel (%p376) target = $region48
        $region47: #{two_way_attention_block.1} parent=35 // pred_region
          %s379 = sand.u32 %s32, 1
          %s380 = scalar_lea.sflag [#allocation6], %s379
          %s381 = sand.u32 %s94, 1
          %s382 = smul.addr %s381, 8
          %s383 = scalar_lea.vmem [#allocation7], %s382
          %s385 = ssub.s32 128, 128
          %386 = vsyncadd %s380, %s385
          %s387 = smul.addr %s32, 128
          %s388 = scalar_lea.hbm %s2, %s387
          %s390 = sshll.u32 %s383, 4
          %s391 = int_to_ptr.vmem [resolvable:$true] %s390
          %393 = dma.hbm_to_vmem [thread:$0]  %s388, 128, %s391, %s380
        $region48: #{two_way_attention_block.1} parent=35 // pred_fallthru
          _
        // Predicated region
        $region49: #{two_way_attention_block.1} parent=35 // pred_check
          %p394 = pneg %p130
        $region50: #{two_way_attention_block.1} parent=35 // pred_check_branch
          %396 = sbr.rel (%p394) target = $region52
        $region51: #{two_way_attention_block.1} parent=35 // pred_region
          %s397 = sand.u32 %s32, 1
          %s398 = scalar_lea.sflag [#allocation9], %s397
          %s399 = sand.u32 %s120, 1
          %s400 = smul.addr %s399, 32
          %s401 = scalar_lea.vmem [#allocation8], %s400
          %s403 = ssub.s32 512, 512
          %404 = vsyncadd %s398, %s403
          %s405 = smul.addr %s32, 4
          %s406 = smul.addr %s405, 128
          %s407 = scalar_lea.hbm %s3, %s406
          %s408 = sshll.u32 %s401, 4
          %s409 = int_to_ptr.vmem [resolvable:$true] %s408
          %414 = dma.hbm_to_vmem [thread:$0]  %s407, 512, %s409, %s398, 128, 128, 8
        $region52: #{two_way_attention_block.1} parent=35 // pred_fallthru
          _
      $region36: #{two_way_attention_block.1} parent=5 // pred_fallthru
        _
      %p415 = scmp.le.s32.totalorder 1, %s32
      %p416 = scmp.lt.s32.totalorder %s32, 3
      %p417 = pnand %p415, %p416
      %p418 = pneg %p417
      // Predicated region
      $region53: #{two_way_attention_block.1} parent=5 // pred_check
        _
      $region54: #{two_way_attention_block.1} parent=5 // pred_check_branch
        %420 = sbr.rel (%p417) target = $region56
      $region55: #{two_way_attention_block.1} parent=5 // pred_region
        %s421 = ssub.s32 %s32, 1
        %s422 = sand.u32 %s45, 1
        %s423 = scalar_lea.sflag [#allocation3], %s422
        %s424 = sand.u32 %s45, 1
        %s425 = smul.addr %s424, 8
        %s426 = scalar_lea.vmem [#allocation2], %s425
        // Predicated region
        $region57: #{two_way_attention_block.1} parent=55 // pred_check
          %p427 = pneg %p58
        $region58: #{two_way_attention_block.1} parent=55 // pred_check_branch
          %429 = sbr.rel (%p427) target = $region60
        $region59: #{two_way_attention_block.1} parent=55 // pred_region
          %430 = dma.done %s423, 128
        $region60: #{two_way_attention_block.1} parent=55 // pred_fallthru
          _
        %s431 = sand.u32 %s37, 1
        %s432 = scalar_lea.sflag [#allocation6], %s431
        %s433 = sand.u32 %s71, 1
        %s434 = smul.addr %s433, 32
        %s435 = scalar_lea.vmem [#allocation5], %s434
        // Predicated region
        $region61: #{two_way_attention_block.1} parent=55 // pred_check
          %p436 = pneg %p84
        $region62: #{two_way_attention_block.1} parent=55 // pred_check_branch
          %438 = sbr.rel (%p436) target = $region64
        $region63: #{two_way_attention_block.1} parent=55 // pred_region
          %439 = dma.done %s432, 512
        $region64: #{two_way_attention_block.1} parent=55 // pred_fallthru
          _
        %s440 = sand.u32 %s37, 1
        %s441 = scalar_lea.sflag [#allocation6], %s440
        %s442 = sand.u32 %s97, 1
        %s443 = smul.addr %s442, 8
        %s444 = scalar_lea.vmem [#allocation7], %s443
        // Predicated region
        $region65: #{two_way_attention_block.1} parent=55 // pred_check
          %p445 = pneg %p110
        $region66: #{two_way_attention_block.1} parent=55 // pred_check_branch
          %447 = sbr.rel (%p445) target = $region68
        $region67: #{two_way_attention_block.1} parent=55 // pred_region
          %448 = dma.done %s441, 128
        $region68: #{two_way_attention_block.1} parent=55 // pred_fallthru
          _
        %s449 = sand.u32 %s37, 1
        %s450 = scalar_lea.sflag [#allocation9], %s449
        %s451 = sand.u32 %s123, 1
        %s452 = smul.addr %s451, 32
        %s453 = scalar_lea.vmem [#allocation8], %s452
        // Predicated region
        $region69: #{two_way_attention_block.1} parent=55 // pred_check
          %p454 = pneg %p136
        $region70: #{two_way_attention_block.1} parent=55 // pred_check_branch
          %456 = sbr.rel (%p454) target = $region72
        $region71: #{two_way_attention_block.1} parent=55 // pred_region
          %457 = dma.done %s450, 512
        $region72: #{two_way_attention_block.1} parent=55 // pred_fallthru
          _
        // Predicated region
        $region73: #{two_way_attention_block.1} parent=55 // pred_check
          %p458 = pneg %p241
        $region74: #{two_way_attention_block.1} parent=55 // pred_check_branch
          %460 = sbr.rel (%p458) target = $region76
        $region75: #{two_way_attention_block.1} parent=55 // pred_region
          %461 = dma.done [#allocation9], 768
        $region76: #{two_way_attention_block.1} parent=55 // pred_fallthru
          _
        %s462 = sand.u32 %s45, 1
        %s463 = scalar_lea.sflag [#allocation3], %s462
        %s464 = sand.u32 %s45, 1
        %s465 = smul.addr %s464, 8
        %s466 = scalar_lea.vmem [#allocation2], %s465
        %p467 = pneg %p58
        %p468 = pneg %p55
        %s469 = sand.u32 %s37, 1
        %s470 = scalar_lea.sflag [#allocation6], %s469
        %s471 = sand.u32 %s71, 1
        %s472 = smul.addr %s471, 32
        %s473 = scalar_lea.vmem [#allocation5], %s472
        %p474 = pneg %p84
        %p475 = pneg %p81
        %s476 = sand.u32 %s37, 1
        %s477 = scalar_lea.sflag [#allocation6], %s476
        %s478 = sand.u32 %s97, 1
        %s479 = smul.addr %s478, 8
        %s480 = scalar_lea.vmem [#allocation7], %s479
        %p481 = pneg %p110
        %p482 = pneg %p107
        %s483 = sand.u32 %s37, 1
        %s484 = scalar_lea.sflag [#allocation9], %s483
        %s485 = sand.u32 %s123, 1
        %s486 = smul.addr %s485, 32
        %s487 = scalar_lea.vmem [#allocation8], %s486
        %p488 = pneg %p136
        %p489 = pneg %p133
        %p490 = pneg %p157
        %p491 = pneg %p154
        %p492 = pneg %p178
        %p493 = pneg %p175
        %p494 = pneg %p199
        %p495 = pneg %p196
        %p496 = pneg %p220
        %p497 = pneg %p217
        %p498 = pneg %p241
        %p499 = pneg %p238
        %p500 = pneg %p267
        %p501 = pneg %p264
        %s502 = sand.u32 %s254, 1
        %s503 = scalar_lea.sflag [#allocation4], %s502
        %s504 = sand.u32 %s254, 1
        %s505 = smul.addr %s504, 8
        %s506 = scalar_lea.vmem [#allocation11], %s505
        %p507 = pneg %p293
        %p508 = pneg %p290
        %s509 = sand.u32 %s280, 1
        %s510 = scalar_lea.sflag [#allocation13], %s509
        %s511 = sand.u32 %s280, 1
        %s512 = smul.addr %s511, 32
        %s513 = scalar_lea.vmem [#allocation12], %s512
        %v515 = vld [vmem:[#allocation10] sm:$0xff]
        %v516 = vld [vmem:[#allocation10 + $0x10] sm:$0xff]
        %v517 = vld [vmem:[#allocation10 + $0x18] sm:$0xff]
        %v518 = vld [vmem:[#allocation10 + $0x20] sm:$0x3f]
        %v519 = vld [vmem:[%s426] sm:$0xff]
        %v520 = vld [vmem:[%s435] sm:$0xff]
        %v521 = vld [vmem:[%s435 + $0x8] sm:$0xff]
        %v522 = vld [vmem:[%s435 + $0x10] sm:$0xff]
        %v523 = vld [vmem:[%s435 + $0x18] sm:$0xff]
        %v524 = vld [vmem:[%s444] sm:$0xff]
        %v525 = vld [vmem:[%s453] sm:$0xff]
        %v526 = vld [vmem:[%s453 + $0x8] sm:$0xff]
        %v527 = vld [vmem:[%s453 + $0x10] sm:$0xff]
        %v528 = vld [vmem:[%s453 + $0x18] sm:$0xff]
        %v529 = vld [vmem:[%s6] sm:$0xf]
        %v530 = vld [vmem:[%s6 + $0x4] sm:$0xf]
        %v531 = vld [vmem:[%s6 + $0x8] sm:$0xf]
        %v532 = vld [vmem:[%s6 + $0xc] sm:$0xf]
        %v533 = vld [vmem:[%s6 + $0x10] sm:$0xf]
        %v534 = vld [vmem:[%s6 + $0x14] sm:$0xf]
        %v535 = vld [vmem:[%s6 + $0x18] sm:$0xf]
        %v536 = vld [vmem:[%s6 + $0x1c] sm:$0xf]
        %v537 = vld [vmem:[%s6 + $0x20] sm:$0xf]
        %v538 = vld [vmem:[%s6 + $0x24] sm:$0xf]
        %v539 = vld [vmem:[%s6 + $0x28] sm:$0xf]
        %v540 = vld [vmem:[%s6 + $0x2c] sm:$0xf]
        %v541 = vld [vmem:[%s6 + $0x30] sm:$0xf]
        %v542 = vld [vmem:[%s6 + $0x34] sm:$0xf]
        %v543 = vld [vmem:[%s6 + $0x38] sm:$0xf]
        %v544 = vld [vmem:[%s6 + $0x3c] sm:$0xf]
        %v545 = vadd.f32 %v519, %v524
        %v546 = vpack.c.bf16 %v545, %v545
        %v547 = vld [vmem:[%s4] sm:$0xff]
        %v548 = vld [vmem:[%s4 + $0xc] sm:$0xff]
        %v549 = vld [vmem:[%s4 + $0x18] sm:$0xff]
        %v550 = vld [vmem:[%s4 + $0x24] sm:$0xff]
        %v551 = vld [vmem:[%s4 + $0x30] sm:$0xff]
        %v552 = vld [vmem:[%s4 + $0x3c] sm:$0xff]
        %v553 = vld [vmem:[%s4 + $0x48] sm:$0xff]
        %v554 = vld [vmem:[%s4 + $0x54] sm:$0xff]
        %v555 = vld [vmem:[%s4 + $0x60] sm:$0xff]
        %v556 = vld [vmem:[%s4 + $0x6c] sm:$0xff]
        %v557 = vld [vmem:[%s4 + $0x78] sm:$0xff]
        %v558 = vld [vmem:[%s4 + $0x84] sm:$0xff]
        %v559 = vld [vmem:[%s4 + $0x90] sm:$0xff]
        %v560 = vld [vmem:[%s4 + $0x9c] sm:$0xff]
        %v561 = vld [vmem:[%s4 + $0xa8] sm:$0xff]
        %v562 = vld [vmem:[%s4 + $0xb4] sm:$0xff]
        %v579 = vunpack.c.l.b16 %v547
        %v580 = vunpack.c.h.b16 %v547
        %v581 = vunpack.c.l.b16 %v548
        %v582 = vunpack.c.h.b16 %v548
        %v583 = vunpack.c.l.b16 %v549
        %v584 = vunpack.c.h.b16 %v549
        %v585 = vunpack.c.l.b16 %v550
        %v586 = vunpack.c.h.b16 %v550
        %v587 = vunpack.c.l.b16 %v551
        %v588 = vunpack.c.h.b16 %v551
        %v589 = vunpack.c.l.b16 %v552
        %v590 = vunpack.c.h.b16 %v552
        %v591 = vunpack.c.l.b16 %v553
        %v592 = vunpack.c.h.b16 %v553
        %v593 = vunpack.c.l.b16 %v554
        %v594 = vunpack.c.h.b16 %v554
        %v595 = vunpack.c.l.b16 %v555
        %v596 = vunpack.c.h.b16 %v555
        %v597 = vunpack.c.l.b16 %v556
        %v598 = vunpack.c.h.b16 %v556
        %v599 = vunpack.c.l.b16 %v557
        %v600 = vunpack.c.h.b16 %v557
        %v601 = vunpack.c.l.b16 %v558
        %v602 = vunpack.c.h.b16 %v558
        %v603 = vunpack.c.l.b16 %v559
        %v604 = vunpack.c.h.b16 %v559
        %v605 = vunpack.c.l.b16 %v560
        %v606 = vunpack.c.h.b16 %v560
        %v607 = vunpack.c.l.b16 %v561
        %v608 = vunpack.c.h.b16 %v561
        %v609 = vunpack.c.l.b16 %v562
        %v610 = vunpack.c.h.b16 %v562
        %v611 = vpack.c.b16 %v581, %v579
        %v612 = vpack.c.b16 %v582, %v580
        %v613 = vpack.c.b16 %v585, %v583
        %v614 = vpack.c.b16 %v586, %v584
        %v615 = vpack.c.b16 %v589, %v587
        %v616 = vpack.c.b16 %v590, %v588
        %v617 = vpack.c.b16 %v593, %v591
        %v618 = vpack.c.b16 %v594, %v592
        %v619 = vpack.c.b16 %v597, %v595
        %v620 = vpack.c.b16 %v598, %v596
        %v621 = vpack.c.b16 %v601, %v599
        %v622 = vpack.c.b16 %v602, %v600
        %v623 = vpack.c.b16 %v605, %v603
        %v624 = vpack.c.b16 %v606, %v604
        %v625 = vpack.c.b16 %v609, %v607
        %v626 = vpack.c.b16 %v610, %v608
        %643 = vmatprep.subr.bf16.mxu0 %v626
        %644 = vmatpush1.bf16.msra.mxu0 %v625
        %645 = vmatprep.subr.bf16.mxu0 %v624
        %646 = vmatpush1.bf16.msra.mxu0 %v623
        %647 = vmatprep.subr.bf16.mxu0 %v622
        %648 = vmatpush1.bf16.msra.mxu0 %v621
        %649 = vmatprep.subr.bf16.mxu0 %v620
        %650 = vmatpush1.bf16.msra.mxu0 %v619
        %651 = vmatprep.subr.bf16.mxu0 %v618
        %652 = vmatpush1.bf16.msra.mxu0 %v617
        %653 = vmatprep.subr.bf16.mxu0 %v616
        %654 = vmatpush1.bf16.msra.mxu0 %v615
        %655 = vmatprep.subr.bf16.mxu0 %v614
        %656 = vmatpush1.bf16.msra.mxu0 %v613
        %657 = vmatprep.subr.bf16.mxu0 %v612
        %658 = vmatpush1.bf16.msra.mxu0 %v611
        %659 = vmatprep.subr.bf16.mxu0 0
        %660 = vmatpush2.bf16.msra.mxu0 0
        %661 = vmatprep.subr.bf16.mxu0 0
        %662 = vmatpush2.bf16.msra.mxu0 0
        %663 = vmatprep.subr.bf16.mxu0 0
        %664 = vmatpush2.bf16.msra.mxu0 0
        %665 = vmatprep.subr.bf16.mxu0 0
        %666 = vmatpush2.bf16.msra.mxu0 0
        %667 = vmatprep.subr.bf16.mxu0 0
        %668 = vmatpush2.bf16.msra.mxu0 0
        %669 = vmatprep.subr.bf16.mxu0 0
        %670 = vmatpush2.bf16.msra.mxu0 0
        %671 = vmatprep.subr.bf16.mxu0 0
        %672 = vmatpush2.bf16.msra.mxu0 0
        %673 = vmatprep.subr.bf16.mxu0 0
        %674 = vmatpush2.bf16.msra.mxu0 0
        %675 = vmatprep.mubr.bf16.mxu0 0
        %676 = vmatmul.mubr.bf16.gmra.mxu0 %v546
        %v677 = vpop.f32.mrf.mxu0
        %v678 = vadd.f32 0.0, %v677
        %v679 = vpop.f32.mrf.mxu0
        %v680 = vadd.f32 0.0, %v679
        %v681 = vpop.f32.mrf.mxu0
        %v682 = vpop.f32.mrf.mxu0
        %683 = vdwg.mxu0
        %v684 = vlaneseq
        %v685 = vshrl.u32 %v684, 7
        %v686 = vsub.s32 0, %v685
        %v687 = vrot.slane %v515, %v686
        %v688 = vadd.f32 %v678, %v687
        %v689 = vmul.f32 %v688, 0.17677669
        %v690 = vpack.c.bf16 %v689, %v689
        %v691 = vlaneseq
        %v692 = vshrl.u32 %v691, 7
        %v693 = vsub.s32 1, %v692
        %v694 = vrot.slane %v515, %v693
        %v695 = vadd.f32 %v680, %v694
        %v696 = vpack.c.bf16 %v695, %v695
        %v697 = vpack.c.bf16 %v519, %v519
        %v698 = vld [vmem:[%s4 + $0x8] sm:$0xf]
        %v699 = vld [vmem:[%s4 + $0x14] sm:$0xf]
        %v700 = vld [vmem:[%s4 + $0x20] sm:$0xf]
        %v701 = vld [vmem:[%s4 + $0x2c] sm:$0xf]
        %v702 = vld [vmem:[%s4 + $0x38] sm:$0xf]
        %v703 = vld [vmem:[%s4 + $0x44] sm:$0xf]
        %v704 = vld [vmem:[%s4 + $0x50] sm:$0xf]
        %v705 = vld [vmem:[%s4 + $0x5c] sm:$0xf]
        %v706 = vld [vmem:[%s4 + $0x68] sm:$0xf]
        %v707 = vld [vmem:[%s4 + $0x74] sm:$0xf]
        %v708 = vld [vmem:[%s4 + $0x80] sm:$0xf]
        %v709 = vld [vmem:[%s4 + $0x8c] sm:$0xf]
        %v710 = vld [vmem:[%s4 + $0x98] sm:$0xf]
        %v711 = vld [vmem:[%s4 + $0xa4] sm:$0xf]
        %v712 = vld [vmem:[%s4 + $0xb0] sm:$0xf]
        %v713 = vld [vmem:[%s4 + $0xbc] sm:$0xf]
        %v714 = vlaneseq
        %v715 = vshrl.u32 %v714, 7
        %v716 = vsub.s32 2, %v715
        %v717 = vrot.slane %v515, %v716
        %v734 = vunpack.c.l.b16 %v698
        %v735 = vunpack.c.l.b16 %v699
        %v736 = vunpack.c.l.b16 %v700
        %v737 = vunpack.c.l.b16 %v701
        %v738 = vunpack.c.l.b16 %v702
        %v739 = vunpack.c.l.b16 %v703
        %v740 = vunpack.c.l.b16 %v704
        %v741 = vunpack.c.l.b16 %v705
        %v742 = vunpack.c.l.b16 %v706
        %v743 = vunpack.c.l.b16 %v707
        %v744 = vunpack.c.l.b16 %v708
        %v745 = vunpack.c.l.b16 %v709
        %v746 = vunpack.c.l.b16 %v710
        %v747 = vunpack.c.l.b16 %v711
        %v748 = vunpack.c.l.b16 %v712
        %v749 = vunpack.c.l.b16 %v713
        %v750 = vpack.c.b16 %v735, %v734
        %v751 = vpack.c.b16 %v737, %v736
        %v752 = vpack.c.b16 %v739, %v738
        %v753 = vpack.c.b16 %v741, %v740
        %v754 = vpack.c.b16 %v743, %v742
        %v755 = vpack.c.b16 %v745, %v744
        %v756 = vpack.c.b16 %v747, %v746
        %v757 = vpack.c.b16 %v749, %v748
        %766 = vmatprep.subr.bf16.mxu0 0
        %767 = vmatpush1.bf16.msra.mxu0 %v757
        %768 = vmatprep.subr.bf16.mxu0 0
        %769 = vmatpush1.bf16.msra.mxu0 %v756
        %770 = vmatprep.subr.bf16.mxu0 0
        %771 = vmatpush1.bf16.msra.mxu0 %v755
        %772 = vmatprep.subr.bf16.mxu0 0
        %773 = vmatpush1.bf16.msra.mxu0 %v754
        %774 = vmatprep.subr.bf16.mxu0 0
        %775 = vmatpush1.bf16.msra.mxu0 %v753
        %776 = vmatprep.subr.bf16.mxu0 0
        %777 = vmatpush1.bf16.msra.mxu0 %v752
        %778 = vmatprep.subr.bf16.mxu0 0
        %779 = vmatpush1.bf16.msra.mxu0 %v751
        %780 = vmatprep.subr.bf16.mxu0 0
        %781 = vmatpush1.bf16.msra.mxu0 %v750
        %782 = vmatprep.subr.bf16.mxu0 0
        %783 = vmatpush2.bf16.msra.mxu0 0
        %784 = vmatprep.subr.bf16.mxu0 0
        %785 = vmatpush2.bf16.msra.mxu0 0
        %786 = vmatprep.subr.bf16.mxu0 0
        %787 = vmatpush2.bf16.msra.mxu0 0
        %788 = vmatprep.subr.bf16.mxu0 0
        %789 = vmatpush2.bf16.msra.mxu0 0
        %790 = vmatprep.subr.bf16.mxu0 0
        %791 = vmatpush2.bf16.msra.mxu0 0
        %792 = vmatprep.subr.bf16.mxu0 0
        %793 = vmatpush2.bf16.msra.mxu0 0
        %794 = vmatprep.subr.bf16.mxu0 0
        %795 = vmatpush2.bf16.msra.mxu0 0
        %796 = vmatprep.subr.bf16.mxu0 0
        %797 = vmatpush2.bf16.msra.mxu0 0
        %798 = vmatprep.mubr.bf16.mxu0 0
        %799 = vmatmul.mubr.bf16.gmra.mxu0 %v697
        %v800 = vpop.f32.mrf.mxu0
        %v801 = vadd.f32 %v717, %v800
        %v802 = vpop.f32.mrf.mxu0
        %v803 = vpop.f32.mrf.mxu0
        %v804 = vpop.f32.mrf.mxu0
        %805 = vdwg.mxu0
        %v806 = vpack.c.bf16 %v801, %v801
        %vm807 = vcmask 261120
        %v809 = vsel %vm807, %v690, 0
        %v812 = vsel %vm807, %v696, 0
        %814 = vmatprep.subr.bf16.mxu0 0
        %815 = vmatpush1.bf16.xpose.msra.mxu0 0
        %816 = vmatprep.subr.bf16.mxu0 0
        %817 = vmatpush1.bf16.xpose.msra.mxu0 0
        %818 = vmatprep.subr.bf16.mxu0 0
        %819 = vmatpush1.bf16.xpose.msra.mxu0 0
        %820 = vmatprep.subr.bf16.mxu0 0
        %821 = vmatpush1.bf16.xpose.msra.mxu0 0
        %822 = vmatprep.subr.bf16.mxu0 0
        %823 = vmatpush1.bf16.xpose.msra.mxu0 0
        %824 = vmatprep.subr.bf16.mxu0 0
        %825 = vmatpush1.bf16.xpose.msra.mxu0 0
        %826 = vmatprep.subr.bf16.mxu0 0
        %827 = vmatpush1.bf16.xpose.msra.mxu0 0
        %828 = vmatprep.subr.bf16.mxu0 0
        %829 = vmatpush1.bf16.xpose.msra.mxu0 %v812
        %830 = vmatprep.subr.bf16.mxu0 0
        %831 = vmatpush2.bf16.xpose.msra.mxu0 0
        %832 = vmatprep.subr.bf16.mxu0 0
        %833 = vmatpush2.bf16.xpose.msra.mxu0 0
        %834 = vmatprep.subr.bf16.mxu0 0
        %835 = vmatpush2.bf16.xpose.msra.mxu0 0
        %836 = vmatprep.subr.bf16.mxu0 0
        %837 = vmatpush2.bf16.xpose.msra.mxu0 0
        %838 = vmatprep.subr.bf16.mxu0 0
        %839 = vmatpush2.bf16.xpose.msra.mxu0 0
        %840 = vmatprep.subr.bf16.mxu0 0
        %841 = vmatpush2.bf16.xpose.msra.mxu0 0
        %842 = vmatprep.subr.bf16.mxu0 0
        %843 = vmatpush2.bf16.xpose.msra.mxu0 0
        %844 = vmatprep.subr.bf16.mxu0 0
        %845 = vmatpush2.bf16.xpose.msra.mxu0 0
        %846 = vmatprep.mubr.bf16.mxu0 0
        %847 = vmatmul.mubr.bf16.gmra.mxu0 %v809
        %v848 = vpop.f32.mrf.mxu0
        %v849 = vadd.f32 0.0, %v848
        %v850 = vpop.f32.mrf.mxu0
        %v851 = vpop.f32.mrf.mxu0
        %v852 = vpop.f32.mrf.mxu0
        %853 = vdwg.mxu0
        %vm854 = vcmask 64512
        %v855 = vsel %vm854, %v849, -inf
        %856 = vmax.xlane.f32.xlu0 %v855
        %v857 = vpop.xlane.xlu0 %856
        %v858 = vsub.f32 %v849, %v857
        %v859 = vmul.f32 %v858, 1.442695
        %v860 = vpow.pop %v859
        %v861 = vsel %vm854, %v860, 0.0
        %862 = vadd.xlane.f32.xlu0 %v861
        %v863 = vpop.xlane.xlu0 %862
        %v864 = vrcp.pop %v863
        %v865 = vmul.f32 %v860, %v864
        %v866 = vpack.c.bf16 %v865, %v865
        %v868 = vsel %vm854, %v866, 0
        %vm870 = vcmask 1043456
        %v872 = vsel %vm870, %v806, 0
        %874 = vmatprep.subr.bf16.mxu0 0
        %875 = vmatpush1.bf16.msra.mxu0 0
        %876 = vmatprep.subr.bf16.mxu0 0
        %877 = vmatpush1.bf16.msra.mxu0 0
        %878 = vmatprep.subr.bf16.mxu0 0
        %879 = vmatpush1.bf16.msra.mxu0 0
        %880 = vmatprep.subr.bf16.mxu0 0
        %881 = vmatpush1.bf16.msra.mxu0 0
        %882 = vmatprep.subr.bf16.mxu0 0
        %883 = vmatpush1.bf16.msra.mxu0 0
        %884 = vmatprep.subr.bf16.mxu0 0
        %885 = vmatpush1.bf16.msra.mxu0 0
        %886 = vmatprep.subr.bf16.mxu0 0
        %887 = vmatpush1.bf16.msra.mxu0 0
        %888 = vmatprep.subr.bf16.mxu0 0
        %889 = vmatpush1.bf16.msra.mxu0 %v872
        %890 = vmatprep.subr.bf16.mxu0 0
        %891 = vmatpush2.bf16.msra.mxu0 0
        %892 = vmatprep.subr.bf16.mxu0 0
        %893 = vmatpush2.bf16.msra.mxu0 0
        %894 = vmatprep.subr.bf16.mxu0 0
        %895 = vmatpush2.bf16.msra.mxu0 0
        %896 = vmatprep.subr.bf16.mxu0 0
        %897 = vmatpush2.bf16.msra.mxu0 0
        %898 = vmatprep.subr.bf16.mxu0 0
        %899 = vmatpush2.bf16.msra.mxu0 0
        %900 = vmatprep.subr.bf16.mxu0 0
        %901 = vmatpush2.bf16.msra.mxu0 0
        %902 = vmatprep.subr.bf16.mxu0 0
        %903 = vmatpush2.bf16.msra.mxu0 0
        %904 = vmatprep.subr.bf16.mxu0 0
        %905 = vmatpush2.bf16.msra.mxu0 0
        %906 = vmatprep.mubr.bf16.mxu0 0
        %907 = vmatmul.mubr.bf16.gmra.mxu0 %v868
        %v908 = vpop.f32.mrf.mxu0
        %v909 = vadd.f32 0.0, %v908
        %v910 = vpop.f32.mrf.mxu0
        %v911 = vpop.f32.mrf.mxu0
        %v912 = vpop.f32.mrf.mxu0
        %913 = vdwg.mxu0
        %915 = vrot.lane.b32.xlu0 %v690, 96
        %v916 = vpop.permute.xlu0 %915
        %918 = vrot.lane.b32.xlu0 %v696, 96
        %v919 = vpop.permute.xlu0 %918
        %v921 = vsel %vm807, %v916, 0
        %v924 = vsel %vm807, %v919, 0
        %926 = vmatprep.subr.bf16.mxu0 0
        %927 = vmatpush1.bf16.xpose.msra.mxu0 0
        %928 = vmatprep.subr.bf16.mxu0 0
        %929 = vmatpush1.bf16.xpose.msra.mxu0 0
        %930 = vmatprep.subr.bf16.mxu0 0
        %931 = vmatpush1.bf16.xpose.msra.mxu0 0
        %932 = vmatprep.subr.bf16.mxu0 0
        %933 = vmatpush1.bf16.xpose.msra.mxu0 0
        %934 = vmatprep.subr.bf16.mxu0 0
        %935 = vmatpush1.bf16.xpose.msra.mxu0 0
        %936 = vmatprep.subr.bf16.mxu0 0
        %937 = vmatpush1.bf16.xpose.msra.mxu0 0
        %938 = vmatprep.subr.bf16.mxu0 0
        %939 = vmatpush1.bf16.xpose.msra.mxu0 0
        %940 = vmatprep.subr.bf16.mxu0 0
        %941 = vmatpush1.bf16.xpose.msra.mxu0 %v924
        %942 = vmatprep.subr.bf16.mxu0 0
        %943 = vmatpush2.bf16.xpose.msra.mxu0 0
        %944 = vmatprep.subr.bf16.mxu0 0
        %945 = vmatpush2.bf16.xpose.msra.mxu0 0
        %946 = vmatprep.subr.bf16.mxu0 0
        %947 = vmatpush2.bf16.xpose.msra.mxu0 0
        %948 = vmatprep.subr.bf16.mxu0 0
        %949 = vmatpush2.bf16.xpose.msra.mxu0 0
        %950 = vmatprep.subr.bf16.mxu0 0
        %951 = vmatpush2.bf16.xpose.msra.mxu0 0
        %952 = vmatprep.subr.bf16.mxu0 0
        %953 = vmatpush2.bf16.xpose.msra.mxu0 0
        %954 = vmatprep.subr.bf16.mxu0 0
        %955 = vmatpush2.bf16.xpose.msra.mxu0 0
        %956 = vmatprep.subr.bf16.mxu0 0
        %957 = vmatpush2.bf16.xpose.msra.mxu0 0
        %958 = vmatprep.mubr.bf16.mxu0 0
        %959 = vmatmul.mubr.bf16.gmra.mxu0 %v921
        %v960 = vpop.f32.mrf.mxu0
        %v961 = vadd.f32 0.0, %v960
        %v962 = vpop.f32.mrf.mxu0
        %v963 = vpop.f32.mrf.mxu0
        %v964 = vpop.f32.mrf.mxu0
        %965 = vdwg.mxu0
        %v966 = vsel %vm854, %v961, -inf
        %967 = vmax.xlane.f32.xlu0 %v966
        %v968 = vpop.xlane.xlu0 %967
        %v969 = vsub.f32 %v961, %v968
        %v970 = vmul.f32 %v969, 1.442695
        %v971 = vpow.pop %v970
        %v972 = vsel %vm854, %v971, 0.0
        %973 = vadd.xlane.f32.xlu0 %v972
        %v974 = vpop.xlane.xlu0 %973
        %v975 = vrcp.pop %v974
        %v976 = vmul.f32 %v971, %v975
        %v977 = vpack.c.bf16 %v976, %v976
        %979 = vrot.lane.b32.xlu0 %v806, 96
        %v980 = vpop.permute.xlu0 %979
        %v982 = vsel %vm854, %v977, 0
        %v985 = vsel %vm870, %v980, 0
        %987 = vmatprep.subr.bf16.mxu0 0
        %988 = vmatpush1.bf16.msra.mxu0 0
        %989 = vmatprep.subr.bf16.mxu0 0
        %990 = vmatpush1.bf16.msra.mxu0 0
        %991 = vmatprep.subr.bf16.mxu0 0
        %992 = vmatpush1.bf16.msra.mxu0 0
        %993 = vmatprep.subr.bf16.mxu0 0
        %994 = vmatpush1.bf16.msra.mxu0 0
        %995 = vmatprep.subr.bf16.mxu0 0
        %996 = vmatpush1.bf16.msra.mxu0 0
        %997 = vmatprep.subr.bf16.mxu0 0
        %998 = vmatpush1.bf16.msra.mxu0 0
        %999 = vmatprep.subr.bf16.mxu0 0
        %1000 = vmatpush1.bf16.msra.mxu0 0
        %1001 = vmatprep.subr.bf16.mxu0 0
        %1002 = vmatpush1.bf16.msra.mxu0 %v985
        %1003 = vmatprep.subr.bf16.mxu0 0
        %1004 = vmatpush2.bf16.msra.mxu0 0
        %1005 = vmatprep.subr.bf16.mxu0 0
        %1006 = vmatpush2.bf16.msra.mxu0 0
        %1007 = vmatprep.subr.bf16.mxu0 0
        %1008 = vmatpush2.bf16.msra.mxu0 0
        %1009 = vmatprep.subr.bf16.mxu0 0
        %1010 = vmatpush2.bf16.msra.mxu0 0
        %1011 = vmatprep.subr.bf16.mxu0 0
        %1012 = vmatpush2.bf16.msra.mxu0 0
        %1013 = vmatprep.subr.bf16.mxu0 0
        %1014 = vmatpush2.bf16.msra.mxu0 0
        %1015 = vmatprep.subr.bf16.mxu0 0
        %1016 = vmatpush2.bf16.msra.mxu0 0
        %1017 = vmatprep.subr.bf16.mxu0 0
        %1018 = vmatpush2.bf16.msra.mxu0 0
        %1019 = vmatprep.mubr.bf16.mxu0 0
        %1020 = vmatmul.mubr.bf16.gmra.mxu0 %v982
        %v1021 = vpop.f32.mrf.mxu0
        %v1022 = vadd.f32 0.0, %v1021
        %v1023 = vpop.f32.mrf.mxu0
        %v1024 = vpop.f32.mrf.mxu0
        %v1025 = vpop.f32.mrf.mxu0
        %1026 = vdwg.mxu0
        %1027 = vrot.lane.b32.xlu0 %v690, 64
        %v1028 = vpop.permute.xlu0 %1027
        %1029 = vrot.lane.b32.xlu0 %v696, 64
        %v1030 = vpop.permute.xlu0 %1029
        %v1032 = vsel %vm807, %v1028, 0
        %v1035 = vsel %vm807, %v1030, 0
        %1037 = vmatprep.subr.bf16.mxu0 0
        %1038 = vmatpush1.bf16.xpose.msra.mxu0 0
        %1039 = vmatprep.subr.bf16.mxu0 0
        %1040 = vmatpush1.bf16.xpose.msra.mxu0 0
        %1041 = vmatprep.subr.bf16.mxu0 0
        %1042 = vmatpush1.bf16.xpose.msra.mxu0 0
        %1043 = vmatprep.subr.bf16.mxu0 0
        %1044 = vmatpush1.bf16.xpose.msra.mxu0 0
        %1045 = vmatprep.subr.bf16.mxu0 0
        %1046 = vmatpush1.bf16.xpose.msra.mxu0 0
        %1047 = vmatprep.subr.bf16.mxu0 0
        %1048 = vmatpush1.bf16.xpose.msra.mxu0 0
        %1049 = vmatprep.subr.bf16.mxu0 0
        %1050 = vmatpush1.bf16.xpose.msra.mxu0 0
        %1051 = vmatprep.subr.bf16.mxu0 0
        %1052 = vmatpush1.bf16.xpose.msra.mxu0 %v1035
        %1053 = vmatprep.subr.bf16.mxu0 0
        %1054 = vmatpush2.bf16.xpose.msra.mxu0 0
        %1055 = vmatprep.subr.bf16.mxu0 0
        %1056 = vmatpush2.bf16.xpose.msra.mxu0 0
        %1057 = vmatprep.subr.bf16.mxu0 0
        %1058 = vmatpush2.bf16.xpose.msra.mxu0 0
        %1059 = vmatprep.subr.bf16.mxu0 0
        %1060 = vmatpush2.bf16.xpose.msra.mxu0 0
        %1061 = vmatprep.subr.bf16.mxu0 0
        %1062 = vmatpush2.bf16.xpose.msra.mxu0 0
        %1063 = vmatprep.subr.bf16.mxu0 0
        %1064 = vmatpush2.bf16.xpose.msra.mxu0 0
        %1065 = vmatprep.subr.bf16.mxu0 0
        %1066 = vmatpush2.bf16.xpose.msra.mxu0 0
        %1067 = vmatprep.subr.bf16.mxu0 0
        %1068 = vmatpush2.bf16.xpose.msra.mxu0 0
        %1069 = vmatprep.mubr.bf16.mxu0 0
        %1070 = vmatmul.mubr.bf16.gmra.mxu0 %v1032
        %v1071 = vpop.f32.mrf.mxu0
        %v1072 = vadd.f32 0.0, %v1071
        %v1073 = vpop.f32.mrf.mxu0
        %v1074 = vpop.f32.mrf.mxu0
        %v1075 = vpop.f32.mrf.mxu0
        %1076 = vdwg.mxu0
        %v1077 = vsel %vm854, %v1072, -inf
        %1078 = vmax.xlane.f32.xlu0 %v1077
        %v1079 = vpop.xlane.xlu0 %1078
        %v1080 = vsub.f32 %v1072, %v1079
        %v1081 = vmul.f32 %v1080, 1.442695
        %v1082 = vpow.pop %v1081
        %v1083 = vsel %vm854, %v1082, 0.0
        %1084 = vadd.xlane.f32.xlu0 %v1083
        %v1085 = vpop.xlane.xlu0 %1084
        %v1086 = vrcp.pop %v1085
        %v1087 = vmul.f32 %v1082, %v1086
        %v1088 = vpack.c.bf16 %v1087, %v1087
        %1089 = vrot.lane.b32.xlu0 %v806, 64
        %v1090 = vpop.permute.xlu0 %1089
        %v1092 = vsel %vm854, %v1088, 0
        %v1095 = vsel %vm870, %v1090, 0
        %1097 = vmatprep.subr.bf16.mxu0 0
        %1098 = vmatpush1.bf16.msra.mxu0 0
        %1099 = vmatprep.subr.bf16.mxu0 0
        %1100 = vmatpush1.bf16.msra.mxu0 0
        %1101 = vmatprep.subr.bf16.mxu0 0
        %1102 = vmatpush1.bf16.msra.mxu0 0
        %1103 = vmatprep.subr.bf16.mxu0 0
        %1104 = vmatpush1.bf16.msra.mxu0 0
        %1105 = vmatprep.subr.bf16.mxu0 0
        %1106 = vmatpush1.bf16.msra.mxu0 0
        %1107 = vmatprep.subr.bf16.mxu0 0
        %1108 = vmatpush1.bf16.msra.mxu0 0
        %1109 = vmatprep.subr.bf16.mxu0 0
        %1110 = vmatpush1.bf16.msra.mxu0 0
        %1111 = vmatprep.subr.bf16.mxu0 0
        %1112 = vmatpush1.bf16.msra.mxu0 %v1095
        %1113 = vmatprep.subr.bf16.mxu0 0
        %1114 = vmatpush2.bf16.msra.mxu0 0
        %1115 = vmatprep.subr.bf16.mxu0 0
        %1116 = vmatpush2.bf16.msra.mxu0 0
        %1117 = vmatprep.subr.bf16.mxu0 0
        %1118 = vmatpush2.bf16.msra.mxu0 0
        %1119 = vmatprep.subr.bf16.mxu0 0
        %1120 = vmatpush2.bf16.msra.mxu0 0
        %1121 = vmatprep.subr.bf16.mxu0 0
        %1122 = vmatpush2.bf16.msra.mxu0 0
        %1123 = vmatprep.subr.bf16.mxu0 0
        %1124 = vmatpush2.bf16.msra.mxu0 0
        %1125 = vmatprep.subr.bf16.mxu0 0
        %1126 = vmatpush2.bf16.msra.mxu0 0
        %1127 = vmatprep.subr.bf16.mxu0 0
        %1128 = vmatpush2.bf16.msra.mxu0 0
        %1129 = vmatprep.mubr.bf16.mxu0 0
        %1130 = vmatmul.mubr.bf16.gmra.mxu0 %v1092
        %v1131 = vpop.f32.mrf.mxu0
        %v1132 = vadd.f32 0.0, %v1131
        %v1133 = vpop.f32.mrf.mxu0
        %v1134 = vpop.f32.mrf.mxu0
        %v1135 = vpop.f32.mrf.mxu0
        %1136 = vdwg.mxu0
        %1137 = vrot.lane.b32.xlu0 %v690, 32
        %v1138 = vpop.permute.xlu0 %1137
        %1139 = vrot.lane.b32.xlu0 %v696, 32
        %v1140 = vpop.permute.xlu0 %1139
        %v1142 = vsel %vm807, %v1138, 0
        %v1145 = vsel %vm807, %v1140, 0
        %1147 = vmatprep.subr.bf16.mxu0 0
        %1148 = vmatpush1.bf16.xpose.msra.mxu0 0
        %1149 = vmatprep.subr.bf16.mxu0 0
        %1150 = vmatpush1.bf16.xpose.msra.mxu0 0
        %1151 = vmatprep.subr.bf16.mxu0 0
        %1152 = vmatpush1.bf16.xpose.msra.mxu0 0
        %1153 = vmatprep.subr.bf16.mxu0 0
        %1154 = vmatpush1.bf16.xpose.msra.mxu0 0
        %1155 = vmatprep.subr.bf16.mxu0 0
        %1156 = vmatpush1.bf16.xpose.msra.mxu0 0
        %1157 = vmatprep.subr.bf16.mxu0 0
        %1158 = vmatpush1.bf16.xpose.msra.mxu0 0
        %1159 = vmatprep.subr.bf16.mxu0 0
        %1160 = vmatpush1.bf16.xpose.msra.mxu0 0
        %1161 = vmatprep.subr.bf16.mxu0 0
        %1162 = vmatpush1.bf16.xpose.msra.mxu0 %v1145
        %1163 = vmatprep.subr.bf16.mxu0 0
        %1164 = vmatpush2.bf16.xpose.msra.mxu0 0
        %1165 = vmatprep.subr.bf16.mxu0 0
        %1166 = vmatpush2.bf16.xpose.msra.mxu0 0
        %1167 = vmatprep.subr.bf16.mxu0 0
        %1168 = vmatpush2.bf16.xpose.msra.mxu0 0
        %1169 = vmatprep.subr.bf16.mxu0 0
        %1170 = vmatpush2.bf16.xpose.msra.mxu0 0
        %1171 = vmatprep.subr.bf16.mxu0 0
        %1172 = vmatpush2.bf16.xpose.msra.mxu0 0
        %1173 = vmatprep.subr.bf16.mxu0 0
        %1174 = vmatpush2.bf16.xpose.msra.mxu0 0
        %1175 = vmatprep.subr.bf16.mxu0 0
        %1176 = vmatpush2.bf16.xpose.msra.mxu0 0
        %1177 = vmatprep.subr.bf16.mxu0 0
        %1178 = vmatpush2.bf16.xpose.msra.mxu0 0
        %1179 = vmatprep.mubr.bf16.mxu0 0
        %1180 = vmatmul.mubr.bf16.gmra.mxu0 %v1142
        %v1181 = vpop.f32.mrf.mxu0
        %v1182 = vadd.f32 0.0, %v1181
        %v1183 = vpop.f32.mrf.mxu0
        %v1184 = vpop.f32.mrf.mxu0
        %v1185 = vpop.f32.mrf.mxu0
        %1186 = vdwg.mxu0
        %v1187 = vsel %vm854, %v1182, -inf
        %1188 = vmax.xlane.f32.xlu0 %v1187
        %v1189 = vpop.xlane.xlu0 %1188
        %v1190 = vsub.f32 %v1182, %v1189
        %v1191 = vmul.f32 %v1190, 1.442695
        %v1192 = vpow.pop %v1191
        %v1193 = vsel %vm854, %v1192, 0.0
        %1194 = vadd.xlane.f32.xlu0 %v1193
        %v1195 = vpop.xlane.xlu0 %1194
        %v1196 = vrcp.pop %v1195
        %v1197 = vmul.f32 %v1192, %v1196
        %v1198 = vpack.c.bf16 %v1197, %v1197
        %1199 = vrot.lane.b32.xlu0 %v806, 32
        %v1200 = vpop.permute.xlu0 %1199
        %v1202 = vsel %vm854, %v1198, 0
        %v1205 = vsel %vm870, %v1200, 0
        %1207 = vmatprep.subr.bf16.mxu0 0
        %1208 = vmatpush1.bf16.msra.mxu0 0
        %1209 = vmatprep.subr.bf16.mxu0 0
        %1210 = vmatpush1.bf16.msra.mxu0 0
        %1211 = vmatprep.subr.bf16.mxu0 0
        %1212 = vmatpush1.bf16.msra.mxu0 0
        %1213 = vmatprep.subr.bf16.mxu0 0
        %1214 = vmatpush1.bf16.msra.mxu0 0
        %1215 = vmatprep.subr.bf16.mxu0 0
        %1216 = vmatpush1.bf16.msra.mxu0 0
        %1217 = vmatprep.subr.bf16.mxu0 0
        %1218 = vmatpush1.bf16.msra.mxu0 0
        %1219 = vmatprep.subr.bf16.mxu0 0
        %1220 = vmatpush1.bf16.msra.mxu0 0
        %1221 = vmatprep.subr.bf16.mxu0 0
        %1222 = vmatpush1.bf16.msra.mxu0 %v1205
        %1223 = vmatprep.subr.bf16.mxu0 0
        %1224 = vmatpush2.bf16.msra.mxu0 0
        %1225 = vmatprep.subr.bf16.mxu0 0
        %1226 = vmatpush2.bf16.msra.mxu0 0
        %1227 = vmatprep.subr.bf16.mxu0 0
        %1228 = vmatpush2.bf16.msra.mxu0 0
        %1229 = vmatprep.subr.bf16.mxu0 0
        %1230 = vmatpush2.bf16.msra.mxu0 0
        %1231 = vmatprep.subr.bf16.mxu0 0
        %1232 = vmatpush2.bf16.msra.mxu0 0
        %1233 = vmatprep.subr.bf16.mxu0 0
        %1234 = vmatpush2.bf16.msra.mxu0 0
        %1235 = vmatprep.subr.bf16.mxu0 0
        %1236 = vmatpush2.bf16.msra.mxu0 0
        %1237 = vmatprep.subr.bf16.mxu0 0
        %1238 = vmatpush2.bf16.msra.mxu0 0
        %1239 = vmatprep.mubr.bf16.mxu0 0
        %1240 = vmatmul.mubr.bf16.gmra.mxu0 %v1202
        %v1241 = vpop.f32.mrf.mxu0
        %v1242 = vadd.f32 0.0, %v1241
        %v1243 = vpop.f32.mrf.mxu0
        %v1244 = vpop.f32.mrf.mxu0
        %v1245 = vpop.f32.mrf.mxu0
        %1246 = vdwg.mxu0
        %1248 = vrot.lane.b32.xlu0 %v1022, 32
        %v1249 = vpop.permute.xlu0 %1248
        %1252 = vrot.lane.b32.xlu0 %v1132, 64
        %v1253 = vpop.permute.xlu0 %1252
        %1256 = vrot.lane.b32.xlu0 %v1242, 96
        %v1257 = vpop.permute.xlu0 %1256
        %v1259 = vsel %vm807, %v909, %v1249
        %vm1260 = vcmask 523264
        %v1261 = vsel %vm1260, %v1259, %v1253
        %vm1262 = vcmask 785408
        %v1263 = vsel %vm1262, %v1261, %v1257
        %v1264 = vpack.c.bf16 %v1263, %v1263
        %v1265 = vlaneseq
        %v1266 = vshrl.u32 %v1265, 7
        %v1267 = vsub.s32 3, %v1266
        %v1268 = vrot.slane %v515, %v1267
        %v1285 = vunpack.c.l.b16 %v529
        %v1286 = vunpack.c.l.b16 %v530
        %v1287 = vunpack.c.l.b16 %v531
        %v1288 = vunpack.c.l.b16 %v532
        %v1289 = vunpack.c.l.b16 %v533
        %v1290 = vunpack.c.l.b16 %v534
        %v1291 = vunpack.c.l.b16 %v535
        %v1292 = vunpack.c.l.b16 %v536
        %v1293 = vunpack.c.l.b16 %v537
        %v1294 = vunpack.c.l.b16 %v538
        %v1295 = vunpack.c.l.b16 %v539
        %v1296 = vunpack.c.l.b16 %v540
        %v1297 = vunpack.c.l.b16 %v541
        %v1298 = vunpack.c.l.b16 %v542
        %v1299 = vunpack.c.l.b16 %v543
        %v1300 = vunpack.c.l.b16 %v544
        %v1301 = vpack.c.b16 %v1286, %v1285
        %v1302 = vpack.c.b16 %v1288, %v1287
        %v1303 = vpack.c.b16 %v1290, %v1289
        %v1304 = vpack.c.b16 %v1292, %v1291
        %v1305 = vpack.c.b16 %v1294, %v1293
        %v1306 = vpack.c.b16 %v1296, %v1295
        %v1307 = vpack.c.b16 %v1298, %v1297
        %v1308 = vpack.c.b16 %v1300, %v1299
        %1317 = vmatprep.subr.bf16.mxu0 0
        %1318 = vmatpush1.bf16.msra.mxu0 %v1308
        %1319 = vmatprep.subr.bf16.mxu0 0
        %1320 = vmatpush1.bf16.msra.mxu0 %v1307
        %1321 = vmatprep.subr.bf16.mxu0 0
        %1322 = vmatpush1.bf16.msra.mxu0 %v1306
        %1323 = vmatprep.subr.bf16.mxu0 0
        %1324 = vmatpush1.bf16.msra.mxu0 %v1305
        %1325 = vmatprep.subr.bf16.mxu0 0
        %1326 = vmatpush1.bf16.msra.mxu0 %v1304
        %1327 = vmatprep.subr.bf16.mxu0 0
        %1328 = vmatpush1.bf16.msra.mxu0 %v1303
        %1329 = vmatprep.subr.bf16.mxu0 0
        %1330 = vmatpush1.bf16.msra.mxu0 %v1302
        %1331 = vmatprep.subr.bf16.mxu0 0
        %1332 = vmatpush1.bf16.msra.mxu0 %v1301
        %1333 = vmatprep.subr.bf16.mxu0 0
        %1334 = vmatpush2.bf16.msra.mxu0 0
        %1335 = vmatprep.subr.bf16.mxu0 0
        %1336 = vmatpush2.bf16.msra.mxu0 0
        %1337 = vmatprep.subr.bf16.mxu0 0
        %1338 = vmatpush2.bf16.msra.mxu0 0
        %1339 = vmatprep.subr.bf16.mxu0 0
        %1340 = vmatpush2.bf16.msra.mxu0 0
        %1341 = vmatprep.subr.bf16.mxu0 0
        %1342 = vmatpush2.bf16.msra.mxu0 0
        %1343 = vmatprep.subr.bf16.mxu0 0
        %1344 = vmatpush2.bf16.msra.mxu0 0
        %1345 = vmatprep.subr.bf16.mxu0 0
        %1346 = vmatpush2.bf16.msra.mxu0 0
        %1347 = vmatprep.subr.bf16.mxu0 0
        %1348 = vmatpush2.bf16.msra.mxu0 0
        %1349 = vmatprep.mubr.bf16.mxu0 0
        %1350 = vmatmul.mubr.bf16.gmra.mxu0 %v1264
        %v1351 = vpop.f32.mrf.mxu0
        %v1352 = vadd.f32 %v1268, %v1351
        %v1353 = vpop.f32.mrf.mxu0
        %v1354 = vpop.f32.mrf.mxu0
        %v1355 = vpop.f32.mrf.mxu0
        %1356 = vdwg.mxu0
        %v1357 = vadd.f32 %v519, %v1352
        %1358 = vadd.xlane.f32.xlu0 %v1357
        %v1359 = vpop.xlane.xlu0 %1358
        %v1360 = vrcp.pop 128.0
        %v1361 = vmul.f32 %v1359, %v1360
        %v1362 = vsub.f32 %v1357, %v1361
        %v1363 = vmul.f32 %v1362, %v1362
        %1364 = vadd.xlane.f32.xlu0 %v1363
        %v1365 = vpop.xlane.xlu0 %1364
        %v1366 = vmul.f32 %v1365, %v1360
        %v1367 = vadd.f32 %v1366, 1e-05
        %v1368 = vrsqrt.pop %v1367
        %v1369 = vmul.f32 %v1362, %v1368
        %v1370 = vlaneseq
        %v1371 = vshrl.u32 %v1370, 7
        %v1372 = vsub.s32 6, %v1371
        %v1373 = vrot.slane %v516, %v1372
        %v1374 = vmul.f32 %v1369, %v1373
        %v1375 = vlaneseq
        %v1376 = vshrl.u32 %v1375, 7
        %v1377 = vsub.s32 7, %v1376
        %v1378 = vrot.slane %v516, %v1377
        %v1379 = vadd.f32 %v1374, %v1378
        %v1380 = vadd.f32 %v520, %v525
        %v1381 = vadd.f32 %v521, %v526
        %v1382 = vadd.f32 %v522, %v527
        %v1383 = vadd.f32 %v523, %v528
        %v1384 = vpack.c.bf16 %v1381, %v1380
        %v1385 = vpack.c.bf16 %v1383, %v1382
        %v1386 = vpack.c.bf16 %v521, %v520
        %v1387 = vpack.c.bf16 %v523, %v522
        %v1388 = vadd.f32 %v1379, %v524
        %v1389 = vpack.c.bf16 %v1388, %v1388
        %v1390 = vld [vmem:[%s5] sm:$0xf]
        %v1391 = vld [vmem:[%s5 + $0x4] sm:$0xf]
        %v1392 = vld [vmem:[%s5 + $0x8] sm:$0xf]
        %v1393 = vld [vmem:[%s5 + $0xc] sm:$0xf]
        %v1394 = vld [vmem:[%s5 + $0x10] sm:$0xf]
        %v1395 = vld [vmem:[%s5 + $0x14] sm:$0xf]
        %v1396 = vld [vmem:[%s5 + $0x18] sm:$0xf]
        %v1397 = vld [vmem:[%s5 + $0x1c] sm:$0xf]
        %v1398 = vld [vmem:[%s5 + $0x20] sm:$0xf]
        %v1399 = vld [vmem:[%s5 + $0x24] sm:$0xf]
        %v1400 = vld [vmem:[%s5 + $0x28] sm:$0xf]
        %v1401 = vld [vmem:[%s5 + $0x2c] sm:$0xf]
        %v1402 = vld [vmem:[%s5 + $0x30] sm:$0xf]
        %v1403 = vld [vmem:[%s5 + $0x34] sm:$0xf]
        %v1404 = vld [vmem:[%s5 + $0x38] sm:$0xf]
        %v1405 = vld [vmem:[%s5 + $0x3c] sm:$0xf]
        %v1406 = vlaneseq
        %v1407 = vshrl.u32 %v1406, 7
        %v1408 = vsub.s32 4, %v1407
        %v1409 = vrot.slane %v515, %v1408
        %v1426 = vunpack.c.l.b16 %v1390
        %v1427 = vunpack.c.l.b16 %v1391
        %v1428 = vunpack.c.l.b16 %v1392
        %v1429 = vunpack.c.l.b16 %v1393
        %v1430 = vunpack.c.l.b16 %v1394
        %v1431 = vunpack.c.l.b16 %v1395
        %v1432 = vunpack.c.l.b16 %v1396
        %v1433 = vunpack.c.l.b16 %v1397
        %v1434 = vunpack.c.l.b16 %v1398
        %v1435 = vunpack.c.l.b16 %v1399
        %v1436 = vunpack.c.l.b16 %v1400
        %v1437 = vunpack.c.l.b16 %v1401
        %v1438 = vunpack.c.l.b16 %v1402
        %v1439 = vunpack.c.l.b16 %v1403
        %v1440 = vunpack.c.l.b16 %v1404
        %v1441 = vunpack.c.l.b16 %v1405
        %v1442 = vpack.c.b16 %v1427, %v1426
        %v1443 = vpack.c.b16 %v1429, %v1428
        %v1444 = vpack.c.b16 %v1431, %v1430
        %v1445 = vpack.c.b16 %v1433, %v1432
        %v1446 = vpack.c.b16 %v1435, %v1434
        %v1447 = vpack.c.b16 %v1437, %v1436
        %v1448 = vpack.c.b16 %v1439, %v1438
        %v1449 = vpack.c.b16 %v1441, %v1440
        %1458 = vmatprep.subr.bf16.mxu0 0
        %1459 = vmatpush1.bf16.msra.mxu0 %v1449
        %1460 = vmatprep.subr.bf16.mxu0 0
        %1461 = vmatpush1.bf16.msra.mxu0 %v1448
        %1462 = vmatprep.subr.bf16.mxu0 0
        %1463 = vmatpush1.bf16.msra.mxu0 %v1447
        %1464 = vmatprep.subr.bf16.mxu0 0
        %1465 = vmatpush1.bf16.msra.mxu0 %v1446
        %1466 = vmatprep.subr.bf16.mxu0 0
        %1467 = vmatpush1.bf16.msra.mxu0 %v1445
        %1468 = vmatprep.subr.bf16.mxu0 0
        %1469 = vmatpush1.bf16.msra.mxu0 %v1444
        %1470 = vmatprep.subr.bf16.mxu0 0
        %1471 = vmatpush1.bf16.msra.mxu0 %v1443
        %1472 = vmatprep.subr.bf16.mxu0 0
        %1473 = vmatpush1.bf16.msra.mxu0 %v1442
        %1474 = vmatprep.subr.bf16.mxu0 0
        %1475 = vmatpush2.bf16.msra.mxu0 0
        %1476 = vmatprep.subr.bf16.mxu0 0
        %1477 = vmatpush2.bf16.msra.mxu0 0
        %1478 = vmatprep.subr.bf16.mxu0 0
        %1479 = vmatpush2.bf16.msra.mxu0 0
        %1480 = vmatprep.subr.bf16.mxu0 0
        %1481 = vmatpush2.bf16.msra.mxu0 0
        %1482 = vmatprep.subr.bf16.mxu0 0
        %1483 = vmatpush2.bf16.msra.mxu0 0
        %1484 = vmatprep.subr.bf16.mxu0 0
        %1485 = vmatpush2.bf16.msra.mxu0 0
        %1486 = vmatprep.subr.bf16.mxu0 0
        %1487 = vmatpush2.bf16.msra.mxu0 0
        %1488 = vmatprep.subr.bf16.mxu0 0
        %1489 = vmatpush2.bf16.msra.mxu0 0
        %1490 = vmatprep.mubr.bf16.mxu0 0
        %1491 = vmatmul.mubr.bf16.gmra.mxu0 %v1389
        %v1492 = vpop.f32.mrf.mxu0
        %v1493 = vadd.f32 %v1409, %v1492
        %v1494 = vpop.f32.mrf.mxu0
        %v1495 = vpop.f32.mrf.mxu0
        %v1496 = vpop.f32.mrf.mxu0
        %1497 = vdwg.mxu0
        %v1498 = vmul.f32 %v1493, 0.25
        %v1499 = vpack.c.bf16 %v1498, %v1498
        %v1500 = vld [vmem:[%s5 + $0x40] sm:$0xf]
        %v1501 = vld [vmem:[%s5 + $0x44] sm:$0xf]
        %v1502 = vld [vmem:[%s5 + $0x48] sm:$0xf]
        %v1503 = vld [vmem:[%s5 + $0x4c] sm:$0xf]
        %v1504 = vld [vmem:[%s5 + $0x50] sm:$0xf]
        %v1505 = vld [vmem:[%s5 + $0x54] sm:$0xf]
        %v1506 = vld [vmem:[%s5 + $0x58] sm:$0xf]
        %v1507 = vld [vmem:[%s5 + $0x5c] sm:$0xf]
        %v1508 = vld [vmem:[%s5 + $0x60] sm:$0xf]
        %v1509 = vld [vmem:[%s5 + $0x64] sm:$0xf]
        %v1510 = vld [vmem:[%s5 + $0x68] sm:$0xf]
        %v1511 = vld [vmem:[%s5 + $0x6c] sm:$0xf]
        %v1512 = vld [vmem:[%s5 + $0x70] sm:$0xf]
        %v1513 = vld [vmem:[%s5 + $0x74] sm:$0xf]
        %v1514 = vld [vmem:[%s5 + $0x78] sm:$0xf]
        %v1515 = vld [vmem:[%s5 + $0x7c] sm:$0xf]
        %v1516 = vlaneseq
        %v1517 = vshrl.u32 %v1516, 7
        %v1518 = vsub.s32 5, %v1517
        %v1519 = vrot.slane %v515, %v1518
        %v1536 = vunpack.c.l.b16 %v1500
        %v1537 = vunpack.c.l.b16 %v1501
        %v1538 = vunpack.c.l.b16 %v1502
        %v1539 = vunpack.c.l.b16 %v1503
        %v1540 = vunpack.c.l.b16 %v1504
        %v1541 = vunpack.c.l.b16 %v1505
        %v1542 = vunpack.c.l.b16 %v1506
        %v1543 = vunpack.c.l.b16 %v1507
        %v1544 = vunpack.c.l.b16 %v1508
        %v1545 = vunpack.c.l.b16 %v1509
        %v1546 = vunpack.c.l.b16 %v1510
        %v1547 = vunpack.c.l.b16 %v1511
        %v1548 = vunpack.c.l.b16 %v1512
        %v1549 = vunpack.c.l.b16 %v1513
        %v1550 = vunpack.c.l.b16 %v1514
        %v1551 = vunpack.c.l.b16 %v1515
        %v1552 = vpack.c.b16 %v1537, %v1536
        %v1553 = vpack.c.b16 %v1539, %v1538
        %v1554 = vpack.c.b16 %v1541, %v1540
        %v1555 = vpack.c.b16 %v1543, %v1542
        %v1556 = vpack.c.b16 %v1545, %v1544
        %v1557 = vpack.c.b16 %v1547, %v1546
        %v1558 = vpack.c.b16 %v1549, %v1548
        %v1559 = vpack.c.b16 %v1551, %v1550
        %1568 = vmatprep.subr.bf16.mxu0 0
        %1569 = vmatpush1.bf16.msra.mxu0 %v1559
        %1570 = vmatprep.subr.bf16.mxu0 0
        %1571 = vmatpush1.bf16.msra.mxu0 %v1558
        %1572 = vmatprep.subr.bf16.mxu0 0
        %1573 = vmatpush1.bf16.msra.mxu0 %v1557
        %1574 = vmatprep.subr.bf16.mxu0 0
        %1575 = vmatpush1.bf16.msra.mxu0 %v1556
        %1576 = vmatprep.subr.bf16.mxu0 0
        %1577 = vmatpush1.bf16.msra.mxu0 %v1555
        %1578 = vmatprep.subr.bf16.mxu0 0
        %1579 = vmatpush1.bf16.msra.mxu0 %v1554
        %1580 = vmatprep.subr.bf16.mxu0 0
        %1581 = vmatpush1.bf16.msra.mxu0 %v1553
        %1582 = vmatprep.subr.bf16.mxu0 0
        %1583 = vmatpush1.bf16.msra.mxu0 %v1552
        %1584 = vmatprep.subr.bf16.mxu0 0
        %1585 = vmatpush2.bf16.msra.mxu0 0
        %1586 = vmatprep.subr.bf16.mxu0 0
        %1587 = vmatpush2.bf16.msra.mxu0 0
        %1588 = vmatprep.subr.bf16.mxu0 0
        %1589 = vmatpush2.bf16.msra.mxu0 0
        %1590 = vmatprep.subr.bf16.mxu0 0
        %1591 = vmatpush2.bf16.msra.mxu0 0
        %1592 = vmatprep.subr.bf16.mxu0 0
        %1593 = vmatpush2.bf16.msra.mxu0 0
        %1594 = vmatprep.subr.bf16.mxu0 0
        %1595 = vmatpush2.bf16.msra.mxu0 0
        %1596 = vmatprep.subr.bf16.mxu0 0
        %1597 = vmatpush2.bf16.msra.mxu0 0
        %1598 = vmatprep.subr.bf16.mxu0 0
        %1599 = vmatpush2.bf16.msra.mxu0 0
        %1600 = vmatprep.mubr.bf16.mxu0 0
        %1601 = vmatmul.mubr.bf16.gmra.mxu0 %v1384
        %v1602 = vpop.f32.mrf.mxu0
        %v1603 = vadd.f32 %v1519, %v1602
        %v1604 = vpop.f32.mrf.mxu0
        %v1605 = vpop.f32.mrf.mxu0
        %v1606 = vadd.f32 %v1519, %v1605
        %v1607 = vpop.f32.mrf.mxu0
        %1608 = vmatprep.mubr.bf16.mxu0 0
        %1609 = vmatmul.mubr.bf16.gmra.mxu0 %v1385
        %v1610 = vpop.f32.mrf.mxu0
        %v1611 = vadd.f32 %v1519, %v1610
        %v1612 = vpop.f32.mrf.mxu0
        %v1613 = vpop.f32.mrf.mxu0
        %v1614 = vadd.f32 %v1519, %v1613
        %v1615 = vpop.f32.mrf.mxu0
        %1616 = vdwg.mxu0
        %v1617 = vpack.c.bf16 %v1606, %v1603
        %v1618 = vpack.c.bf16 %v1614, %v1611
        %v1619 = vld [vmem:[%s5 + $0x80] sm:$0xf]
        %v1620 = vld [vmem:[%s5 + $0x84] sm:$0xf]
        %v1621 = vld [vmem:[%s5 + $0x88] sm:$0xf]
        %v1622 = vld [vmem:[%s5 + $0x8c] sm:$0xf]
        %v1623 = vld [vmem:[%s5 + $0x90] sm:$0xf]
        %v1624 = vld [vmem:[%s5 + $0x94] sm:$0xf]
        %v1625 = vld [vmem:[%s5 + $0x98] sm:$0xf]
        %v1626 = vld [vmem:[%s5 + $0x9c] sm:$0xf]
        %v1627 = vld [vmem:[%s5 + $0xa0] sm:$0xf]
        %v1628 = vld [vmem:[%s5 + $0xa4] sm:$0xf]
        %v1629 = vld [vmem:[%s5 + $0xa8] sm:$0xf]
        %v1630 = vld [vmem:[%s5 + $0xac] sm:$0xf]
        %v1631 = vld [vmem:[%s5 + $0xb0] sm:$0xf]
        %v1632 = vld [vmem:[%s5 + $0xb4] sm:$0xf]
        %v1633 = vld [vmem:[%s5 + $0xb8] sm:$0xf]
        %v1634 = vld [vmem:[%s5 + $0xbc] sm:$0xf]
        %v1635 = vlaneseq
        %v1636 = vshrl.u32 %v1635, 7
        %v1637 = vsub.s32 6, %v1636
        %v1638 = vrot.slane %v515, %v1637
        %v1655 = vunpack.c.l.b16 %v1619
        %v1656 = vunpack.c.l.b16 %v1620
        %v1657 = vunpack.c.l.b16 %v1621
        %v1658 = vunpack.c.l.b16 %v1622
        %v1659 = vunpack.c.l.b16 %v1623
        %v1660 = vunpack.c.l.b16 %v1624
        %v1661 = vunpack.c.l.b16 %v1625
        %v1662 = vunpack.c.l.b16 %v1626
        %v1663 = vunpack.c.l.b16 %v1627
        %v1664 = vunpack.c.l.b16 %v1628
        %v1665 = vunpack.c.l.b16 %v1629
        %v1666 = vunpack.c.l.b16 %v1630
        %v1667 = vunpack.c.l.b16 %v1631
        %v1668 = vunpack.c.l.b16 %v1632
        %v1669 = vunpack.c.l.b16 %v1633
        %v1670 = vunpack.c.l.b16 %v1634
        %v1671 = vpack.c.b16 %v1656, %v1655
        %v1672 = vpack.c.b16 %v1658, %v1657
        %v1673 = vpack.c.b16 %v1660, %v1659
        %v1674 = vpack.c.b16 %v1662, %v1661
        %v1675 = vpack.c.b16 %v1664, %v1663
        %v1676 = vpack.c.b16 %v1666, %v1665
        %v1677 = vpack.c.b16 %v1668, %v1667
        %v1678 = vpack.c.b16 %v1670, %v1669
        %1687 = vmatprep.subr.bf16.mxu0 0
        %1688 = vmatpush1.bf16.msra.mxu0 %v1678
        %1689 = vmatprep.subr.bf16.mxu0 0
        %1690 = vmatpush1.bf16.msra.mxu0 %v1677
        %1691 = vmatprep.subr.bf16.mxu0 0
        %1692 = vmatpush1.bf16.msra.mxu0 %v1676
        %1693 = vmatprep.subr.bf16.mxu0 0
        %1694 = vmatpush1.bf16.msra.mxu0 %v1675
        %1695 = vmatprep.subr.bf16.mxu0 0
        %1696 = vmatpush1.bf16.msra.mxu0 %v1674
        %1697 = vmatprep.subr.bf16.mxu0 0
        %1698 = vmatpush1.bf16.msra.mxu0 %v1673
        %1699 = vmatprep.subr.bf16.mxu0 0
        %1700 = vmatpush1.bf16.msra.mxu0 %v1672
        %1701 = vmatprep.subr.bf16.mxu0 0
        %1702 = vmatpush1.bf16.msra.mxu0 %v1671
        %1703 = vmatprep.subr.bf16.mxu0 0
        %1704 = vmatpush2.bf16.msra.mxu0 0
        %1705 = vmatprep.subr.bf16.mxu0 0
        %1706 = vmatpush2.bf16.msra.mxu0 0
        %1707 = vmatprep.subr.bf16.mxu0 0
        %1708 = vmatpush2.bf16.msra.mxu0 0
        %1709 = vmatprep.subr.bf16.mxu0 0
        %1710 = vmatpush2.bf16.msra.mxu0 0
        %1711 = vmatprep.subr.bf16.mxu0 0
        %1712 = vmatpush2.bf16.msra.mxu0 0
        %1713 = vmatprep.subr.bf16.mxu0 0
        %1714 = vmatpush2.bf16.msra.mxu0 0
        %1715 = vmatprep.subr.bf16.mxu0 0
        %1716 = vmatpush2.bf16.msra.mxu0 0
        %1717 = vmatprep.subr.bf16.mxu0 0
        %1718 = vmatpush2.bf16.msra.mxu0 0
        %1719 = vmatprep.mubr.bf16.mxu0 0
        %1720 = vmatmul.mubr.bf16.gmra.mxu0 %v1386
        %v1721 = vpop.f32.mrf.mxu0
        %v1722 = vadd.f32 %v1638, %v1721
        %v1723 = vpop.f32.mrf.mxu0
        %v1724 = vpop.f32.mrf.mxu0
        %v1725 = vadd.f32 %v1638, %v1724
        %v1726 = vpop.f32.mrf.mxu0
        %1727 = vmatprep.mubr.bf16.mxu0 0
        %1728 = vmatmul.mubr.bf16.gmra.mxu0 %v1387
        %v1729 = vpop.f32.mrf.mxu0
        %v1730 = vadd.f32 %v1638, %v1729
        %v1731 = vpop.f32.mrf.mxu0
        %v1732 = vpop.f32.mrf.mxu0
        %v1733 = vadd.f32 %v1638, %v1732
        %v1734 = vpop.f32.mrf.mxu0
        %1735 = vdwg.mxu0
        %v1736 = vpack.c.bf16 %v1725, %v1722
        %v1737 = vpack.c.bf16 %v1733, %v1730
        %v1738 = vld [vmem:[%s6 + $0x40] sm:$0xf]
        %v1739 = vld [vmem:[%s6 + $0x44] sm:$0xf]
        %v1740 = vld [vmem:[%s6 + $0x48] sm:$0xf]
        %v1741 = vld [vmem:[%s6 + $0x4c] sm:$0xf]
        %v1742 = vld [vmem:[%s6 + $0x50] sm:$0xf]
        %v1743 = vld [vmem:[%s6 + $0x54] sm:$0xf]
        %v1744 = vld [vmem:[%s6 + $0x58] sm:$0xf]
        %v1745 = vld [vmem:[%s6 + $0x5c] sm:$0xf]
        %vm1746 = vcmask 130048
        %v1748 = vsel %vm1746, %v1499, 0
        %v1751 = vsel %vm1746, %v1617, 0
        %v1754 = vsel %vm1746, %v1618, 0
        %1756 = vmatprep.subr.bf16.mxu0 0
        %1757 = vmatpush1.bf16.xpose.msra.mxu0 0
        %1758 = vmatprep.subr.bf16.mxu0 0
        %1759 = vmatpush1.bf16.xpose.msra.mxu0 0
        %1760 = vmatprep.subr.bf16.mxu0 0
        %1761 = vmatpush1.bf16.xpose.msra.mxu0 0
        %1762 = vmatprep.subr.bf16.mxu0 0
        %1763 = vmatpush1.bf16.xpose.msra.mxu0 0
        %1764 = vmatprep.subr.bf16.mxu0 0
        %1765 = vmatpush1.bf16.xpose.msra.mxu0 0
        %1766 = vmatprep.subr.bf16.mxu0 0
        %1767 = vmatpush1.bf16.xpose.msra.mxu0 0
        %1768 = vmatprep.subr.bf16.mxu0 0
        %1769 = vmatpush1.bf16.xpose.msra.mxu0 %v1754
        %1770 = vmatprep.subr.bf16.mxu0 0
        %1771 = vmatpush1.bf16.xpose.msra.mxu0 %v1751
        %1772 = vmatprep.subr.bf16.mxu0 0
        %1773 = vmatpush2.bf16.xpose.msra.mxu0 0
        %1774 = vmatprep.subr.bf16.mxu0 0
        %1775 = vmatpush2.bf16.xpose.msra.mxu0 0
        %1776 = vmatprep.subr.bf16.mxu0 0
        %1777 = vmatpush2.bf16.xpose.msra.mxu0 0
        %1778 = vmatprep.subr.bf16.mxu0 0
        %1779 = vmatpush2.bf16.xpose.msra.mxu0 0
        %1780 = vmatprep.subr.bf16.mxu0 0
        %1781 = vmatpush2.bf16.xpose.msra.mxu0 0
        %1782 = vmatprep.subr.bf16.mxu0 0
        %1783 = vmatpush2.bf16.xpose.msra.mxu0 0
        %1784 = vmatprep.subr.bf16.mxu0 0
        %1785 = vmatpush2.bf16.xpose.msra.mxu0 0
        %1786 = vmatprep.subr.bf16.mxu0 0
        %1787 = vmatpush2.bf16.xpose.msra.mxu0 0
        %1788 = vmatprep.mubr.bf16.mxu0 0
        %1789 = vmatmul.mubr.bf16.gmra.mxu0 %v1748
        %v1790 = vpop.f32.mrf.mxu0
        %v1791 = vadd.f32 0.0, %v1790
        %v1792 = vpop.f32.mrf.mxu0
        %v1793 = vpop.f32.mrf.mxu0
        %v1794 = vpop.f32.mrf.mxu0
        %1795 = vdwg.mxu0
        %v1796 = vsel %vm807, %v1791, -inf
        %1797 = vmax.xlane.f32.xlu0 %v1796
        %v1798 = vpop.xlane.xlu0 %1797
        %v1799 = vsub.f32 %v1791, %v1798
        %v1800 = vmul.f32 %v1799, 1.442695
        %v1801 = vpow.pop %v1800
        %v1802 = vsel %vm807, %v1801, 0.0
        %1803 = vadd.xlane.f32.xlu0 %v1802
        %v1804 = vpop.xlane.xlu0 %1803
        %v1805 = vrcp.pop %v1804
        %v1806 = vmul.f32 %v1801, %v1805
        %v1807 = vpack.c.bf16 %v1806, %v1806
        %v1809 = vsel %vm807, %v1807, 0
        %1811 = vmatprep.subr.bf16.mxu0 0
        %1812 = vmatpush1.bf16.msra.mxu0 0
        %1813 = vmatprep.subr.bf16.mxu0 0
        %1814 = vmatpush1.bf16.msra.mxu0 0
        %1815 = vmatprep.subr.bf16.mxu0 0
        %1816 = vmatpush1.bf16.msra.mxu0 0
        %1817 = vmatprep.subr.bf16.mxu0 0
        %1818 = vmatpush1.bf16.msra.mxu0 0
        %1819 = vmatprep.subr.bf16.mxu0 0
        %1820 = vmatpush1.bf16.msra.mxu0 0
        %1821 = vmatprep.subr.bf16.mxu0 0
        %1822 = vmatpush1.bf16.msra.mxu0 0
        %1823 = vmatprep.subr.bf16.mxu0 0
        %1824 = vmatpush1.bf16.msra.mxu0 %v1737
        %1825 = vmatprep.subr.bf16.mxu0 0
        %1826 = vmatpush1.bf16.msra.mxu0 %v1736
        %1827 = vmatprep.subr.bf16.mxu0 0
        %1828 = vmatpush2.bf16.msra.mxu0 0
        %1829 = vmatprep.subr.bf16.mxu0 0
        %1830 = vmatpush2.bf16.msra.mxu0 0
        %1831 = vmatprep.subr.bf16.mxu0 0
        %1832 = vmatpush2.bf16.msra.mxu0 0
        %1833 = vmatprep.subr.bf16.mxu0 0
        %1834 = vmatpush2.bf16.msra.mxu0 0
        %1835 = vmatprep.subr.bf16.mxu0 0
        %1836 = vmatpush2.bf16.msra.mxu0 0
        %1837 = vmatprep.subr.bf16.mxu0 0
        %1838 = vmatpush2.bf16.msra.mxu0 0
        %1839 = vmatprep.subr.bf16.mxu0 0
        %1840 = vmatpush2.bf16.msra.mxu0 0
        %1841 = vmatprep.subr.bf16.mxu0 0
        %1842 = vmatpush2.bf16.msra.mxu0 0
        %1843 = vmatprep.mubr.bf16.mxu0 0
        %1844 = vmatmul.mubr.bf16.gmra.mxu0 %v1809
        %v1845 = vpop.f32.mrf.mxu0
        %v1846 = vadd.f32 0.0, %v1845
        %v1847 = vpop.f32.mrf.mxu0
        %v1848 = vpop.f32.mrf.mxu0
        %v1849 = vpop.f32.mrf.mxu0
        %1850 = vdwg.mxu0
        %1852 = vrot.lane.b32.xlu0 %v1499, 112
        %v1853 = vpop.permute.xlu0 %1852
        %1856 = vrot.lane.b32.xlu0 %v1617, 112
        %v1857 = vpop.permute.xlu0 %1856
        %1858 = vrot.lane.b32.xlu0 %v1618, 112
        %v1859 = vpop.permute.xlu0 %1858
        %v1861 = vsel %vm1746, %v1853, 0
        %v1864 = vsel %vm1746, %v1857, 0
        %v1867 = vsel %vm1746, %v1859, 0
        %1869 = vmatprep.subr.bf16.mxu0 0
        %1870 = vmatpush1.bf16.xpose.msra.mxu0 0
        %1871 = vmatprep.subr.bf16.mxu0 0
        %1872 = vmatpush1.bf16.xpose.msra.mxu0 0
        %1873 = vmatprep.subr.bf16.mxu0 0
        %1874 = vmatpush1.bf16.xpose.msra.mxu0 0
        %1875 = vmatprep.subr.bf16.mxu0 0
        %1876 = vmatpush1.bf16.xpose.msra.mxu0 0
        %1877 = vmatprep.subr.bf16.mxu0 0
        %1878 = vmatpush1.bf16.xpose.msra.mxu0 0
        %1879 = vmatprep.subr.bf16.mxu0 0
        %1880 = vmatpush1.bf16.xpose.msra.mxu0 0
        %1881 = vmatprep.subr.bf16.mxu0 0
        %1882 = vmatpush1.bf16.xpose.msra.mxu0 %v1867
        %1883 = vmatprep.subr.bf16.mxu0 0
        %1884 = vmatpush1.bf16.xpose.msra.mxu0 %v1864
        %1885 = vmatprep.subr.bf16.mxu0 0
        %1886 = vmatpush2.bf16.xpose.msra.mxu0 0
        %1887 = vmatprep.subr.bf16.mxu0 0
        %1888 = vmatpush2.bf16.xpose.msra.mxu0 0
        %1889 = vmatprep.subr.bf16.mxu0 0
        %1890 = vmatpush2.bf16.xpose.msra.mxu0 0
        %1891 = vmatprep.subr.bf16.mxu0 0
        %1892 = vmatpush2.bf16.xpose.msra.mxu0 0
        %1893 = vmatprep.subr.bf16.mxu0 0
        %1894 = vmatpush2.bf16.xpose.msra.mxu0 0
        %1895 = vmatprep.subr.bf16.mxu0 0
        %1896 = vmatpush2.bf16.xpose.msra.mxu0 0
        %1897 = vmatprep.subr.bf16.mxu0 0
        %1898 = vmatpush2.bf16.xpose.msra.mxu0 0
        %1899 = vmatprep.subr.bf16.mxu0 0
        %1900 = vmatpush2.bf16.xpose.msra.mxu0 0
        %1901 = vmatprep.mubr.bf16.mxu0 0
        %1902 = vmatmul.mubr.bf16.gmra.mxu0 %v1861
        %v1903 = vpop.f32.mrf.mxu0
        %v1904 = vadd.f32 0.0, %v1903
        %v1905 = vpop.f32.mrf.mxu0
        %v1906 = vpop.f32.mrf.mxu0
        %v1907 = vpop.f32.mrf.mxu0
        %1908 = vdwg.mxu0
        %v1909 = vsel %vm807, %v1904, -inf
        %1910 = vmax.xlane.f32.xlu0 %v1909
        %v1911 = vpop.xlane.xlu0 %1910
        %v1912 = vsub.f32 %v1904, %v1911
        %v1913 = vmul.f32 %v1912, 1.442695
        %v1914 = vpow.pop %v1913
        %v1915 = vsel %vm807, %v1914, 0.0
        %1916 = vadd.xlane.f32.xlu0 %v1915
        %v1917 = vpop.xlane.xlu0 %1916
        %v1918 = vrcp.pop %v1917
        %v1919 = vmul.f32 %v1914, %v1918
        %v1920 = vpack.c.bf16 %v1919, %v1919
        %1923 = vrot.lane.b32.xlu0 %v1736, 112
        %v1924 = vpop.permute.xlu0 %1923
        %1925 = vrot.lane.b32.xlu0 %v1737, 112
        %v1926 = vpop.permute.xlu0 %1925
        %v1930 = vsel %vm807, %v1920, 0
        %1932 = vmatprep.subr.bf16.mxu0 0
        %1933 = vmatpush1.bf16.msra.mxu0 0
        %1934 = vmatprep.subr.bf16.mxu0 0
        %1935 = vmatpush1.bf16.msra.mxu0 0
        %1936 = vmatprep.subr.bf16.mxu0 0
        %1937 = vmatpush1.bf16.msra.mxu0 0
        %1938 = vmatprep.subr.bf16.mxu0 0
        %1939 = vmatpush1.bf16.msra.mxu0 0
        %1940 = vmatprep.subr.bf16.mxu0 0
        %1941 = vmatpush1.bf16.msra.mxu0 0
        %1942 = vmatprep.subr.bf16.mxu0 0
        %1943 = vmatpush1.bf16.msra.mxu0 0
        %1944 = vmatprep.subr.bf16.mxu0 0
        %1945 = vmatpush1.bf16.msra.mxu0 %v1926
        %1946 = vmatprep.subr.bf16.mxu0 0
        %1947 = vmatpush1.bf16.msra.mxu0 %v1924
        %1948 = vmatprep.subr.bf16.mxu0 0
        %1949 = vmatpush2.bf16.msra.mxu0 0
        %1950 = vmatprep.subr.bf16.mxu0 0
        %1951 = vmatpush2.bf16.msra.mxu0 0
        %1952 = vmatprep.subr.bf16.mxu0 0
        %1953 = vmatpush2.bf16.msra.mxu0 0
        %1954 = vmatprep.subr.bf16.mxu0 0
        %1955 = vmatpush2.bf16.msra.mxu0 0
        %1956 = vmatprep.subr.bf16.mxu0 0
        %1957 = vmatpush2.bf16.msra.mxu0 0
        %1958 = vmatprep.subr.bf16.mxu0 0
        %1959 = vmatpush2.bf16.msra.mxu0 0
        %1960 = vmatprep.subr.bf16.mxu0 0
        %1961 = vmatpush2.bf16.msra.mxu0 0
        %1962 = vmatprep.subr.bf16.mxu0 0
        %1963 = vmatpush2.bf16.msra.mxu0 0
        %1964 = vmatprep.mubr.bf16.mxu0 0
        %1965 = vmatmul.mubr.bf16.gmra.mxu0 %v1930
        %v1966 = vpop.f32.mrf.mxu0
        %v1967 = vadd.f32 0.0, %v1966
        %v1968 = vpop.f32.mrf.mxu0
        %v1969 = vpop.f32.mrf.mxu0
        %v1970 = vpop.f32.mrf.mxu0
        %1971 = vdwg.mxu0
        %1972 = vrot.lane.b32.xlu0 %v1499, 96
        %v1973 = vpop.permute.xlu0 %1972
        %1974 = vrot.lane.b32.xlu0 %v1617, 96
        %v1975 = vpop.permute.xlu0 %1974
        %1976 = vrot.lane.b32.xlu0 %v1618, 96
        %v1977 = vpop.permute.xlu0 %1976
        %v1979 = vsel %vm1746, %v1973, 0
        %v1982 = vsel %vm1746, %v1975, 0
        %v1985 = vsel %vm1746, %v1977, 0
        %1987 = vmatprep.subr.bf16.mxu0 0
        %1988 = vmatpush1.bf16.xpose.msra.mxu0 0
        %1989 = vmatprep.subr.bf16.mxu0 0
        %1990 = vmatpush1.bf16.xpose.msra.mxu0 0
        %1991 = vmatprep.subr.bf16.mxu0 0
        %1992 = vmatpush1.bf16.xpose.msra.mxu0 0
        %1993 = vmatprep.subr.bf16.mxu0 0
        %1994 = vmatpush1.bf16.xpose.msra.mxu0 0
        %1995 = vmatprep.subr.bf16.mxu0 0
        %1996 = vmatpush1.bf16.xpose.msra.mxu0 0
        %1997 = vmatprep.subr.bf16.mxu0 0
        %1998 = vmatpush1.bf16.xpose.msra.mxu0 0
        %1999 = vmatprep.subr.bf16.mxu0 0
        %2000 = vmatpush1.bf16.xpose.msra.mxu0 %v1985
        %2001 = vmatprep.subr.bf16.mxu0 0
        %2002 = vmatpush1.bf16.xpose.msra.mxu0 %v1982
        %2003 = vmatprep.subr.bf16.mxu0 0
        %2004 = vmatpush2.bf16.xpose.msra.mxu0 0
        %2005 = vmatprep.subr.bf16.mxu0 0
        %2006 = vmatpush2.bf16.xpose.msra.mxu0 0
        %2007 = vmatprep.subr.bf16.mxu0 0
        %2008 = vmatpush2.bf16.xpose.msra.mxu0 0
        %2009 = vmatprep.subr.bf16.mxu0 0
        %2010 = vmatpush2.bf16.xpose.msra.mxu0 0
        %2011 = vmatprep.subr.bf16.mxu0 0
        %2012 = vmatpush2.bf16.xpose.msra.mxu0 0
        %2013 = vmatprep.subr.bf16.mxu0 0
        %2014 = vmatpush2.bf16.xpose.msra.mxu0 0
        %2015 = vmatprep.subr.bf16.mxu0 0
        %2016 = vmatpush2.bf16.xpose.msra.mxu0 0
        %2017 = vmatprep.subr.bf16.mxu0 0
        %2018 = vmatpush2.bf16.xpose.msra.mxu0 0
        %2019 = vmatprep.mubr.bf16.mxu0 0
        %2020 = vmatmul.mubr.bf16.gmra.mxu0 %v1979
        %v2021 = vpop.f32.mrf.mxu0
        %v2022 = vadd.f32 0.0, %v2021
        %v2023 = vpop.f32.mrf.mxu0
        %v2024 = vpop.f32.mrf.mxu0
        %v2025 = vpop.f32.mrf.mxu0
        %2026 = vdwg.mxu0
        %v2027 = vsel %vm807, %v2022, -inf
        %2028 = vmax.xlane.f32.xlu0 %v2027
        %v2029 = vpop.xlane.xlu0 %2028
        %v2030 = vsub.f32 %v2022, %v2029
        %v2031 = vmul.f32 %v2030, 1.442695
        %v2032 = vpow.pop %v2031
        %v2033 = vsel %vm807, %v2032, 0.0
        %2034 = vadd.xlane.f32.xlu0 %v2033
        %v2035 = vpop.xlane.xlu0 %2034
        %v2036 = vrcp.pop %v2035
        %v2037 = vmul.f32 %v2032, %v2036
        %v2038 = vpack.c.bf16 %v2037, %v2037
        %2039 = vrot.lane.b32.xlu0 %v1736, 96
        %v2040 = vpop.permute.xlu0 %2039
        %2041 = vrot.lane.b32.xlu0 %v1737, 96
        %v2042 = vpop.permute.xlu0 %2041
        %v2046 = vsel %vm807, %v2038, 0
        %2048 = vmatprep.subr.bf16.mxu0 0
        %2049 = vmatpush1.bf16.msra.mxu0 0
        %2050 = vmatprep.subr.bf16.mxu0 0
        %2051 = vmatpush1.bf16.msra.mxu0 0
        %2052 = vmatprep.subr.bf16.mxu0 0
        %2053 = vmatpush1.bf16.msra.mxu0 0
        %2054 = vmatprep.subr.bf16.mxu0 0
        %2055 = vmatpush1.bf16.msra.mxu0 0
        %2056 = vmatprep.subr.bf16.mxu0 0
        %2057 = vmatpush1.bf16.msra.mxu0 0
        %2058 = vmatprep.subr.bf16.mxu0 0
        %2059 = vmatpush1.bf16.msra.mxu0 0
        %2060 = vmatprep.subr.bf16.mxu0 0
        %2061 = vmatpush1.bf16.msra.mxu0 %v2042
        %2062 = vmatprep.subr.bf16.mxu0 0
        %2063 = vmatpush1.bf16.msra.mxu0 %v2040
        %2064 = vmatprep.subr.bf16.mxu0 0
        %2065 = vmatpush2.bf16.msra.mxu0 0
        %2066 = vmatprep.subr.bf16.mxu0 0
        %2067 = vmatpush2.bf16.msra.mxu0 0
        %2068 = vmatprep.subr.bf16.mxu0 0
        %2069 = vmatpush2.bf16.msra.mxu0 0
        %2070 = vmatprep.subr.bf16.mxu0 0
        %2071 = vmatpush2.bf16.msra.mxu0 0
        %2072 = vmatprep.subr.bf16.mxu0 0
        %2073 = vmatpush2.bf16.msra.mxu0 0
        %2074 = vmatprep.subr.bf16.mxu0 0
        %2075 = vmatpush2.bf16.msra.mxu0 0
        %2076 = vmatprep.subr.bf16.mxu0 0
        %2077 = vmatpush2.bf16.msra.mxu0 0
        %2078 = vmatprep.subr.bf16.mxu0 0
        %2079 = vmatpush2.bf16.msra.mxu0 0
        %2080 = vmatprep.mubr.bf16.mxu0 0
        %2081 = vmatmul.mubr.bf16.gmra.mxu0 %v2046
        %v2082 = vpop.f32.mrf.mxu0
        %v2083 = vadd.f32 0.0, %v2082
        %v2084 = vpop.f32.mrf.mxu0
        %v2085 = vpop.f32.mrf.mxu0
        %v2086 = vpop.f32.mrf.mxu0
        %2087 = vdwg.mxu0
        %2088 = vrot.lane.b32.xlu0 %v1499, 80
        %v2089 = vpop.permute.xlu0 %2088
        %2090 = vrot.lane.b32.xlu0 %v1617, 80
        %v2091 = vpop.permute.xlu0 %2090
        %2092 = vrot.lane.b32.xlu0 %v1618, 80
        %v2093 = vpop.permute.xlu0 %2092
        %v2095 = vsel %vm1746, %v2089, 0
        %v2098 = vsel %vm1746, %v2091, 0
        %v2101 = vsel %vm1746, %v2093, 0
        %2103 = vmatprep.subr.bf16.mxu0 0
        %2104 = vmatpush1.bf16.xpose.msra.mxu0 0
        %2105 = vmatprep.subr.bf16.mxu0 0
        %2106 = vmatpush1.bf16.xpose.msra.mxu0 0
        %2107 = vmatprep.subr.bf16.mxu0 0
        %2108 = vmatpush1.bf16.xpose.msra.mxu0 0
        %2109 = vmatprep.subr.bf16.mxu0 0
        %2110 = vmatpush1.bf16.xpose.msra.mxu0 0
        %2111 = vmatprep.subr.bf16.mxu0 0
        %2112 = vmatpush1.bf16.xpose.msra.mxu0 0
        %2113 = vmatprep.subr.bf16.mxu0 0
        %2114 = vmatpush1.bf16.xpose.msra.mxu0 0
        %2115 = vmatprep.subr.bf16.mxu0 0
        %2116 = vmatpush1.bf16.xpose.msra.mxu0 %v2101
        %2117 = vmatprep.subr.bf16.mxu0 0
        %2118 = vmatpush1.bf16.xpose.msra.mxu0 %v2098
        %2119 = vmatprep.subr.bf16.mxu0 0
        %2120 = vmatpush2.bf16.xpose.msra.mxu0 0
        %2121 = vmatprep.subr.bf16.mxu0 0
        %2122 = vmatpush2.bf16.xpose.msra.mxu0 0
        %2123 = vmatprep.subr.bf16.mxu0 0
        %2124 = vmatpush2.bf16.xpose.msra.mxu0 0
        %2125 = vmatprep.subr.bf16.mxu0 0
        %2126 = vmatpush2.bf16.xpose.msra.mxu0 0
        %2127 = vmatprep.subr.bf16.mxu0 0
        %2128 = vmatpush2.bf16.xpose.msra.mxu0 0
        %2129 = vmatprep.subr.bf16.mxu0 0
        %2130 = vmatpush2.bf16.xpose.msra.mxu0 0
        %2131 = vmatprep.subr.bf16.mxu0 0
        %2132 = vmatpush2.bf16.xpose.msra.mxu0 0
        %2133 = vmatprep.subr.bf16.mxu0 0
        %2134 = vmatpush2.bf16.xpose.msra.mxu0 0
        %2135 = vmatprep.mubr.bf16.mxu0 0
        %2136 = vmatmul.mubr.bf16.gmra.mxu0 %v2095
        %v2137 = vpop.f32.mrf.mxu0
        %v2138 = vadd.f32 0.0, %v2137
        %v2139 = vpop.f32.mrf.mxu0
        %v2140 = vpop.f32.mrf.mxu0
        %v2141 = vpop.f32.mrf.mxu0
        %2142 = vdwg.mxu0
        %v2143 = vsel %vm807, %v2138, -inf
        %2144 = vmax.xlane.f32.xlu0 %v2143
        %v2145 = vpop.xlane.xlu0 %2144
        %v2146 = vsub.f32 %v2138, %v2145
        %v2147 = vmul.f32 %v2146, 1.442695
        %v2148 = vpow.pop %v2147
        %v2149 = vsel %vm807, %v2148, 0.0
        %2150 = vadd.xlane.f32.xlu0 %v2149
        %v2151 = vpop.xlane.xlu0 %2150
        %v2152 = vrcp.pop %v2151
        %v2153 = vmul.f32 %v2148, %v2152
        %v2154 = vpack.c.bf16 %v2153, %v2153
        %2155 = vrot.lane.b32.xlu0 %v1736, 80
        %v2156 = vpop.permute.xlu0 %2155
        %2157 = vrot.lane.b32.xlu0 %v1737, 80
        %v2158 = vpop.permute.xlu0 %2157
        %v2162 = vsel %vm807, %v2154, 0
        %2164 = vmatprep.subr.bf16.mxu0 0
        %2165 = vmatpush1.bf16.msra.mxu0 0
        %2166 = vmatprep.subr.bf16.mxu0 0
        %2167 = vmatpush1.bf16.msra.mxu0 0
        %2168 = vmatprep.subr.bf16.mxu0 0
        %2169 = vmatpush1.bf16.msra.mxu0 0
        %2170 = vmatprep.subr.bf16.mxu0 0
        %2171 = vmatpush1.bf16.msra.mxu0 0
        %2172 = vmatprep.subr.bf16.mxu0 0
        %2173 = vmatpush1.bf16.msra.mxu0 0
        %2174 = vmatprep.subr.bf16.mxu0 0
        %2175 = vmatpush1.bf16.msra.mxu0 0
        %2176 = vmatprep.subr.bf16.mxu0 0
        %2177 = vmatpush1.bf16.msra.mxu0 %v2158
        %2178 = vmatprep.subr.bf16.mxu0 0
        %2179 = vmatpush1.bf16.msra.mxu0 %v2156
        %2180 = vmatprep.subr.bf16.mxu0 0
        %2181 = vmatpush2.bf16.msra.mxu0 0
        %2182 = vmatprep.subr.bf16.mxu0 0
        %2183 = vmatpush2.bf16.msra.mxu0 0
        %2184 = vmatprep.subr.bf16.mxu0 0
        %2185 = vmatpush2.bf16.msra.mxu0 0
        %2186 = vmatprep.subr.bf16.mxu0 0
        %2187 = vmatpush2.bf16.msra.mxu0 0
        %2188 = vmatprep.subr.bf16.mxu0 0
        %2189 = vmatpush2.bf16.msra.mxu0 0
        %2190 = vmatprep.subr.bf16.mxu0 0
        %2191 = vmatpush2.bf16.msra.mxu0 0
        %2192 = vmatprep.subr.bf16.mxu0 0
        %2193 = vmatpush2.bf16.msra.mxu0 0
        %2194 = vmatprep.subr.bf16.mxu0 0
        %2195 = vmatpush2.bf16.msra.mxu0 0
        %2196 = vmatprep.mubr.bf16.mxu0 0
        %2197 = vmatmul.mubr.bf16.gmra.mxu0 %v2162
        %v2198 = vpop.f32.mrf.mxu0
        %v2199 = vadd.f32 0.0, %v2198
        %v2200 = vpop.f32.mrf.mxu0
        %v2201 = vpop.f32.mrf.mxu0
        %v2202 = vpop.f32.mrf.mxu0
        %2203 = vdwg.mxu0
        %2205 = vrot.lane.b32.xlu0 %v1967, 16
        %v2206 = vpop.permute.xlu0 %2205
        %2209 = vrot.lane.b32.xlu0 %v2083, 32
        %v2210 = vpop.permute.xlu0 %2209
        %2213 = vrot.lane.b32.xlu0 %v2199, 48
        %v2214 = vpop.permute.xlu0 %2213
        %v2216 = vsel %vm1746, %v1846, %v2206
        %v2217 = vsel %vm807, %v2216, %v2210
        %vm2218 = vcmask 392192
        %v2219 = vsel %vm2218, %v2217, %v2214
        %v2220 = vpack.c.bf16 %v2219, %v2219
        %v2221 = vlaneseq
        %v2222 = vshrl.u32 %v2221, 7
        %v2223 = vsub.s32 7, %v2222
        %v2224 = vrot.slane %v515, %v2223
        %v2233 = vunpack.c.l.b16 %v1738
        %v2234 = vunpack.c.l.b16 %v1739
        %v2235 = vunpack.c.l.b16 %v1740
        %v2236 = vunpack.c.l.b16 %v1741
        %v2237 = vunpack.c.l.b16 %v1742
        %v2238 = vunpack.c.l.b16 %v1743
        %v2239 = vunpack.c.l.b16 %v1744
        %v2240 = vunpack.c.l.b16 %v1745
        %v2241 = vpack.c.b16 %v2234, %v2233
        %v2242 = vpack.c.b16 %v2236, %v2235
        %v2243 = vpack.c.b16 %v2238, %v2237
        %v2244 = vpack.c.b16 %v2240, %v2239
        %v2250 = vsel %vm1260, %v2220, 0
        %2252 = vmatprep.subr.bf16.mxu0 0
        %2253 = vmatpush1.bf16.msra.mxu0 0
        %2254 = vmatprep.subr.bf16.mxu0 0
        %2255 = vmatpush1.bf16.msra.mxu0 0
        %2256 = vmatprep.subr.bf16.mxu0 0
        %2257 = vmatpush1.bf16.msra.mxu0 0
        %2258 = vmatprep.subr.bf16.mxu0 0
        %2259 = vmatpush1.bf16.msra.mxu0 0
        %2260 = vmatprep.subr.bf16.mxu0 0
        %2261 = vmatpush1.bf16.msra.mxu0 %v2244
        %2262 = vmatprep.subr.bf16.mxu0 0
        %2263 = vmatpush1.bf16.msra.mxu0 %v2243
        %2264 = vmatprep.subr.bf16.mxu0 0
        %2265 = vmatpush1.bf16.msra.mxu0 %v2242
        %2266 = vmatprep.subr.bf16.mxu0 0
        %2267 = vmatpush1.bf16.msra.mxu0 %v2241
        %2268 = vmatprep.subr.bf16.mxu0 0
        %2269 = vmatpush2.bf16.msra.mxu0 0
        %2270 = vmatprep.subr.bf16.mxu0 0
        %2271 = vmatpush2.bf16.msra.mxu0 0
        %2272 = vmatprep.subr.bf16.mxu0 0
        %2273 = vmatpush2.bf16.msra.mxu0 0
        %2274 = vmatprep.subr.bf16.mxu0 0
        %2275 = vmatpush2.bf16.msra.mxu0 0
        %2276 = vmatprep.subr.bf16.mxu0 0
        %2277 = vmatpush2.bf16.msra.mxu0 0
        %2278 = vmatprep.subr.bf16.mxu0 0
        %2279 = vmatpush2.bf16.msra.mxu0 0
        %2280 = vmatprep.subr.bf16.mxu0 0
        %2281 = vmatpush2.bf16.msra.mxu0 0
        %2282 = vmatprep.subr.bf16.mxu0 0
        %2283 = vmatpush2.bf16.msra.mxu0 0
        %2284 = vmatprep.mubr.bf16.mxu0 0
        %2285 = vmatmul.mubr.bf16.gmra.mxu0 %v2250
        %v2286 = vpop.f32.mrf.mxu0
        %v2287 = vadd.f32 %v2224, %v2286
        %v2288 = vpop.f32.mrf.mxu0
        %v2289 = vpop.f32.mrf.mxu0
        %v2290 = vpop.f32.mrf.mxu0
        %2291 = vdwg.mxu0
        %v2292 = vadd.f32 %v1379, %v2287
        %2293 = vadd.xlane.f32.xlu0 %v2292
        %v2294 = vpop.xlane.xlu0 %2293
        %v2295 = vmul.f32 %v2294, %v1360
        %v2296 = vsub.f32 %v2292, %v2295
        %v2297 = vmul.f32 %v2296, %v2296
        %2298 = vadd.xlane.f32.xlu0 %v2297
        %v2299 = vpop.xlane.xlu0 %2298
        %v2300 = vmul.f32 %v2299, %v1360
        %v2301 = vadd.f32 %v2300, 1e-05
        %v2302 = vrsqrt.pop %v2301
        %v2303 = vmul.f32 %v2296, %v2302
        %v2304 = vlaneseq
        %v2305 = vshrl.u32 %v2304, 7
        %v2306 = vsub.s32 0, %v2305
        %v2307 = vrot.slane %v518, %v2306
        %v2308 = vmul.f32 %v2303, %v2307
        %v2309 = vlaneseq
        %v2310 = vshrl.u32 %v2309, 7
        %v2311 = vsub.s32 1, %v2310
        %v2312 = vrot.slane %v518, %v2311
        %v2313 = vadd.f32 %v2308, %v2312
        %v2314 = vpack.c.bf16 %v2313, %v2313
        %v2315 = vld [vmem:[%s7] sm:$0xff]
        %v2316 = vld [vmem:[%s7 + $0x8] sm:$0xff]
        %v2317 = vld [vmem:[%s7 + $0x10] sm:$0xff]
        %v2318 = vld [vmem:[%s7 + $0x18] sm:$0xff]
        %v2319 = vld [vmem:[%s7 + $0x20] sm:$0xff]
        %v2320 = vld [vmem:[%s7 + $0x28] sm:$0xff]
        %v2321 = vld [vmem:[%s7 + $0x30] sm:$0xff]
        %v2322 = vld [vmem:[%s7 + $0x38] sm:$0xff]
        %v2323 = vld [vmem:[%s7 + $0x40] sm:$0xff]
        %v2324 = vld [vmem:[%s7 + $0x48] sm:$0xff]
        %v2325 = vld [vmem:[%s7 + $0x50] sm:$0xff]
        %v2326 = vld [vmem:[%s7 + $0x58] sm:$0xff]
        %v2327 = vld [vmem:[%s7 + $0x60] sm:$0xff]
        %v2328 = vld [vmem:[%s7 + $0x68] sm:$0xff]
        %v2329 = vld [vmem:[%s7 + $0x70] sm:$0xff]
        %v2330 = vld [vmem:[%s7 + $0x78] sm:$0xff]
        %v2331 = vlaneseq
        %v2332 = vshrl.u32 %v2331, 7
        %v2333 = vsub.s32 4, %v2332
        %v2334 = vrot.slane %v516, %v2333
        %v2335 = vlaneseq
        %v2336 = vshrl.u32 %v2335, 7
        %v2337 = vsub.s32 4, %v2336
        %v2338 = vrot.slane %v517, %v2337
        %v2355 = vunpack.c.l.b16 %v2315
        %v2356 = vunpack.c.h.b16 %v2315
        %v2357 = vunpack.c.l.b16 %v2316
        %v2358 = vunpack.c.h.b16 %v2316
        %v2359 = vunpack.c.l.b16 %v2317
        %v2360 = vunpack.c.h.b16 %v2317
        %v2361 = vunpack.c.l.b16 %v2318
        %v2362 = vunpack.c.h.b16 %v2318
        %v2363 = vunpack.c.l.b16 %v2319
        %v2364 = vunpack.c.h.b16 %v2319
        %v2365 = vunpack.c.l.b16 %v2320
        %v2366 = vunpack.c.h.b16 %v2320
        %v2367 = vunpack.c.l.b16 %v2321
        %v2368 = vunpack.c.h.b16 %v2321
        %v2369 = vunpack.c.l.b16 %v2322
        %v2370 = vunpack.c.h.b16 %v2322
        %v2371 = vunpack.c.l.b16 %v2323
        %v2372 = vunpack.c.h.b16 %v2323
        %v2373 = vunpack.c.l.b16 %v2324
        %v2374 = vunpack.c.h.b16 %v2324
        %v2375 = vunpack.c.l.b16 %v2325
        %v2376 = vunpack.c.h.b16 %v2325
        %v2377 = vunpack.c.l.b16 %v2326
        %v2378 = vunpack.c.h.b16 %v2326
        %v2379 = vunpack.c.l.b16 %v2327
        %v2380 = vunpack.c.h.b16 %v2327
        %v2381 = vunpack.c.l.b16 %v2328
        %v2382 = vunpack.c.h.b16 %v2328
        %v2383 = vunpack.c.l.b16 %v2329
        %v2384 = vunpack.c.h.b16 %v2329
        %v2385 = vunpack.c.l.b16 %v2330
        %v2386 = vunpack.c.h.b16 %v2330
        %v2387 = vpack.c.b16 %v2357, %v2355
        %v2388 = vpack.c.b16 %v2358, %v2356
        %v2389 = vpack.c.b16 %v2361, %v2359
        %v2390 = vpack.c.b16 %v2362, %v2360
        %v2391 = vpack.c.b16 %v2365, %v2363
        %v2392 = vpack.c.b16 %v2366, %v2364
        %v2393 = vpack.c.b16 %v2369, %v2367
        %v2394 = vpack.c.b16 %v2370, %v2368
        %v2395 = vpack.c.b16 %v2373, %v2371
        %v2396 = vpack.c.b16 %v2374, %v2372
        %v2397 = vpack.c.b16 %v2377, %v2375
        %v2398 = vpack.c.b16 %v2378, %v2376
        %v2399 = vpack.c.b16 %v2381, %v2379
        %v2400 = vpack.c.b16 %v2382, %v2380
        %v2401 = vpack.c.b16 %v2385, %v2383
        %v2402 = vpack.c.b16 %v2386, %v2384
        %2419 = vmatprep.subr.bf16.mxu0 %v2402
        %2420 = vmatpush1.bf16.msra.mxu0 %v2401
        %2421 = vmatprep.subr.bf16.mxu0 %v2400
        %2422 = vmatpush1.bf16.msra.mxu0 %v2399
        %2423 = vmatprep.subr.bf16.mxu0 %v2398
        %2424 = vmatpush1.bf16.msra.mxu0 %v2397
        %2425 = vmatprep.subr.bf16.mxu0 %v2396
        %2426 = vmatpush1.bf16.msra.mxu0 %v2395
        %2427 = vmatprep.subr.bf16.mxu0 %v2394
        %2428 = vmatpush1.bf16.msra.mxu0 %v2393
        %2429 = vmatprep.subr.bf16.mxu0 %v2392
        %2430 = vmatpush1.bf16.msra.mxu0 %v2391
        %2431 = vmatprep.subr.bf16.mxu0 %v2390
        %2432 = vmatpush1.bf16.msra.mxu0 %v2389
        %2433 = vmatprep.subr.bf16.mxu0 %v2388
        %2434 = vmatpush1.bf16.msra.mxu0 %v2387
        %2435 = vmatprep.subr.bf16.mxu0 0
        %2436 = vmatpush2.bf16.msra.mxu0 0
        %2437 = vmatprep.subr.bf16.mxu0 0
        %2438 = vmatpush2.bf16.msra.mxu0 0
        %2439 = vmatprep.subr.bf16.mxu0 0
        %2440 = vmatpush2.bf16.msra.mxu0 0
        %2441 = vmatprep.subr.bf16.mxu0 0
        %2442 = vmatpush2.bf16.msra.mxu0 0
        %2443 = vmatprep.subr.bf16.mxu0 0
        %2444 = vmatpush2.bf16.msra.mxu0 0
        %2445 = vmatprep.subr.bf16.mxu0 0
        %2446 = vmatpush2.bf16.msra.mxu0 0
        %2447 = vmatprep.subr.bf16.mxu0 0
        %2448 = vmatpush2.bf16.msra.mxu0 0
        %2449 = vmatprep.subr.bf16.mxu0 0
        %2450 = vmatpush2.bf16.msra.mxu0 0
        %2451 = vmatprep.mubr.bf16.mxu0 0
        %2452 = vmatmul.mubr.bf16.gmra.mxu0 %v2314
        %v2453 = vpop.f32.mrf.mxu0
        %v2454 = vadd.f32 %v2334, %v2453
        %v2455 = vpop.f32.mrf.mxu0
        %v2456 = vadd.f32 %v2338, %v2455
        %v2457 = vpop.f32.mrf.mxu0
        %v2458 = vpop.f32.mrf.mxu0
        %2459 = vdwg.mxu0
        %v2460 = vmax.f32 %v2454, 0.0
        %v2461 = vmax.f32 %v2456, 0.0
        %v2462 = vpack.c.bf16 %v2460, %v2460
        %v2463 = vpack.c.bf16 %v2461, %v2461
        %v2464 = vld [vmem:[%s6 + $0x80] sm:$0xf]
        %v2465 = vld [vmem:[%s6 + $0x84] sm:$0xf]
        %v2466 = vld [vmem:[%s6 + $0x88] sm:$0xf]
        %v2467 = vld [vmem:[%s6 + $0x8c] sm:$0xf]
        %v2468 = vld [vmem:[%s6 + $0x90] sm:$0xf]
        %v2469 = vld [vmem:[%s6 + $0x94] sm:$0xf]
        %v2470 = vld [vmem:[%s6 + $0x98] sm:$0xf]
        %v2471 = vld [vmem:[%s6 + $0x9c] sm:$0xf]
        %v2472 = vld [vmem:[%s6 + $0xa0] sm:$0xf]
        %v2473 = vld [vmem:[%s6 + $0xa4] sm:$0xf]
        %v2474 = vld [vmem:[%s6 + $0xa8] sm:$0xf]
        %v2475 = vld [vmem:[%s6 + $0xac] sm:$0xf]
        %v2476 = vld [vmem:[%s6 + $0xb0] sm:$0xf]
        %v2477 = vld [vmem:[%s6 + $0xb4] sm:$0xf]
        %v2478 = vld [vmem:[%s6 + $0xb8] sm:$0xf]
        %v2479 = vld [vmem:[%s6 + $0xbc] sm:$0xf]
        %v2480 = vld [vmem:[%s6 + $0xc0] sm:$0xf]
        %v2481 = vld [vmem:[%s6 + $0xc4] sm:$0xf]
        %v2482 = vld [vmem:[%s6 + $0xc8] sm:$0xf]
        %v2483 = vld [vmem:[%s6 + $0xcc] sm:$0xf]
        %v2484 = vld [vmem:[%s6 + $0xd0] sm:$0xf]
        %v2485 = vld [vmem:[%s6 + $0xd4] sm:$0xf]
        %v2486 = vld [vmem:[%s6 + $0xd8] sm:$0xf]
        %v2487 = vld [vmem:[%s6 + $0xdc] sm:$0xf]
        %v2488 = vld [vmem:[%s6 + $0xe0] sm:$0xf]
        %v2489 = vld [vmem:[%s6 + $0xe4] sm:$0xf]
        %v2490 = vld [vmem:[%s6 + $0xe8] sm:$0xf]
        %v2491 = vld [vmem:[%s6 + $0xec] sm:$0xf]
        %v2492 = vld [vmem:[%s6 + $0xf0] sm:$0xf]
        %v2493 = vld [vmem:[%s6 + $0xf4] sm:$0xf]
        %v2494 = vld [vmem:[%s6 + $0xf8] sm:$0xf]
        %v2495 = vld [vmem:[%s6 + $0xfc] sm:$0xf]
        %v2496 = vlaneseq
        %v2497 = vshrl.u32 %v2496, 7
        %v2498 = vsub.s32 5, %v2497
        %v2499 = vrot.slane %v516, %v2498
        %v2532 = vunpack.c.l.b16 %v2464
        %v2533 = vunpack.c.l.b16 %v2465
        %v2534 = vunpack.c.l.b16 %v2466
        %v2535 = vunpack.c.l.b16 %v2467
        %v2536 = vunpack.c.l.b16 %v2468
        %v2537 = vunpack.c.l.b16 %v2469
        %v2538 = vunpack.c.l.b16 %v2470
        %v2539 = vunpack.c.l.b16 %v2471
        %v2540 = vunpack.c.l.b16 %v2472
        %v2541 = vunpack.c.l.b16 %v2473
        %v2542 = vunpack.c.l.b16 %v2474
        %v2543 = vunpack.c.l.b16 %v2475
        %v2544 = vunpack.c.l.b16 %v2476
        %v2545 = vunpack.c.l.b16 %v2477
        %v2546 = vunpack.c.l.b16 %v2478
        %v2547 = vunpack.c.l.b16 %v2479
        %v2548 = vunpack.c.l.b16 %v2480
        %v2549 = vunpack.c.l.b16 %v2481
        %v2550 = vunpack.c.l.b16 %v2482
        %v2551 = vunpack.c.l.b16 %v2483
        %v2552 = vunpack.c.l.b16 %v2484
        %v2553 = vunpack.c.l.b16 %v2485
        %v2554 = vunpack.c.l.b16 %v2486
        %v2555 = vunpack.c.l.b16 %v2487
        %v2556 = vunpack.c.l.b16 %v2488
        %v2557 = vunpack.c.l.b16 %v2489
        %v2558 = vunpack.c.l.b16 %v2490
        %v2559 = vunpack.c.l.b16 %v2491
        %v2560 = vunpack.c.l.b16 %v2492
        %v2561 = vunpack.c.l.b16 %v2493
        %v2562 = vunpack.c.l.b16 %v2494
        %v2563 = vunpack.c.l.b16 %v2495
        %v2564 = vpack.c.b16 %v2533, %v2532
        %v2565 = vpack.c.b16 %v2535, %v2534
        %v2566 = vpack.c.b16 %v2537, %v2536
        %v2567 = vpack.c.b16 %v2539, %v2538
        %v2568 = vpack.c.b16 %v2541, %v2540
        %v2569 = vpack.c.b16 %v2543, %v2542
        %v2570 = vpack.c.b16 %v2545, %v2544
        %v2571 = vpack.c.b16 %v2547, %v2546
        %v2572 = vpack.c.b16 %v2549, %v2548
        %v2573 = vpack.c.b16 %v2551, %v2550
        %v2574 = vpack.c.b16 %v2553, %v2552
        %v2575 = vpack.c.b16 %v2555, %v2554
        %v2576 = vpack.c.b16 %v2557, %v2556
        %v2577 = vpack.c.b16 %v2559, %v2558
        %v2578 = vpack.c.b16 %v2561, %v2560
        %v2579 = vpack.c.b16 %v2563, %v2562
        %2596 = vmatprep.subr.bf16.mxu0 0
        %2597 = vmatpush1.bf16.msra.mxu0 %v2571
        %2598 = vmatprep.subr.bf16.mxu0 0
        %2599 = vmatpush1.bf16.msra.mxu0 %v2570
        %2600 = vmatprep.subr.bf16.mxu0 0
        %2601 = vmatpush1.bf16.msra.mxu0 %v2569
        %2602 = vmatprep.subr.bf16.mxu0 0
        %2603 = vmatpush1.bf16.msra.mxu0 %v2568
        %2604 = vmatprep.subr.bf16.mxu0 0
        %2605 = vmatpush1.bf16.msra.mxu0 %v2567
        %2606 = vmatprep.subr.bf16.mxu0 0
        %2607 = vmatpush1.bf16.msra.mxu0 %v2566
        %2608 = vmatprep.subr.bf16.mxu0 0
        %2609 = vmatpush1.bf16.msra.mxu0 %v2565
        %2610 = vmatprep.subr.bf16.mxu0 0
        %2611 = vmatpush1.bf16.msra.mxu0 %v2564
        %2612 = vmatprep.subr.bf16.mxu0 0
        %2613 = vmatpush2.bf16.msra.mxu0 %v2579
        %2614 = vmatprep.subr.bf16.mxu0 0
        %2615 = vmatpush2.bf16.msra.mxu0 %v2578
        %2616 = vmatprep.subr.bf16.mxu0 0
        %2617 = vmatpush2.bf16.msra.mxu0 %v2577
        %2618 = vmatprep.subr.bf16.mxu0 0
        %2619 = vmatpush2.bf16.msra.mxu0 %v2576
        %2620 = vmatprep.subr.bf16.mxu0 0
        %2621 = vmatpush2.bf16.msra.mxu0 %v2575
        %2622 = vmatprep.subr.bf16.mxu0 0
        %2623 = vmatpush2.bf16.msra.mxu0 %v2574
        %2624 = vmatprep.subr.bf16.mxu0 0
        %2625 = vmatpush2.bf16.msra.mxu0 %v2573
        %2626 = vmatprep.subr.bf16.mxu0 0
        %2627 = vmatpush2.bf16.msra.mxu0 %v2572
        %2628 = vmatprep.mubr.bf16.mxu0 %v2463
        %2629 = vmatmul.mubr.bf16.gmra.mxu0 %v2462
        %v2630 = vpop.f32.mrf.mxu0
        %v2631 = vadd.f32 %v2499, %v2630
        %v2632 = vpop.f32.mrf.mxu0
        %v2633 = vpop.f32.mrf.mxu0
        %v2634 = vpop.f32.mrf.mxu0
        %2635 = vdwg.mxu0
        %v2636 = vadd.f32 %v2313, %v2631
        %2637 = vadd.xlane.f32.xlu0 %v2636
        %v2638 = vpop.xlane.xlu0 %2637
        %v2639 = vmul.f32 %v2638, %v1360
        %v2640 = vsub.f32 %v2636, %v2639
        %v2641 = vmul.f32 %v2640, %v2640
        %2642 = vadd.xlane.f32.xlu0 %v2641
        %v2643 = vpop.xlane.xlu0 %2642
        %v2644 = vmul.f32 %v2643, %v1360
        %v2645 = vadd.f32 %v2644, 1e-05
        %v2646 = vrsqrt.pop %v2645
        %v2647 = vmul.f32 %v2640, %v2646
        %v2648 = vlaneseq
        %v2649 = vshrl.u32 %v2648, 7
        %v2650 = vsub.s32 2, %v2649
        %v2651 = vrot.slane %v518, %v2650
        %v2652 = vmul.f32 %v2647, %v2651
        %v2653 = vlaneseq
        %v2654 = vshrl.u32 %v2653, 7
        %v2655 = vsub.s32 3, %v2654
        %v2656 = vrot.slane %v518, %v2655
        %v2657 = vadd.f32 %v2652, %v2656
        %v2658 = vadd.f32 %v2657, %v524
        %v2659 = vpack.c.bf16 %v2658, %v2658
        %v2660 = vld [vmem:[%s5 + $0xc0] sm:$0xf]
        %v2661 = vld [vmem:[%s5 + $0xc4] sm:$0xf]
        %v2662 = vld [vmem:[%s5 + $0xc8] sm:$0xf]
        %v2663 = vld [vmem:[%s5 + $0xcc] sm:$0xf]
        %v2664 = vld [vmem:[%s5 + $0xd0] sm:$0xf]
        %v2665 = vld [vmem:[%s5 + $0xd4] sm:$0xf]
        %v2666 = vld [vmem:[%s5 + $0xd8] sm:$0xf]
        %v2667 = vld [vmem:[%s5 + $0xdc] sm:$0xf]
        %v2668 = vld [vmem:[%s5 + $0xe0] sm:$0xf]
        %v2669 = vld [vmem:[%s5 + $0xe4] sm:$0xf]
        %v2670 = vld [vmem:[%s5 + $0xe8] sm:$0xf]
        %v2671 = vld [vmem:[%s5 + $0xec] sm:$0xf]
        %v2672 = vld [vmem:[%s5 + $0xf0] sm:$0xf]
        %v2673 = vld [vmem:[%s5 + $0xf4] sm:$0xf]
        %v2674 = vld [vmem:[%s5 + $0xf8] sm:$0xf]
        %v2675 = vld [vmem:[%s5 + $0xfc] sm:$0xf]
        %v2676 = vlaneseq
        %v2677 = vshrl.u32 %v2676, 7
        %v2678 = vsub.s32 0, %v2677
        %v2679 = vrot.slane %v516, %v2678
        %v2696 = vunpack.c.l.b16 %v2660
        %v2697 = vunpack.c.l.b16 %v2661
        %v2698 = vunpack.c.l.b16 %v2662
        %v2699 = vunpack.c.l.b16 %v2663
        %v2700 = vunpack.c.l.b16 %v2664
        %v2701 = vunpack.c.l.b16 %v2665
        %v2702 = vunpack.c.l.b16 %v2666
        %v2703 = vunpack.c.l.b16 %v2667
        %v2704 = vunpack.c.l.b16 %v2668
        %v2705 = vunpack.c.l.b16 %v2669
        %v2706 = vunpack.c.l.b16 %v2670
        %v2707 = vunpack.c.l.b16 %v2671
        %v2708 = vunpack.c.l.b16 %v2672
        %v2709 = vunpack.c.l.b16 %v2673
        %v2710 = vunpack.c.l.b16 %v2674
        %v2711 = vunpack.c.l.b16 %v2675
        %v2712 = vpack.c.b16 %v2697, %v2696
        %v2713 = vpack.c.b16 %v2699, %v2698
        %v2714 = vpack.c.b16 %v2701, %v2700
        %v2715 = vpack.c.b16 %v2703, %v2702
        %v2716 = vpack.c.b16 %v2705, %v2704
        %v2717 = vpack.c.b16 %v2707, %v2706
        %v2718 = vpack.c.b16 %v2709, %v2708
        %v2719 = vpack.c.b16 %v2711, %v2710
        %2728 = vmatprep.subr.bf16.mxu0 0
        %2729 = vmatpush1.bf16.msra.mxu0 %v2719
        %2730 = vmatprep.subr.bf16.mxu0 0
        %2731 = vmatpush1.bf16.msra.mxu0 %v2718
        %2732 = vmatprep.subr.bf16.mxu0 0
        %2733 = vmatpush1.bf16.msra.mxu0 %v2717
        %2734 = vmatprep.subr.bf16.mxu0 0
        %2735 = vmatpush1.bf16.msra.mxu0 %v2716
        %2736 = vmatprep.subr.bf16.mxu0 0
        %2737 = vmatpush1.bf16.msra.mxu0 %v2715
        %2738 = vmatprep.subr.bf16.mxu0 0
        %2739 = vmatpush1.bf16.msra.mxu0 %v2714
        %2740 = vmatprep.subr.bf16.mxu0 0
        %2741 = vmatpush1.bf16.msra.mxu0 %v2713
        %2742 = vmatprep.subr.bf16.mxu0 0
        %2743 = vmatpush1.bf16.msra.mxu0 %v2712
        %2744 = vmatprep.subr.bf16.mxu0 0
        %2745 = vmatpush2.bf16.msra.mxu0 0
        %2746 = vmatprep.subr.bf16.mxu0 0
        %2747 = vmatpush2.bf16.msra.mxu0 0
        %2748 = vmatprep.subr.bf16.mxu0 0
        %2749 = vmatpush2.bf16.msra.mxu0 0
        %2750 = vmatprep.subr.bf16.mxu0 0
        %2751 = vmatpush2.bf16.msra.mxu0 0
        %2752 = vmatprep.subr.bf16.mxu0 0
        %2753 = vmatpush2.bf16.msra.mxu0 0
        %2754 = vmatprep.subr.bf16.mxu0 0
        %2755 = vmatpush2.bf16.msra.mxu0 0
        %2756 = vmatprep.subr.bf16.mxu0 0
        %2757 = vmatpush2.bf16.msra.mxu0 0
        %2758 = vmatprep.subr.bf16.mxu0 0
        %2759 = vmatpush2.bf16.msra.mxu0 0
        %2760 = vmatprep.mubr.bf16.mxu0 0
        %2761 = vmatmul.mubr.bf16.gmra.mxu0 %v1384
        %v2762 = vpop.f32.mrf.mxu0
        %v2763 = vadd.f32 %v2679, %v2762
        %v2764 = vpop.f32.mrf.mxu0
        %v2765 = vpop.f32.mrf.mxu0
        %v2766 = vadd.f32 %v2679, %v2765
        %v2767 = vpop.f32.mrf.mxu0
        %2768 = vmatprep.mubr.bf16.mxu0 0
        %2769 = vmatmul.mubr.bf16.gmra.mxu0 %v1385
        %v2770 = vpop.f32.mrf.mxu0
        %v2771 = vadd.f32 %v2679, %v2770
        %v2772 = vpop.f32.mrf.mxu0
        %v2773 = vpop.f32.mrf.mxu0
        %v2774 = vadd.f32 %v2679, %v2773
        %v2775 = vpop.f32.mrf.mxu0
        %2776 = vdwg.mxu0
        %v2777 = vmul.f32 %v2763, 0.25
        %v2778 = vmul.f32 %v2766, 0.25
        %v2779 = vmul.f32 %v2771, 0.25
        %v2780 = vmul.f32 %v2774, 0.25
        %v2781 = vpack.c.bf16 %v2778, %v2777
        %v2782 = vpack.c.bf16 %v2780, %v2779
        %v2783 = vld [vmem:[%s5 + $0x100] sm:$0xf]
        %v2784 = vld [vmem:[%s5 + $0x104] sm:$0xf]
        %v2785 = vld [vmem:[%s5 + $0x108] sm:$0xf]
        %v2786 = vld [vmem:[%s5 + $0x10c] sm:$0xf]
        %v2787 = vld [vmem:[%s5 + $0x110] sm:$0xf]
        %v2788 = vld [vmem:[%s5 + $0x114] sm:$0xf]
        %v2789 = vld [vmem:[%s5 + $0x118] sm:$0xf]
        %v2790 = vld [vmem:[%s5 + $0x11c] sm:$0xf]
        %v2791 = vld [vmem:[%s5 + $0x120] sm:$0xf]
        %v2792 = vld [vmem:[%s5 + $0x124] sm:$0xf]
        %v2793 = vld [vmem:[%s5 + $0x128] sm:$0xf]
        %v2794 = vld [vmem:[%s5 + $0x12c] sm:$0xf]
        %v2795 = vld [vmem:[%s5 + $0x130] sm:$0xf]
        %v2796 = vld [vmem:[%s5 + $0x134] sm:$0xf]
        %v2797 = vld [vmem:[%s5 + $0x138] sm:$0xf]
        %v2798 = vld [vmem:[%s5 + $0x13c] sm:$0xf]
        %v2799 = vlaneseq
        %v2800 = vshrl.u32 %v2799, 7
        %v2801 = vsub.s32 1, %v2800
        %v2802 = vrot.slane %v516, %v2801
        %v2819 = vunpack.c.l.b16 %v2783
        %v2820 = vunpack.c.l.b16 %v2784
        %v2821 = vunpack.c.l.b16 %v2785
        %v2822 = vunpack.c.l.b16 %v2786
        %v2823 = vunpack.c.l.b16 %v2787
        %v2824 = vunpack.c.l.b16 %v2788
        %v2825 = vunpack.c.l.b16 %v2789
        %v2826 = vunpack.c.l.b16 %v2790
        %v2827 = vunpack.c.l.b16 %v2791
        %v2828 = vunpack.c.l.b16 %v2792
        %v2829 = vunpack.c.l.b16 %v2793
        %v2830 = vunpack.c.l.b16 %v2794
        %v2831 = vunpack.c.l.b16 %v2795
        %v2832 = vunpack.c.l.b16 %v2796
        %v2833 = vunpack.c.l.b16 %v2797
        %v2834 = vunpack.c.l.b16 %v2798
        %v2835 = vpack.c.b16 %v2820, %v2819
        %v2836 = vpack.c.b16 %v2822, %v2821
        %v2837 = vpack.c.b16 %v2824, %v2823
        %v2838 = vpack.c.b16 %v2826, %v2825
        %v2839 = vpack.c.b16 %v2828, %v2827
        %v2840 = vpack.c.b16 %v2830, %v2829
        %v2841 = vpack.c.b16 %v2832, %v2831
        %v2842 = vpack.c.b16 %v2834, %v2833
        %2851 = vmatprep.subr.bf16.mxu0 0
        %2852 = vmatpush1.bf16.msra.mxu0 %v2842
        %2853 = vmatprep.subr.bf16.mxu0 0
        %2854 = vmatpush1.bf16.msra.mxu0 %v2841
        %2855 = vmatprep.subr.bf16.mxu0 0
        %2856 = vmatpush1.bf16.msra.mxu0 %v2840
        %2857 = vmatprep.subr.bf16.mxu0 0
        %2858 = vmatpush1.bf16.msra.mxu0 %v2839
        %2859 = vmatprep.subr.bf16.mxu0 0
        %2860 = vmatpush1.bf16.msra.mxu0 %v2838
        %2861 = vmatprep.subr.bf16.mxu0 0
        %2862 = vmatpush1.bf16.msra.mxu0 %v2837
        %2863 = vmatprep.subr.bf16.mxu0 0
        %2864 = vmatpush1.bf16.msra.mxu0 %v2836
        %2865 = vmatprep.subr.bf16.mxu0 0
        %2866 = vmatpush1.bf16.msra.mxu0 %v2835
        %2867 = vmatprep.subr.bf16.mxu0 0
        %2868 = vmatpush2.bf16.msra.mxu0 0
        %2869 = vmatprep.subr.bf16.mxu0 0
        %2870 = vmatpush2.bf16.msra.mxu0 0
        %2871 = vmatprep.subr.bf16.mxu0 0
        %2872 = vmatpush2.bf16.msra.mxu0 0
        %2873 = vmatprep.subr.bf16.mxu0 0
        %2874 = vmatpush2.bf16.msra.mxu0 0
        %2875 = vmatprep.subr.bf16.mxu0 0
        %2876 = vmatpush2.bf16.msra.mxu0 0
        %2877 = vmatprep.subr.bf16.mxu0 0
        %2878 = vmatpush2.bf16.msra.mxu0 0
        %2879 = vmatprep.subr.bf16.mxu0 0
        %2880 = vmatpush2.bf16.msra.mxu0 0
        %2881 = vmatprep.subr.bf16.mxu0 0
        %2882 = vmatpush2.bf16.msra.mxu0 0
        %2883 = vmatprep.mubr.bf16.mxu0 0
        %2884 = vmatmul.mubr.bf16.gmra.mxu0 %v2659
        %v2885 = vpop.f32.mrf.mxu0
        %v2886 = vadd.f32 %v2802, %v2885
        %v2887 = vpop.f32.mrf.mxu0
        %v2888 = vpop.f32.mrf.mxu0
        %v2889 = vpop.f32.mrf.mxu0
        %2890 = vdwg.mxu0
        %v2891 = vpack.c.bf16 %v2886, %v2886
        %v2892 = vpack.c.bf16 %v2657, %v2657
        %v2893 = vld [vmem:[%s5 + $0x140] sm:$0xf]
        %v2894 = vld [vmem:[%s5 + $0x144] sm:$0xf]
        %v2895 = vld [vmem:[%s5 + $0x148] sm:$0xf]
        %v2896 = vld [vmem:[%s5 + $0x14c] sm:$0xf]
        %v2897 = vld [vmem:[%s5 + $0x150] sm:$0xf]
        %v2898 = vld [vmem:[%s5 + $0x154] sm:$0xf]
        %v2899 = vld [vmem:[%s5 + $0x158] sm:$0xf]
        %v2900 = vld [vmem:[%s5 + $0x15c] sm:$0xf]
        %v2901 = vld [vmem:[%s5 + $0x160] sm:$0xf]
        %v2902 = vld [vmem:[%s5 + $0x164] sm:$0xf]
        %v2903 = vld [vmem:[%s5 + $0x168] sm:$0xf]
        %v2904 = vld [vmem:[%s5 + $0x16c] sm:$0xf]
        %v2905 = vld [vmem:[%s5 + $0x170] sm:$0xf]
        %v2906 = vld [vmem:[%s5 + $0x174] sm:$0xf]
        %v2907 = vld [vmem:[%s5 + $0x178] sm:$0xf]
        %v2908 = vld [vmem:[%s5 + $0x17c] sm:$0xf]
        %v2909 = vlaneseq
        %v2910 = vshrl.u32 %v2909, 7
        %v2911 = vsub.s32 2, %v2910
        %v2912 = vrot.slane %v516, %v2911
        %v2929 = vunpack.c.l.b16 %v2893
        %v2930 = vunpack.c.l.b16 %v2894
        %v2931 = vunpack.c.l.b16 %v2895
        %v2932 = vunpack.c.l.b16 %v2896
        %v2933 = vunpack.c.l.b16 %v2897
        %v2934 = vunpack.c.l.b16 %v2898
        %v2935 = vunpack.c.l.b16 %v2899
        %v2936 = vunpack.c.l.b16 %v2900
        %v2937 = vunpack.c.l.b16 %v2901
        %v2938 = vunpack.c.l.b16 %v2902
        %v2939 = vunpack.c.l.b16 %v2903
        %v2940 = vunpack.c.l.b16 %v2904
        %v2941 = vunpack.c.l.b16 %v2905
        %v2942 = vunpack.c.l.b16 %v2906
        %v2943 = vunpack.c.l.b16 %v2907
        %v2944 = vunpack.c.l.b16 %v2908
        %v2945 = vpack.c.b16 %v2930, %v2929
        %v2946 = vpack.c.b16 %v2932, %v2931
        %v2947 = vpack.c.b16 %v2934, %v2933
        %v2948 = vpack.c.b16 %v2936, %v2935
        %v2949 = vpack.c.b16 %v2938, %v2937
        %v2950 = vpack.c.b16 %v2940, %v2939
        %v2951 = vpack.c.b16 %v2942, %v2941
        %v2952 = vpack.c.b16 %v2944, %v2943
        %2961 = vmatprep.subr.bf16.mxu0 0
        %2962 = vmatpush1.bf16.msra.mxu0 %v2952
        %2963 = vmatprep.subr.bf16.mxu0 0
        %2964 = vmatpush1.bf16.msra.mxu0 %v2951
        %2965 = vmatprep.subr.bf16.mxu0 0
        %2966 = vmatpush1.bf16.msra.mxu0 %v2950
        %2967 = vmatprep.subr.bf16.mxu0 0
        %2968 = vmatpush1.bf16.msra.mxu0 %v2949
        %2969 = vmatprep.subr.bf16.mxu0 0
        %2970 = vmatpush1.bf16.msra.mxu0 %v2948
        %2971 = vmatprep.subr.bf16.mxu0 0
        %2972 = vmatpush1.bf16.msra.mxu0 %v2947
        %2973 = vmatprep.subr.bf16.mxu0 0
        %2974 = vmatpush1.bf16.msra.mxu0 %v2946
        %2975 = vmatprep.subr.bf16.mxu0 0
        %2976 = vmatpush1.bf16.msra.mxu0 %v2945
        %2977 = vmatprep.subr.bf16.mxu0 0
        %2978 = vmatpush2.bf16.msra.mxu0 0
        %2979 = vmatprep.subr.bf16.mxu0 0
        %2980 = vmatpush2.bf16.msra.mxu0 0
        %2981 = vmatprep.subr.bf16.mxu0 0
        %2982 = vmatpush2.bf16.msra.mxu0 0
        %2983 = vmatprep.subr.bf16.mxu0 0
        %2984 = vmatpush2.bf16.msra.mxu0 0
        %2985 = vmatprep.subr.bf16.mxu0 0
        %2986 = vmatpush2.bf16.msra.mxu0 0
        %2987 = vmatprep.subr.bf16.mxu0 0
        %2988 = vmatpush2.bf16.msra.mxu0 0
        %2989 = vmatprep.subr.bf16.mxu0 0
        %2990 = vmatpush2.bf16.msra.mxu0 0
        %2991 = vmatprep.subr.bf16.mxu0 0
        %2992 = vmatpush2.bf16.msra.mxu0 0
        %2993 = vmatprep.mubr.bf16.mxu0 0
        %2994 = vmatmul.mubr.bf16.gmra.mxu0 %v2892
        %v2995 = vpop.f32.mrf.mxu0
        %v2996 = vadd.f32 %v2912, %v2995
        %v2997 = vpop.f32.mrf.mxu0
        %v2998 = vpop.f32.mrf.mxu0
        %v2999 = vpop.f32.mrf.mxu0
        %3000 = vdwg.mxu0
        %v3001 = vpack.c.bf16 %v2996, %v2996
        %v3002 = vld [vmem:[%s6 + $0x60] sm:$0xf]
        %v3003 = vld [vmem:[%s6 + $0x64] sm:$0xf]
        %v3004 = vld [vmem:[%s6 + $0x68] sm:$0xf]
        %v3005 = vld [vmem:[%s6 + $0x6c] sm:$0xf]
        %v3006 = vld [vmem:[%s6 + $0x70] sm:$0xf]
        %v3007 = vld [vmem:[%s6 + $0x74] sm:$0xf]
        %v3008 = vld [vmem:[%s6 + $0x78] sm:$0xf]
        %v3009 = vld [vmem:[%s6 + $0x7c] sm:$0xf]
        %v3011 = vsel %vm1746, %v2891, 0
        %v3014 = vsel %vm1746, %v2781, 0
        %v3017 = vsel %vm1746, %v2782, 0
        %3019 = vmatprep.subr.bf16.mxu0 0
        %3020 = vmatpush1.bf16.xpose.msra.mxu0 0
        %3021 = vmatprep.subr.bf16.mxu0 0
        %3022 = vmatpush1.bf16.xpose.msra.mxu0 0
        %3023 = vmatprep.subr.bf16.mxu0 0
        %3024 = vmatpush1.bf16.xpose.msra.mxu0 0
        %3025 = vmatprep.subr.bf16.mxu0 0
        %3026 = vmatpush1.bf16.xpose.msra.mxu0 0
        %3027 = vmatprep.subr.bf16.mxu0 0
        %3028 = vmatpush1.bf16.xpose.msra.mxu0 0
        %3029 = vmatprep.subr.bf16.mxu0 0
        %3030 = vmatpush1.bf16.xpose.msra.mxu0 0
        %3031 = vmatprep.subr.bf16.mxu0 0
        %3032 = vmatpush1.bf16.xpose.msra.mxu0 %v3017
        %3033 = vmatprep.subr.bf16.mxu0 0
        %3034 = vmatpush1.bf16.xpose.msra.mxu0 %v3014
        %3035 = vmatprep.subr.bf16.mxu0 0
        %3036 = vmatpush2.bf16.xpose.msra.mxu0 0
        %3037 = vmatprep.subr.bf16.mxu0 0
        %3038 = vmatpush2.bf16.xpose.msra.mxu0 0
        %3039 = vmatprep.subr.bf16.mxu0 0
        %3040 = vmatpush2.bf16.xpose.msra.mxu0 0
        %3041 = vmatprep.subr.bf16.mxu0 0
        %3042 = vmatpush2.bf16.xpose.msra.mxu0 0
        %3043 = vmatprep.subr.bf16.mxu0 0
        %3044 = vmatpush2.bf16.xpose.msra.mxu0 0
        %3045 = vmatprep.subr.bf16.mxu0 0
        %3046 = vmatpush2.bf16.xpose.msra.mxu0 0
        %3047 = vmatprep.subr.bf16.mxu0 0
        %3048 = vmatpush2.bf16.xpose.msra.mxu0 0
        %3049 = vmatprep.subr.bf16.mxu0 0
        %3050 = vmatpush2.bf16.xpose.msra.mxu0 0
        %3051 = vmatprep.mubr.bf16.mxu0 0
        %3052 = vmatmul.mubr.bf16.gmra.mxu0 %v3011
        %v3053 = vpop.f32.mrf.mxu0
        %v3054 = vadd.f32 0.0, %v3053
        %v3055 = vpop.f32.mrf.mxu0
        %v3056 = vpop.f32.mrf.mxu0
        %v3057 = vpop.f32.mrf.mxu0
        %3058 = vdwg.mxu0
        %v3059 = vsel %vm807, %v3054, -inf
        %v3060 = vrot.slane %v3059, 4
        %v3061 = vmax.f32 %v3059, %v3060
        %v3062 = vrot.slane %v3061, 2
        %v3063 = vmax.f32 %v3061, %v3062
        %v3064 = vrot.slane %v3063, 1
        %v3065 = vmax.f32 %v3063, %v3064
        %v3066 = vsub.f32 %v3054, %v3065
        %v3067 = vmul.f32 %v3066, 1.442695
        %v3068 = vpow.pop %v3067
        %v3069 = vsel %vm807, %v3068, 0.0
        %v3070 = vrot.slane %v3069, 4
        %v3071 = vadd.f32 %v3069, %v3070
        %v3072 = vrot.slane %v3071, 2
        %v3073 = vadd.f32 %v3071, %v3072
        %v3074 = vrot.slane %v3073, 1
        %v3075 = vadd.f32 %v3073, %v3074
        %v3076 = vrcp.pop %v3075
        %v3077 = vmul.f32 %v3068, %v3076
        %3078 = vxpose.xlu0.b32.start [1/16] %v3077, 128
        %3079 = vxpose.xlu0.b32.cont [2/16] 0.0, 128
        %3080 = vxpose.xlu0.b32.cont [3/16] 0.0, 128
        %3081 = vxpose.xlu0.b32.cont [4/16] 0.0, 128
        %3082 = vxpose.xlu0.b32.cont [5/16] 0.0, 128
        %3083 = vxpose.xlu0.b32.cont [6/16] 0.0, 128
        %3084 = vxpose.xlu0.b32.cont [7/16] 0.0, 128
        %3085 = vxpose.xlu0.b32.cont [8/16] 0.0, 128
        %3086 = vxpose.xlu0.b32.cont [9/16] 0.0, 128
        %3087 = vxpose.xlu0.b32.cont [10/16] 0.0, 128
        %3088 = vxpose.xlu0.b32.cont [11/16] 0.0, 128
        %3089 = vxpose.xlu0.b32.cont [12/16] 0.0, 128
        %3090 = vxpose.xlu0.b32.cont [13/16] 0.0, 128
        %3091 = vxpose.xlu0.b32.cont [14/16] 0.0, 128
        %3092 = vxpose.xlu0.b32.cont [15/16] 0.0, 128
        %3093 = vxpose.xlu0.b32.end [16/16] 0.0, 128
        %v3094 = vpop.trf.xlu0
        %v3095 = vpop.trf.xlu0
        %v3096 = vpop.trf.xlu0
        %v3097 = vpop.trf.xlu0
        %v3098 = vpop.trf.xlu0
        %v3099 = vpop.trf.xlu0
        %v3100 = vpop.trf.xlu0
        %v3101 = vpop.trf.xlu0
        %v3102 = vpop.trf.xlu0
        %v3103 = vpop.trf.xlu0
        %v3104 = vpop.trf.xlu0
        %v3105 = vpop.trf.xlu0
        %v3106 = vpop.trf.xlu0
        %v3107 = vpop.trf.xlu0
        %v3108 = vpop.trf.xlu0
        %v3109 = vpop.trf.xlu0
        %v3110 = vpack.c.bf16 %v3095, %v3094
        %v3111 = vpack.c.bf16 %v3097, %v3096
        %v3113 = vsel %vm854, %v3110, 0
        %v3116 = vsel %vm854, %v3111, 0
        %v3119 = vsel %vm870, %v3001, 0
        %3121 = vmatprep.subr.bf16.mxu0 0
        %3122 = vmatpush1.bf16.msra.mxu0 0
        %3123 = vmatprep.subr.bf16.mxu0 0
        %3124 = vmatpush1.bf16.msra.mxu0 0
        %3125 = vmatprep.subr.bf16.mxu0 0
        %3126 = vmatpush1.bf16.msra.mxu0 0
        %3127 = vmatprep.subr.bf16.mxu0 0
        %3128 = vmatpush1.bf16.msra.mxu0 0
        %3129 = vmatprep.subr.bf16.mxu0 0
        %3130 = vmatpush1.bf16.msra.mxu0 0
        %3131 = vmatprep.subr.bf16.mxu0 0
        %3132 = vmatpush1.bf16.msra.mxu0 0
        %3133 = vmatprep.subr.bf16.mxu0 0
        %3134 = vmatpush1.bf16.msra.mxu0 0
        %3135 = vmatprep.subr.bf16.mxu0 0
        %3136 = vmatpush1.bf16.msra.mxu0 %v3119
        %3137 = vmatprep.subr.bf16.mxu0 0
        %3138 = vmatpush2.bf16.msra.mxu0 0
        %3139 = vmatprep.subr.bf16.mxu0 0
        %3140 = vmatpush2.bf16.msra.mxu0 0
        %3141 = vmatprep.subr.bf16.mxu0 0
        %3142 = vmatpush2.bf16.msra.mxu0 0
        %3143 = vmatprep.subr.bf16.mxu0 0
        %3144 = vmatpush2.bf16.msra.mxu0 0
        %3145 = vmatprep.subr.bf16.mxu0 0
        %3146 = vmatpush2.bf16.msra.mxu0 0
        %3147 = vmatprep.subr.bf16.mxu0 0
        %3148 = vmatpush2.bf16.msra.mxu0 0
        %3149 = vmatprep.subr.bf16.mxu0 0
        %3150 = vmatpush2.bf16.msra.mxu0 0
        %3151 = vmatprep.subr.bf16.mxu0 0
        %3152 = vmatpush2.bf16.msra.mxu0 0
        %3153 = vmatprep.mubr.bf16.mxu0 0
        %3154 = vmatmul.mubr.bf16.gmra.mxu0 %v3113
        %v3155 = vpop.f32.mrf.mxu0
        %v3156 = vadd.f32 0.0, %v3155
        %v3157 = vpop.f32.mrf.mxu0
        %v3158 = vpop.f32.mrf.mxu0
        %v3159 = vadd.f32 0.0, %v3158
        %v3160 = vpop.f32.mrf.mxu0
        %3161 = vmatprep.mubr.bf16.mxu0 0
        %3162 = vmatmul.mubr.bf16.gmra.mxu0 %v3116
        %v3163 = vpop.f32.mrf.mxu0
        %v3164 = vadd.f32 0.0, %v3163
        %v3165 = vpop.f32.mrf.mxu0
        %v3166 = vpop.f32.mrf.mxu0
        %v3167 = vadd.f32 0.0, %v3166
        %v3168 = vpop.f32.mrf.mxu0
        %3169 = vdwg.mxu0
        %3171 = vrot.lane.b32.xlu0 %v2891, 112
        %v3172 = vpop.permute.xlu0 %3171
        %3175 = vrot.lane.b32.xlu0 %v2781, 112
        %v3176 = vpop.permute.xlu0 %3175
        %3177 = vrot.lane.b32.xlu0 %v2782, 112
        %v3178 = vpop.permute.xlu0 %3177
        %v3180 = vsel %vm1746, %v3172, 0
        %v3183 = vsel %vm1746, %v3176, 0
        %v3186 = vsel %vm1746, %v3178, 0
        %3188 = vmatprep.subr.bf16.mxu0 0
        %3189 = vmatpush1.bf16.xpose.msra.mxu0 0
        %3190 = vmatprep.subr.bf16.mxu0 0
        %3191 = vmatpush1.bf16.xpose.msra.mxu0 0
        %3192 = vmatprep.subr.bf16.mxu0 0
        %3193 = vmatpush1.bf16.xpose.msra.mxu0 0
        %3194 = vmatprep.subr.bf16.mxu0 0
        %3195 = vmatpush1.bf16.xpose.msra.mxu0 0
        %3196 = vmatprep.subr.bf16.mxu0 0
        %3197 = vmatpush1.bf16.xpose.msra.mxu0 0
        %3198 = vmatprep.subr.bf16.mxu0 0
        %3199 = vmatpush1.bf16.xpose.msra.mxu0 0
        %3200 = vmatprep.subr.bf16.mxu0 0
        %3201 = vmatpush1.bf16.xpose.msra.mxu0 %v3186
        %3202 = vmatprep.subr.bf16.mxu0 0
        %3203 = vmatpush1.bf16.xpose.msra.mxu0 %v3183
        %3204 = vmatprep.subr.bf16.mxu0 0
        %3205 = vmatpush2.bf16.xpose.msra.mxu0 0
        %3206 = vmatprep.subr.bf16.mxu0 0
        %3207 = vmatpush2.bf16.xpose.msra.mxu0 0
        %3208 = vmatprep.subr.bf16.mxu0 0
        %3209 = vmatpush2.bf16.xpose.msra.mxu0 0
        %3210 = vmatprep.subr.bf16.mxu0 0
        %3211 = vmatpush2.bf16.xpose.msra.mxu0 0
        %3212 = vmatprep.subr.bf16.mxu0 0
        %3213 = vmatpush2.bf16.xpose.msra.mxu0 0
        %3214 = vmatprep.subr.bf16.mxu0 0
        %3215 = vmatpush2.bf16.xpose.msra.mxu0 0
        %3216 = vmatprep.subr.bf16.mxu0 0
        %3217 = vmatpush2.bf16.xpose.msra.mxu0 0
        %3218 = vmatprep.subr.bf16.mxu0 0
        %3219 = vmatpush2.bf16.xpose.msra.mxu0 0
        %3220 = vmatprep.mubr.bf16.mxu0 0
        %3221 = vmatmul.mubr.bf16.gmra.mxu0 %v3180
        %v3222 = vpop.f32.mrf.mxu0
        %v3223 = vadd.f32 0.0, %v3222
        %v3224 = vpop.f32.mrf.mxu0
        %v3225 = vpop.f32.mrf.mxu0
        %v3226 = vpop.f32.mrf.mxu0
        %3227 = vdwg.mxu0
        %v3228 = vsel %vm807, %v3223, -inf
        %v3229 = vrot.slane %v3228, 4
        %v3230 = vmax.f32 %v3228, %v3229
        %v3231 = vrot.slane %v3230, 2
        %v3232 = vmax.f32 %v3230, %v3231
        %v3233 = vrot.slane %v3232, 1
        %v3234 = vmax.f32 %v3232, %v3233
        %v3235 = vsub.f32 %v3223, %v3234
        %v3236 = vmul.f32 %v3235, 1.442695
        %v3237 = vpow.pop %v3236
        %v3238 = vsel %vm807, %v3237, 0.0
        %v3239 = vrot.slane %v3238, 4
        %v3240 = vadd.f32 %v3238, %v3239
        %v3241 = vrot.slane %v3240, 2
        %v3242 = vadd.f32 %v3240, %v3241
        %v3243 = vrot.slane %v3242, 1
        %v3244 = vadd.f32 %v3242, %v3243
        %v3245 = vrcp.pop %v3244
        %v3246 = vmul.f32 %v3237, %v3245
        %3247 = vxpose.xlu0.b32.start [1/16] %v3246, 128
        %3248 = vxpose.xlu0.b32.cont [2/16] 0.0, 128
        %3249 = vxpose.xlu0.b32.cont [3/16] 0.0, 128
        %3250 = vxpose.xlu0.b32.cont [4/16] 0.0, 128
        %3251 = vxpose.xlu0.b32.cont [5/16] 0.0, 128
        %3252 = vxpose.xlu0.b32.cont [6/16] 0.0, 128
        %3253 = vxpose.xlu0.b32.cont [7/16] 0.0, 128
        %3254 = vxpose.xlu0.b32.cont [8/16] 0.0, 128
        %3255 = vxpose.xlu0.b32.cont [9/16] 0.0, 128
        %3256 = vxpose.xlu0.b32.cont [10/16] 0.0, 128
        %3257 = vxpose.xlu0.b32.cont [11/16] 0.0, 128
        %3258 = vxpose.xlu0.b32.cont [12/16] 0.0, 128
        %3259 = vxpose.xlu0.b32.cont [13/16] 0.0, 128
        %3260 = vxpose.xlu0.b32.cont [14/16] 0.0, 128
        %3261 = vxpose.xlu0.b32.cont [15/16] 0.0, 128
        %3262 = vxpose.xlu0.b32.end [16/16] 0.0, 128
        %v3263 = vpop.trf.xlu0
        %v3264 = vpop.trf.xlu0
        %v3265 = vpop.trf.xlu0
        %v3266 = vpop.trf.xlu0
        %v3267 = vpop.trf.xlu0
        %v3268 = vpop.trf.xlu0
        %v3269 = vpop.trf.xlu0
        %v3270 = vpop.trf.xlu0
        %v3271 = vpop.trf.xlu0
        %v3272 = vpop.trf.xlu0
        %v3273 = vpop.trf.xlu0
        %v3274 = vpop.trf.xlu0
        %v3275 = vpop.trf.xlu0
        %v3276 = vpop.trf.xlu0
        %v3277 = vpop.trf.xlu0
        %v3278 = vpop.trf.xlu0
        %v3279 = vpack.c.bf16 %v3264, %v3263
        %v3280 = vpack.c.bf16 %v3266, %v3265
        %3282 = vrot.lane.b32.xlu0 %v3001, 112
        %v3283 = vpop.permute.xlu0 %3282
        %v3285 = vsel %vm854, %v3279, 0
        %v3288 = vsel %vm854, %v3280, 0
        %v3291 = vsel %vm870, %v3283, 0
        %3293 = vmatprep.subr.bf16.mxu0 0
        %3294 = vmatpush1.bf16.msra.mxu0 0
        %3295 = vmatprep.subr.bf16.mxu0 0
        %3296 = vmatpush1.bf16.msra.mxu0 0
        %3297 = vmatprep.subr.bf16.mxu0 0
        %3298 = vmatpush1.bf16.msra.mxu0 0
        %3299 = vmatprep.subr.bf16.mxu0 0
        %3300 = vmatpush1.bf16.msra.mxu0 0
        %3301 = vmatprep.subr.bf16.mxu0 0
        %3302 = vmatpush1.bf16.msra.mxu0 0
        %3303 = vmatprep.subr.bf16.mxu0 0
        %3304 = vmatpush1.bf16.msra.mxu0 0
        %3305 = vmatprep.subr.bf16.mxu0 0
        %3306 = vmatpush1.bf16.msra.mxu0 0
        %3307 = vmatprep.subr.bf16.mxu0 0
        %3308 = vmatpush1.bf16.msra.mxu0 %v3291
        %3309 = vmatprep.subr.bf16.mxu0 0
        %3310 = vmatpush2.bf16.msra.mxu0 0
        %3311 = vmatprep.subr.bf16.mxu0 0
        %3312 = vmatpush2.bf16.msra.mxu0 0
        %3313 = vmatprep.subr.bf16.mxu0 0
        %3314 = vmatpush2.bf16.msra.mxu0 0
        %3315 = vmatprep.subr.bf16.mxu0 0
        %3316 = vmatpush2.bf16.msra.mxu0 0
        %3317 = vmatprep.subr.bf16.mxu0 0
        %3318 = vmatpush2.bf16.msra.mxu0 0
        %3319 = vmatprep.subr.bf16.mxu0 0
        %3320 = vmatpush2.bf16.msra.mxu0 0
        %3321 = vmatprep.subr.bf16.mxu0 0
        %3322 = vmatpush2.bf16.msra.mxu0 0
        %3323 = vmatprep.subr.bf16.mxu0 0
        %3324 = vmatpush2.bf16.msra.mxu0 0
        %3325 = vmatprep.mubr.bf16.mxu0 0
        %3326 = vmatmul.mubr.bf16.gmra.mxu0 %v3285
        %v3327 = vpop.f32.mrf.mxu0
        %v3328 = vadd.f32 0.0, %v3327
        %v3329 = vpop.f32.mrf.mxu0
        %v3330 = vpop.f32.mrf.mxu0
        %v3331 = vadd.f32 0.0, %v3330
        %v3332 = vpop.f32.mrf.mxu0
        %3333 = vmatprep.mubr.bf16.mxu0 0
        %3334 = vmatmul.mubr.bf16.gmra.mxu0 %v3288
        %v3335 = vpop.f32.mrf.mxu0
        %v3336 = vadd.f32 0.0, %v3335
        %v3337 = vpop.f32.mrf.mxu0
        %v3338 = vpop.f32.mrf.mxu0
        %v3339 = vadd.f32 0.0, %v3338
        %v3340 = vpop.f32.mrf.mxu0
        %3341 = vdwg.mxu0
        %3342 = vrot.lane.b32.xlu0 %v2891, 96
        %v3343 = vpop.permute.xlu0 %3342
        %3344 = vrot.lane.b32.xlu0 %v2781, 96
        %v3345 = vpop.permute.xlu0 %3344
        %3346 = vrot.lane.b32.xlu0 %v2782, 96
        %v3347 = vpop.permute.xlu0 %3346
        %v3349 = vsel %vm1746, %v3343, 0
        %v3352 = vsel %vm1746, %v3345, 0
        %v3355 = vsel %vm1746, %v3347, 0
        %3357 = vmatprep.subr.bf16.mxu0 0
        %3358 = vmatpush1.bf16.xpose.msra.mxu0 0
        %3359 = vmatprep.subr.bf16.mxu0 0
        %3360 = vmatpush1.bf16.xpose.msra.mxu0 0
        %3361 = vmatprep.subr.bf16.mxu0 0
        %3362 = vmatpush1.bf16.xpose.msra.mxu0 0
        %3363 = vmatprep.subr.bf16.mxu0 0
        %3364 = vmatpush1.bf16.xpose.msra.mxu0 0
        %3365 = vmatprep.subr.bf16.mxu0 0
        %3366 = vmatpush1.bf16.xpose.msra.mxu0 0
        %3367 = vmatprep.subr.bf16.mxu0 0
        %3368 = vmatpush1.bf16.xpose.msra.mxu0 0
        %3369 = vmatprep.subr.bf16.mxu0 0
        %3370 = vmatpush1.bf16.xpose.msra.mxu0 %v3355
        %3371 = vmatprep.subr.bf16.mxu0 0
        %3372 = vmatpush1.bf16.xpose.msra.mxu0 %v3352
        %3373 = vmatprep.subr.bf16.mxu0 0
        %3374 = vmatpush2.bf16.xpose.msra.mxu0 0
        %3375 = vmatprep.subr.bf16.mxu0 0
        %3376 = vmatpush2.bf16.xpose.msra.mxu0 0
        %3377 = vmatprep.subr.bf16.mxu0 0
        %3378 = vmatpush2.bf16.xpose.msra.mxu0 0
        %3379 = vmatprep.subr.bf16.mxu0 0
        %3380 = vmatpush2.bf16.xpose.msra.mxu0 0
        %3381 = vmatprep.subr.bf16.mxu0 0
        %3382 = vmatpush2.bf16.xpose.msra.mxu0 0
        %3383 = vmatprep.subr.bf16.mxu0 0
        %3384 = vmatpush2.bf16.xpose.msra.mxu0 0
        %3385 = vmatprep.subr.bf16.mxu0 0
        %3386 = vmatpush2.bf16.xpose.msra.mxu0 0
        %3387 = vmatprep.subr.bf16.mxu0 0
        %3388 = vmatpush2.bf16.xpose.msra.mxu0 0
        %3389 = vmatprep.mubr.bf16.mxu0 0
        %3390 = vmatmul.mubr.bf16.gmra.mxu0 %v3349
        %v3391 = vpop.f32.mrf.mxu0
        %v3392 = vadd.f32 0.0, %v3391
        %v3393 = vpop.f32.mrf.mxu0
        %v3394 = vpop.f32.mrf.mxu0
        %v3395 = vpop.f32.mrf.mxu0
        %3396 = vdwg.mxu0
        %v3397 = vsel %vm807, %v3392, -inf
        %v3398 = vrot.slane %v3397, 4
        %v3399 = vmax.f32 %v3397, %v3398
        %v3400 = vrot.slane %v3399, 2
        %v3401 = vmax.f32 %v3399, %v3400
        %v3402 = vrot.slane %v3401, 1
        %v3403 = vmax.f32 %v3401, %v3402
        %v3404 = vsub.f32 %v3392, %v3403
        %v3405 = vmul.f32 %v3404, 1.442695
        %v3406 = vpow.pop %v3405
        %v3407 = vsel %vm807, %v3406, 0.0
        %v3408 = vrot.slane %v3407, 4
        %v3409 = vadd.f32 %v3407, %v3408
        %v3410 = vrot.slane %v3409, 2
        %v3411 = vadd.f32 %v3409, %v3410
        %v3412 = vrot.slane %v3411, 1
        %v3413 = vadd.f32 %v3411, %v3412
        %v3414 = vrcp.pop %v3413
        %v3415 = vmul.f32 %v3406, %v3414
        %3416 = vxpose.xlu0.b32.start [1/16] %v3415, 128
        %3417 = vxpose.xlu0.b32.cont [2/16] 0.0, 128
        %3418 = vxpose.xlu0.b32.cont [3/16] 0.0, 128
        %3419 = vxpose.xlu0.b32.cont [4/16] 0.0, 128
        %3420 = vxpose.xlu0.b32.cont [5/16] 0.0, 128
        %3421 = vxpose.xlu0.b32.cont [6/16] 0.0, 128
        %3422 = vxpose.xlu0.b32.cont [7/16] 0.0, 128
        %3423 = vxpose.xlu0.b32.cont [8/16] 0.0, 128
        %3424 = vxpose.xlu0.b32.cont [9/16] 0.0, 128
        %3425 = vxpose.xlu0.b32.cont [10/16] 0.0, 128
        %3426 = vxpose.xlu0.b32.cont [11/16] 0.0, 128
        %3427 = vxpose.xlu0.b32.cont [12/16] 0.0, 128
        %3428 = vxpose.xlu0.b32.cont [13/16] 0.0, 128
        %3429 = vxpose.xlu0.b32.cont [14/16] 0.0, 128
        %3430 = vxpose.xlu0.b32.cont [15/16] 0.0, 128
        %3431 = vxpose.xlu0.b32.end [16/16] 0.0, 128
        %v3432 = vpop.trf.xlu0
        %v3433 = vpop.trf.xlu0
        %v3434 = vpop.trf.xlu0
        %v3435 = vpop.trf.xlu0
        %v3436 = vpop.trf.xlu0
        %v3437 = vpop.trf.xlu0
        %v3438 = vpop.trf.xlu0
        %v3439 = vpop.trf.xlu0
        %v3440 = vpop.trf.xlu0
        %v3441 = vpop.trf.xlu0
        %v3442 = vpop.trf.xlu0
        %v3443 = vpop.trf.xlu0
        %v3444 = vpop.trf.xlu0
        %v3445 = vpop.trf.xlu0
        %v3446 = vpop.trf.xlu0
        %v3447 = vpop.trf.xlu0
        %v3448 = vpack.c.bf16 %v3433, %v3432
        %v3449 = vpack.c.bf16 %v3435, %v3434
        %3450 = vrot.lane.b32.xlu0 %v3001, 96
        %v3451 = vpop.permute.xlu0 %3450
        %v3453 = vsel %vm854, %v3448, 0
        %v3456 = vsel %vm854, %v3449, 0
        %v3459 = vsel %vm870, %v3451, 0
        %3461 = vmatprep.subr.bf16.mxu0 0
        %3462 = vmatpush1.bf16.msra.mxu0 0
        %3463 = vmatprep.subr.bf16.mxu0 0
        %3464 = vmatpush1.bf16.msra.mxu0 0
        %3465 = vmatprep.subr.bf16.mxu0 0
        %3466 = vmatpush1.bf16.msra.mxu0 0
        %3467 = vmatprep.subr.bf16.mxu0 0
        %3468 = vmatpush1.bf16.msra.mxu0 0
        %3469 = vmatprep.subr.bf16.mxu0 0
        %3470 = vmatpush1.bf16.msra.mxu0 0
        %3471 = vmatprep.subr.bf16.mxu0 0
        %3472 = vmatpush1.bf16.msra.mxu0 0
        %3473 = vmatprep.subr.bf16.mxu0 0
        %3474 = vmatpush1.bf16.msra.mxu0 0
        %3475 = vmatprep.subr.bf16.mxu0 0
        %3476 = vmatpush1.bf16.msra.mxu0 %v3459
        %3477 = vmatprep.subr.bf16.mxu0 0
        %3478 = vmatpush2.bf16.msra.mxu0 0
        %3479 = vmatprep.subr.bf16.mxu0 0
        %3480 = vmatpush2.bf16.msra.mxu0 0
        %3481 = vmatprep.subr.bf16.mxu0 0
        %3482 = vmatpush2.bf16.msra.mxu0 0
        %3483 = vmatprep.subr.bf16.mxu0 0
        %3484 = vmatpush2.bf16.msra.mxu0 0
        %3485 = vmatprep.subr.bf16.mxu0 0
        %3486 = vmatpush2.bf16.msra.mxu0 0
        %3487 = vmatprep.subr.bf16.mxu0 0
        %3488 = vmatpush2.bf16.msra.mxu0 0
        %3489 = vmatprep.subr.bf16.mxu0 0
        %3490 = vmatpush2.bf16.msra.mxu0 0
        %3491 = vmatprep.subr.bf16.mxu0 0
        %3492 = vmatpush2.bf16.msra.mxu0 0
        %3493 = vmatprep.mubr.bf16.mxu0 0
        %3494 = vmatmul.mubr.bf16.gmra.mxu0 %v3453
        %v3495 = vpop.f32.mrf.mxu0
        %v3496 = vadd.f32 0.0, %v3495
        %v3497 = vpop.f32.mrf.mxu0
        %v3498 = vpop.f32.mrf.mxu0
        %v3499 = vadd.f32 0.0, %v3498
        %v3500 = vpop.f32.mrf.mxu0
        %3501 = vmatprep.mubr.bf16.mxu0 0
        %3502 = vmatmul.mubr.bf16.gmra.mxu0 %v3456
        %v3503 = vpop.f32.mrf.mxu0
        %v3504 = vadd.f32 0.0, %v3503
        %v3505 = vpop.f32.mrf.mxu0
        %v3506 = vpop.f32.mrf.mxu0
        %v3507 = vadd.f32 0.0, %v3506
        %v3508 = vpop.f32.mrf.mxu0
        %3509 = vdwg.mxu0
        %3510 = vrot.lane.b32.xlu0 %v2891, 80
        %v3511 = vpop.permute.xlu0 %3510
        %3512 = vrot.lane.b32.xlu0 %v2781, 80
        %v3513 = vpop.permute.xlu0 %3512
        %3514 = vrot.lane.b32.xlu0 %v2782, 80
        %v3515 = vpop.permute.xlu0 %3514
        %v3517 = vsel %vm1746, %v3511, 0
        %v3520 = vsel %vm1746, %v3513, 0
        %v3523 = vsel %vm1746, %v3515, 0
        %3525 = vmatprep.subr.bf16.mxu0 0
        %3526 = vmatpush1.bf16.xpose.msra.mxu0 0
        %3527 = vmatprep.subr.bf16.mxu0 0
        %3528 = vmatpush1.bf16.xpose.msra.mxu0 0
        %3529 = vmatprep.subr.bf16.mxu0 0
        %3530 = vmatpush1.bf16.xpose.msra.mxu0 0
        %3531 = vmatprep.subr.bf16.mxu0 0
        %3532 = vmatpush1.bf16.xpose.msra.mxu0 0
        %3533 = vmatprep.subr.bf16.mxu0 0
        %3534 = vmatpush1.bf16.xpose.msra.mxu0 0
        %3535 = vmatprep.subr.bf16.mxu0 0
        %3536 = vmatpush1.bf16.xpose.msra.mxu0 0
        %3537 = vmatprep.subr.bf16.mxu0 0
        %3538 = vmatpush1.bf16.xpose.msra.mxu0 %v3523
        %3539 = vmatprep.subr.bf16.mxu0 0
        %3540 = vmatpush1.bf16.xpose.msra.mxu0 %v3520
        %3541 = vmatprep.subr.bf16.mxu0 0
        %3542 = vmatpush2.bf16.xpose.msra.mxu0 0
        %3543 = vmatprep.subr.bf16.mxu0 0
        %3544 = vmatpush2.bf16.xpose.msra.mxu0 0
        %3545 = vmatprep.subr.bf16.mxu0 0
        %3546 = vmatpush2.bf16.xpose.msra.mxu0 0
        %3547 = vmatprep.subr.bf16.mxu0 0
        %3548 = vmatpush2.bf16.xpose.msra.mxu0 0
        %3549 = vmatprep.subr.bf16.mxu0 0
        %3550 = vmatpush2.bf16.xpose.msra.mxu0 0
        %3551 = vmatprep.subr.bf16.mxu0 0
        %3552 = vmatpush2.bf16.xpose.msra.mxu0 0
        %3553 = vmatprep.subr.bf16.mxu0 0
        %3554 = vmatpush2.bf16.xpose.msra.mxu0 0
        %3555 = vmatprep.subr.bf16.mxu0 0
        %3556 = vmatpush2.bf16.xpose.msra.mxu0 0
        %3557 = vmatprep.mubr.bf16.mxu0 0
        %3558 = vmatmul.mubr.bf16.gmra.mxu0 %v3517
        %v3559 = vpop.f32.mrf.mxu0
        %v3560 = vadd.f32 0.0, %v3559
        %v3561 = vpop.f32.mrf.mxu0
        %v3562 = vpop.f32.mrf.mxu0
        %v3563 = vpop.f32.mrf.mxu0
        %3564 = vdwg.mxu0
        %v3565 = vsel %vm807, %v3560, -inf
        %v3566 = vrot.slane %v3565, 4
        %v3567 = vmax.f32 %v3565, %v3566
        %v3568 = vrot.slane %v3567, 2
        %v3569 = vmax.f32 %v3567, %v3568
        %v3570 = vrot.slane %v3569, 1
        %v3571 = vmax.f32 %v3569, %v3570
        %v3572 = vsub.f32 %v3560, %v3571
        %v3573 = vmul.f32 %v3572, 1.442695
        %v3574 = vpow.pop %v3573
        %v3575 = vsel %vm807, %v3574, 0.0
        %v3576 = vrot.slane %v3575, 4
        %v3577 = vadd.f32 %v3575, %v3576
        %v3578 = vrot.slane %v3577, 2
        %v3579 = vadd.f32 %v3577, %v3578
        %v3580 = vrot.slane %v3579, 1
        %v3581 = vadd.f32 %v3579, %v3580
        %v3582 = vrcp.pop %v3581
        %v3583 = vmul.f32 %v3574, %v3582
        %3584 = vxpose.xlu0.b32.start [1/16] %v3583, 128
        %3585 = vxpose.xlu0.b32.cont [2/16] 0.0, 128
        %3586 = vxpose.xlu0.b32.cont [3/16] 0.0, 128
        %3587 = vxpose.xlu0.b32.cont [4/16] 0.0, 128
        %3588 = vxpose.xlu0.b32.cont [5/16] 0.0, 128
        %3589 = vxpose.xlu0.b32.cont [6/16] 0.0, 128
        %3590 = vxpose.xlu0.b32.cont [7/16] 0.0, 128
        %3591 = vxpose.xlu0.b32.cont [8/16] 0.0, 128
        %3592 = vxpose.xlu0.b32.cont [9/16] 0.0, 128
        %3593 = vxpose.xlu0.b32.cont [10/16] 0.0, 128
        %3594 = vxpose.xlu0.b32.cont [11/16] 0.0, 128
        %3595 = vxpose.xlu0.b32.cont [12/16] 0.0, 128
        %3596 = vxpose.xlu0.b32.cont [13/16] 0.0, 128
        %3597 = vxpose.xlu0.b32.cont [14/16] 0.0, 128
        %3598 = vxpose.xlu0.b32.cont [15/16] 0.0, 128
        %3599 = vxpose.xlu0.b32.end [16/16] 0.0, 128
        %v3600 = vpop.trf.xlu0
        %v3601 = vpop.trf.xlu0
        %v3602 = vpop.trf.xlu0
        %v3603 = vpop.trf.xlu0
        %v3604 = vpop.trf.xlu0
        %v3605 = vpop.trf.xlu0
        %v3606 = vpop.trf.xlu0
        %v3607 = vpop.trf.xlu0
        %v3608 = vpop.trf.xlu0
        %v3609 = vpop.trf.xlu0
        %v3610 = vpop.trf.xlu0
        %v3611 = vpop.trf.xlu0
        %v3612 = vpop.trf.xlu0
        %v3613 = vpop.trf.xlu0
        %v3614 = vpop.trf.xlu0
        %v3615 = vpop.trf.xlu0
        %v3616 = vpack.c.bf16 %v3601, %v3600
        %v3617 = vpack.c.bf16 %v3603, %v3602
        %3618 = vrot.lane.b32.xlu0 %v3001, 80
        %v3619 = vpop.permute.xlu0 %3618
        %v3621 = vsel %vm854, %v3616, 0
        %v3624 = vsel %vm854, %v3617, 0
        %v3627 = vsel %vm870, %v3619, 0
        %3629 = vmatprep.subr.bf16.mxu0 0
        %3630 = vmatpush1.bf16.msra.mxu0 0
        %3631 = vmatprep.subr.bf16.mxu0 0
        %3632 = vmatpush1.bf16.msra.mxu0 0
        %3633 = vmatprep.subr.bf16.mxu0 0
        %3634 = vmatpush1.bf16.msra.mxu0 0
        %3635 = vmatprep.subr.bf16.mxu0 0
        %3636 = vmatpush1.bf16.msra.mxu0 0
        %3637 = vmatprep.subr.bf16.mxu0 0
        %3638 = vmatpush1.bf16.msra.mxu0 0
        %3639 = vmatprep.subr.bf16.mxu0 0
        %3640 = vmatpush1.bf16.msra.mxu0 0
        %3641 = vmatprep.subr.bf16.mxu0 0
        %3642 = vmatpush1.bf16.msra.mxu0 0
        %3643 = vmatprep.subr.bf16.mxu0 0
        %3644 = vmatpush1.bf16.msra.mxu0 %v3627
        %3645 = vmatprep.subr.bf16.mxu0 0
        %3646 = vmatpush2.bf16.msra.mxu0 0
        %3647 = vmatprep.subr.bf16.mxu0 0
        %3648 = vmatpush2.bf16.msra.mxu0 0
        %3649 = vmatprep.subr.bf16.mxu0 0
        %3650 = vmatpush2.bf16.msra.mxu0 0
        %3651 = vmatprep.subr.bf16.mxu0 0
        %3652 = vmatpush2.bf16.msra.mxu0 0
        %3653 = vmatprep.subr.bf16.mxu0 0
        %3654 = vmatpush2.bf16.msra.mxu0 0
        %3655 = vmatprep.subr.bf16.mxu0 0
        %3656 = vmatpush2.bf16.msra.mxu0 0
        %3657 = vmatprep.subr.bf16.mxu0 0
        %3658 = vmatpush2.bf16.msra.mxu0 0
        %3659 = vmatprep.subr.bf16.mxu0 0
        %3660 = vmatpush2.bf16.msra.mxu0 0
        %3661 = vmatprep.mubr.bf16.mxu0 0
        %3662 = vmatmul.mubr.bf16.gmra.mxu0 %v3621
        %v3663 = vpop.f32.mrf.mxu0
        %v3664 = vadd.f32 0.0, %v3663
        %v3665 = vpop.f32.mrf.mxu0
        %v3666 = vpop.f32.mrf.mxu0
        %v3667 = vadd.f32 0.0, %v3666
        %v3668 = vpop.f32.mrf.mxu0
        %3669 = vmatprep.mubr.bf16.mxu0 0
        %3670 = vmatmul.mubr.bf16.gmra.mxu0 %v3624
        %v3671 = vpop.f32.mrf.mxu0
        %v3672 = vadd.f32 0.0, %v3671
        %v3673 = vpop.f32.mrf.mxu0
        %v3674 = vpop.f32.mrf.mxu0
        %v3675 = vadd.f32 0.0, %v3674
        %v3676 = vpop.f32.mrf.mxu0
        %3677 = vdwg.mxu0
        %3682 = vrot.lane.b32.xlu0 %v3328, 16
        %v3683 = vpop.permute.xlu0 %3682
        %3684 = vrot.lane.b32.xlu0 %v3331, 16
        %v3685 = vpop.permute.xlu0 %3684
        %3686 = vrot.lane.b32.xlu0 %v3336, 16
        %v3687 = vpop.permute.xlu0 %3686
        %3688 = vrot.lane.b32.xlu0 %v3339, 16
        %v3689 = vpop.permute.xlu0 %3688
        %3698 = vrot.lane.b32.xlu0 %v3496, 32
        %v3699 = vpop.permute.xlu0 %3698
        %3700 = vrot.lane.b32.xlu0 %v3499, 32
        %v3701 = vpop.permute.xlu0 %3700
        %3702 = vrot.lane.b32.xlu0 %v3504, 32
        %v3703 = vpop.permute.xlu0 %3702
        %3704 = vrot.lane.b32.xlu0 %v3507, 32
        %v3705 = vpop.permute.xlu0 %3704
        %3714 = vrot.lane.b32.xlu0 %v3664, 48
        %v3715 = vpop.permute.xlu0 %3714
        %3716 = vrot.lane.b32.xlu0 %v3667, 48
        %v3717 = vpop.permute.xlu0 %3716
        %3718 = vrot.lane.b32.xlu0 %v3672, 48
        %v3719 = vpop.permute.xlu0 %3718
        %3720 = vrot.lane.b32.xlu0 %v3675, 48
        %v3721 = vpop.permute.xlu0 %3720
        %v3726 = vsel %vm1746, %v3156, %v3683
        %v3727 = vsel %vm1746, %v3159, %v3685
        %v3728 = vsel %vm1746, %v3164, %v3687
        %v3729 = vsel %vm1746, %v3167, %v3689
        %v3730 = vsel %vm807, %v3726, %v3699
        %v3731 = vsel %vm807, %v3727, %v3701
        %v3732 = vsel %vm807, %v3728, %v3703
        %v3733 = vsel %vm807, %v3729, %v3705
        %v3734 = vsel %vm2218, %v3730, %v3715
        %v3735 = vsel %vm2218, %v3731, %v3717
        %v3736 = vsel %vm2218, %v3732, %v3719
        %v3737 = vsel %vm2218, %v3733, %v3721
        %v3738 = vpack.c.bf16 %v3735, %v3734
        %v3739 = vpack.c.bf16 %v3737, %v3736
        %v3740 = vlaneseq
        %v3741 = vshrl.u32 %v3740, 7
        %v3742 = vsub.s32 3, %v3741
        %v3743 = vrot.slane %v516, %v3742
        %v3752 = vunpack.c.l.b16 %v3002
        %v3753 = vunpack.c.l.b16 %v3003
        %v3754 = vunpack.c.l.b16 %v3004
        %v3755 = vunpack.c.l.b16 %v3005
        %v3756 = vunpack.c.l.b16 %v3006
        %v3757 = vunpack.c.l.b16 %v3007
        %v3758 = vunpack.c.l.b16 %v3008
        %v3759 = vunpack.c.l.b16 %v3009
        %v3760 = vpack.c.b16 %v3753, %v3752
        %v3761 = vpack.c.b16 %v3755, %v3754
        %v3762 = vpack.c.b16 %v3757, %v3756
        %v3763 = vpack.c.b16 %v3759, %v3758
        %v3769 = vsel %vm1260, %v3738, 0
        %v3772 = vsel %vm1260, %v3739, 0
        %3774 = vmatprep.subr.bf16.mxu0 0
        %3775 = vmatpush1.bf16.msra.mxu0 0
        %3776 = vmatprep.subr.bf16.mxu0 0
        %3777 = vmatpush1.bf16.msra.mxu0 0
        %3778 = vmatprep.subr.bf16.mxu0 0
        %3779 = vmatpush1.bf16.msra.mxu0 0
        %3780 = vmatprep.subr.bf16.mxu0 0
        %3781 = vmatpush1.bf16.msra.mxu0 0
        %3782 = vmatprep.subr.bf16.mxu0 0
        %3783 = vmatpush1.bf16.msra.mxu0 %v3763
        %3784 = vmatprep.subr.bf16.mxu0 0
        %3785 = vmatpush1.bf16.msra.mxu0 %v3762
        %3786 = vmatprep.subr.bf16.mxu0 0
        %3787 = vmatpush1.bf16.msra.mxu0 %v3761
        %3788 = vmatprep.subr.bf16.mxu0 0
        %3789 = vmatpush1.bf16.msra.mxu0 %v3760
        %3790 = vmatprep.subr.bf16.mxu0 0
        %3791 = vmatpush2.bf16.msra.mxu0 0
        %3792 = vmatprep.subr.bf16.mxu0 0
        %3793 = vmatpush2.bf16.msra.mxu0 0
        %3794 = vmatprep.subr.bf16.mxu0 0
        %3795 = vmatpush2.bf16.msra.mxu0 0
        %3796 = vmatprep.subr.bf16.mxu0 0
        %3797 = vmatpush2.bf16.msra.mxu0 0
        %3798 = vmatprep.subr.bf16.mxu0 0
        %3799 = vmatpush2.bf16.msra.mxu0 0
        %3800 = vmatprep.subr.bf16.mxu0 0
        %3801 = vmatpush2.bf16.msra.mxu0 0
        %3802 = vmatprep.subr.bf16.mxu0 0
        %3803 = vmatpush2.bf16.msra.mxu0 0
        %3804 = vmatprep.subr.bf16.mxu0 0
        %3805 = vmatpush2.bf16.msra.mxu0 0
        %3806 = vmatprep.mubr.bf16.mxu0 0
        %3807 = vmatmul.mubr.bf16.gmra.mxu0 %v3769
        %v3808 = vpop.f32.mrf.mxu0
        %v3809 = vadd.f32 %v3743, %v3808
        %v3810 = vpop.f32.mrf.mxu0
        %v3811 = vpop.f32.mrf.mxu0
        %v3812 = vadd.f32 %v3743, %v3811
        %v3813 = vpop.f32.mrf.mxu0
        %3814 = vmatprep.mubr.bf16.mxu0 0
        %3815 = vmatmul.mubr.bf16.gmra.mxu0 %v3772
        %v3816 = vpop.f32.mrf.mxu0
        %v3817 = vadd.f32 %v3743, %v3816
        %v3818 = vpop.f32.mrf.mxu0
        %v3819 = vpop.f32.mrf.mxu0
        %v3820 = vadd.f32 %v3743, %v3819
        %v3821 = vpop.f32.mrf.mxu0
        %3822 = vdwg.mxu0
        %v3823 = vadd.f32 %v520, %v3809
        %v3824 = vadd.f32 %v521, %v3812
        %v3825 = vadd.f32 %v522, %v3817
        %v3826 = vadd.f32 %v523, %v3820
        %3827 = vadd.xlane.f32.xlu0 %v3823
        %v3828 = vpop.xlane.xlu0 %3827
        %3829 = vadd.xlane.f32.xlu0 %v3824
        %v3830 = vpop.xlane.xlu0 %3829
        %3831 = vadd.xlane.f32.xlu0 %v3825
        %v3832 = vpop.xlane.xlu0 %3831
        %3833 = vadd.xlane.f32.xlu0 %v3826
        %v3834 = vpop.xlane.xlu0 %3833
        %v3835 = vmul.f32 %v3828, %v1360
        %v3836 = vmul.f32 %v3830, %v1360
        %v3837 = vmul.f32 %v3832, %v1360
        %v3838 = vmul.f32 %v3834, %v1360
        %v3839 = vsub.f32 %v3823, %v3835
        %v3840 = vsub.f32 %v3824, %v3836
        %v3841 = vsub.f32 %v3825, %v3837
        %v3842 = vsub.f32 %v3826, %v3838
        %v3843 = vmul.f32 %v3839, %v3839
        %v3844 = vmul.f32 %v3840, %v3840
        %v3845 = vmul.f32 %v3841, %v3841
        %v3846 = vmul.f32 %v3842, %v3842
        %3847 = vadd.xlane.f32.xlu0 %v3843
        %v3848 = vpop.xlane.xlu0 %3847
        %3849 = vadd.xlane.f32.xlu0 %v3844
        %v3850 = vpop.xlane.xlu0 %3849
        %3851 = vadd.xlane.f32.xlu0 %v3845
        %v3852 = vpop.xlane.xlu0 %3851
        %3853 = vadd.xlane.f32.xlu0 %v3846
        %v3854 = vpop.xlane.xlu0 %3853
        %v3855 = vmul.f32 %v3848, %v1360
        %v3856 = vmul.f32 %v3850, %v1360
        %v3857 = vmul.f32 %v3852, %v1360
        %v3858 = vmul.f32 %v3854, %v1360
        %v3859 = vadd.f32 %v3855, 1e-05
        %v3860 = vadd.f32 %v3856, 1e-05
        %v3861 = vadd.f32 %v3857, 1e-05
        %v3862 = vadd.f32 %v3858, 1e-05
        %v3863 = vrsqrt.pop %v3859
        %v3864 = vrsqrt.pop %v3860
        %v3865 = vrsqrt.pop %v3861
        %v3866 = vrsqrt.pop %v3862
        %v3867 = vmul.f32 %v3839, %v3863
        %v3868 = vmul.f32 %v3840, %v3864
        %v3869 = vmul.f32 %v3841, %v3865
        %v3870 = vmul.f32 %v3842, %v3866
        %v3871 = vlaneseq
        %v3872 = vshrl.u32 %v3871, 7
        %v3873 = vsub.s32 4, %v3872
        %v3874 = vrot.slane %v518, %v3873
        %v3875 = vmul.f32 %v3867, %v3874
        %v3876 = vmul.f32 %v3868, %v3874
        %v3877 = vmul.f32 %v3869, %v3874
        %v3878 = vmul.f32 %v3870, %v3874
        %v3879 = vlaneseq
        %v3880 = vshrl.u32 %v3879, 7
        %v3881 = vsub.s32 5, %v3880
        %v3882 = vrot.slane %v518, %v3881
        %v3883 = vadd.f32 %v3875, %v3882
        %v3884 = vadd.f32 %v3876, %v3882
        %v3885 = vadd.f32 %v3877, %v3882
        %v3886 = vadd.f32 %v3878, %v3882
        %3887 = vst [vmem:[%s506] sm:$0xff] %v2657
        %3888 = vst [vmem:[%s513] sm:$0xff] %v3883
        %3889 = vst [vmem:[%s513 + $0x8] sm:$0xff] %v3884
        %3890 = vst [vmem:[%s513 + $0x10] sm:$0xff] %v3885
        %3891 = vst [vmem:[%s513 + $0x18] sm:$0xff] %v3886
        %s3892 = sand.u32 %s254, 1
        %s3893 = scalar_lea.sflag [#allocation4], %s3892
        %s3894 = sand.u32 %s254, 1
        %s3895 = smul.addr %s3894, 8
        %s3896 = scalar_lea.vmem [#allocation11], %s3895
        %s3897 = sand.u32 %s280, 1
        %s3898 = scalar_lea.sflag [#allocation13], %s3897
        %s3899 = sand.u32 %s280, 1
        %s3900 = smul.addr %s3899, 32
        %s3901 = scalar_lea.vmem [#allocation12], %s3900
        // Predicated region
        $region77: #{two_way_attention_block.1} parent=55 // pred_check
          %p3902 = pneg %p264
        $region78: #{two_way_attention_block.1} parent=55 // pred_check_branch
          %3904 = sbr.rel (%p3902) target = $region80
        $region79: #{two_way_attention_block.1} parent=55 // pred_region
          %s3906 = ssub.s32 128, 128
          %3907 = vsyncadd %s3893, %s3906
          %s3908 = smul.addr %s37, 128
          %s3909 = scalar_lea.hbm %s9, %s3908
          %s3911 = sshll.u32 %s3896, 4
          %s3912 = int_to_ptr.vmem [resolvable:$true] %s3911
          %3914 = dma.vmem_to_hbm [thread:$0]  %s3912, 128, %s3909, %s3893
        $region80: #{two_way_attention_block.1} parent=55 // pred_fallthru
          _
        // Predicated region
        $region81: #{two_way_attention_block.1} parent=55 // pred_check
          %p3915 = pneg %p290
        $region82: #{two_way_attention_block.1} parent=55 // pred_check_branch
          %3917 = sbr.rel (%p3915) target = $region84
        $region83: #{two_way_attention_block.1} parent=55 // pred_region
          %s3919 = ssub.s32 512, 512
          %3920 = vsyncadd %s3898, %s3919
          %s3921 = smul.addr %s37, 4
          %s3922 = smul.addr %s3921, 128
          %s3923 = scalar_lea.hbm %s10, %s3922
          %s3924 = sshll.u32 %s3901, 4
          %s3925 = int_to_ptr.vmem [resolvable:$true] %s3924
          %3930 = dma.vmem_to_hbm [thread:$0]  %s3925, 512, %s3923, %s3898, 128, 128, 8
        $region84: #{two_way_attention_block.1} parent=55 // pred_fallthru
          _
      $region56: #{two_way_attention_block.1} parent=5 // pred_fallthru
        _
      %p3931 = scmp.le.s32.totalorder 2, %s32
      // Predicated region
      $region85: #{two_way_attention_block.1} parent=5 // pred_check
        %p3932 = pneg %p3931
      $region86: #{two_way_attention_block.1} parent=5 // pred_check_branch
        %3934 = sbr.rel (%p3932) target = $region88
      $region87: #{two_way_attention_block.1} parent=5 // pred_region
        %s3935 = ssub.s32 %s32, 2
        // Predicated region
        $region89: #{two_way_attention_block.1} parent=87 // pred_check
          %p3936 = pneg %p270
        $region90: #{two_way_attention_block.1} parent=87 // pred_check_branch
          %3938 = sbr.rel (%p3936) target = $region92
        $region91: #{two_way_attention_block.1} parent=87 // pred_region
          %s3939 = sand.u32 %s255, 1
          %s3940 = scalar_lea.sflag [#allocation4], %s3939
          %s3941 = sand.u32 %s255, 1
          %s3942 = smul.addr %s3941, 8
          %s3943 = scalar_lea.vmem [#allocation11], %s3942
          %3944 = dma.done %s3940, 128
        $region92: #{two_way_attention_block.1} parent=87 // pred_fallthru
          _
        // Predicated region
        $region93: #{two_way_attention_block.1} parent=87 // pred_check
          %p3945 = pneg %p296
        $region94: #{two_way_attention_block.1} parent=87 // pred_check_branch
          %3947 = sbr.rel (%p3945) target = $region96
        $region95: #{two_way_attention_block.1} parent=87 // pred_region
          %s3948 = sand.u32 %s281, 1
          %s3949 = scalar_lea.sflag [#allocation13], %s3948
          %s3950 = sand.u32 %s281, 1
          %s3951 = smul.addr %s3950, 32
          %s3952 = scalar_lea.vmem [#allocation12], %s3951
          %3953 = dma.done %s3949, 512
        $region96: #{two_way_attention_block.1} parent=87 // pred_fallthru
          _
      $region88: #{two_way_attention_block.1} parent=5 // pred_fallthru
        _
    $region6: #{two_way_attention_block.1} parent=1 // loop_footer
      %s36 = sadd.s32 1, %s32
    $region7: #{two_way_attention_block.1} parent=1 // loop_footer_branch
      %31 = sbr.rel target = $region3
    $region8: #{two_way_attention_block.1} parent=1 // loop_exit
      _
    %3954 = vsyncpa [#allocation3], 1
    %s3955 = scalar_lea.sflag [#allocation3], 1
    %3956 = vsyncpa %s3955, 1
    %3957 = vsyncpa [#allocation6], 1
    %s3958 = scalar_lea.sflag [#allocation6], 1
    %3959 = vsyncpa %s3958, 1
    %3960 = vsyncpa [#allocation9], 1
    %s3961 = scalar_lea.sflag [#allocation9], 1
    %3962 = vsyncpa %s3961, 1
    %3963 = vsyncpa [#allocation4], 1
    %s3964 = scalar_lea.sflag [#allocation4], 1
    %3965 = vsyncpa %s3964, 1
    %3966 = vsyncpa [#allocation13], 1
    %s3967 = scalar_lea.sflag [#allocation13], 1
    %3968 = vsyncpa %s3967, 1

</llo_original>
